<compile_context>
chip_gen: v6e
topology: v6e:2x2x1
jax: 0.10.0
libtpu: 0.0.40
codegen_flags: <defaults>
</compile_context>

<pallas_src>
import functools
import math

import jax
import jax.numpy as jnp
from jax import lax
from jax.experimental import pallas as pl
from jax.experimental.pallas import tpu as pltpu

CONV_KERNEL_SIZE = 4
CONV_PADDING = 3
CONV_PAD_ROWS = 8          # sublane-aligned zero-pad rows for the causal conv
DEFAULT_CHUNK_SIZE = 64
EPSILON = 1e-9
LN_EPS = 1e-5              # torch.nn.LayerNorm default eps

# Kernel parameter order (query projection / query norm are dead code in the
# torch forward and are intentionally not passed in).
PARAM_NAMES = ("w_fused", "w_ea", "conv_w", "conv_b", "ln_k_g", "ln_k_b",
               "wo_t", "mem_w1t", "mem_b1", "mem_w2t", "mem_b2")


# ---------------------------------------------------------------------------
# math helpers (shared by the Pallas kernel and the pure-JAX reference)
# ---------------------------------------------------------------------------
def _dot(a, b):
    # bf16 operands, f32 accumulation: single-pass MXU matmul.
    return jnp.dot(a.astype(jnp.bfloat16), b.astype(jnp.bfloat16),
                   preferred_element_type=jnp.float32)


def _gelu_exact(x):  # matches torch F.gelu (erf form)
    return 0.5 * x * (1.0 + lax.erf(x * (1.0 / math.sqrt(2.0))))


def _softplus(x):  # matches torch F.softplus (beta=1, threshold=20)
    return jnp.where(x > 20.0, x, jnp.log1p(jnp.exp(jnp.minimum(x, 20.0))))


def _layernorm(x, gamma, beta):
    mu = jnp.mean(x, axis=-1, keepdims=True)
    var = jnp.mean((x - mu) ** 2, axis=-1, keepdims=True)
    return (x - mu) * lax.rsqrt(var + LN_EPS) * gamma + beta


def _chunk_step(kc, vc, dc, eta_last, alpha_last, state, update=True):
    """One memory-recurrence step with TRANSPOSED state (no in-loop transposes).

    state = (w1t (H,I), b1 (1,I), w2t (I,H), b2 (1,H)); returns (mem_out, state').
    """
    w1t, b1, w2t, b2 = state
    inter = _dot(kc, w1t) + b1                   # (L, I)
    act = _gelu_exact(inter)
    mem_out = _dot(act, w2t) + b2                # (L, H)
    if not update:
        return mem_out, state

    # -------- training-mode state update (torch.no_grad branch) --------
    err = mem_out - vc
    err_norm = jnp.sqrt(jnp.sum(err * err, axis=-1, keepdims=True))    # (L, 1)
    l1g = dc * (err / (err_norm + EPSILON))                            # exact divide
    pg = jnp.where(err_norm > dc, l1g, err)                            # (L, H)

    alpha_w = jnp.mean(alpha_last, axis=-1, keepdims=True)             # (1, 1)
    eta_w = jnp.mean(eta_last, axis=-1, keepdims=True)                 # (1, 1)

    us = jnp.mean(pg, axis=0, keepdims=True)                           # (1, H)
    act_mean = jnp.mean(act, axis=0, keepdims=True)                    # (1, I)

    # rank-1 updates, already in the transposed layout (no transposes of state)
    new_w1t = alpha_w * w1t - eta_w * (us.T * act_mean)                # (H, I)
    new_w2t = alpha_w * w2t - eta_w * (act_mean.T * us)                # (I, H)
    new_b2 = alpha_last * b2 - eta_last * us                           # (1, H)

    # b1 update via linearity:  mean_L(pg @ new_w2) == us @ new_w2
    #   = alpha_w * (us @ w2) - eta_w * (us . us) * act_mean
    us_w2 = jnp.sum(w2t * us, axis=-1, keepdims=True).T                # (1, I)
    us_sq = jnp.sum(us * us, axis=-1, keepdims=True)                   # (1, 1)
    b1_upd = alpha_w * us_w2 - eta_w * us_sq * act_mean                # (1, I)
    new_b1 = alpha_w * b1 - eta_w * b1_upd                             # (1, I)
    return mem_out, (new_w1t, new_b1, new_w2t, new_b2)


# ---------------------------------------------------------------------------
# Pallas kernel + wrapper
# ---------------------------------------------------------------------------
def yaad_kernel(x_ref,
                wf_ref, wea_ref, cw_ref, cb_ref, lng_ref, lnb_ref, wo_ref,
                w1t_ref, b1_ref, w2t_ref, b2_ref,
                o_ref,
                kvp_s, k_s, v_s, d_s, g_s, ea_s,
                *, seq_len, chunk_size, model_dim, head_dim):
    S, D, H = seq_len, model_dim, head_dim
    PAD = CONV_PAD_ROWS

    x = x_ref[...].astype(jnp.float32)                                 # (S, D)

    # ---- phase 1: one fused projection, shared conv, hoisted gate ----
    proj = _dot(x, wf_ref[...])                                        # (S, 128)
    g_s[...] = jax.nn.sigmoid(proj[:, 2 * H:2 * H + D])                # gate, once
    d_s[...] = _softplus(proj[:, 2 * H + D:3 * H + D])                 # delta (folded chain)

    # causal depthwise conv over the fused [k|v] slab: 4 shifted VMEM reads
    kvp_s[0:PAD, :] = jnp.zeros((PAD, 2 * H), jnp.float32)
    kvp_s[PAD:PAD + S, :] = proj[:, 0:2 * H]
    cw = cw_ref[...]                                                   # (K, 2H)
    conv = jnp.broadcast_to(cb_ref[...], (S, 2 * H))
    for k in range(CONV_KERNEL_SIZE):
        lo = PAD - CONV_PADDING + k
        conv = conv + cw[k:k + 1, :] * kvp_s[lo:lo + S, :]

    k_s[...] = _layernorm(conv[:, 0:H], lng_ref[...], lnb_ref[...]).astype(k_s.dtype)
    v_s[...] = conv[:, H:2 * H]

    # eta / alpha are only ever consumed at the final row of each chunk
    num_chunks = pl.cdiv(S, chunk_size)
    ends = [min((ci + 1) * chunk_size, S) for ci in range(num_chunks)]
    last_rows = jnp.concatenate([x[e - 1:e, :] for e in ends], axis=0)  # (nc, D)
    ea = _dot(last_rows, wea_ref[...])                                  # (nc, 2H)
    lane = lax.broadcasted_iota(jnp.int32, ea.shape, 1)
    ea_s[...] = jnp.where(lane < H, _softplus(ea), jax.nn.sigmoid(ea))

    # ---- phase 2: serial chunk recurrence, streamed output ----
    wo_bf = wo_ref[...].astype(jnp.bfloat16)                            # cast once
    state = (w1t_ref[...], b1_ref[...], w2t_ref[...], b2_ref[...])

    def run_chunk(ci, start, length, st, update):
        kc = k_s[pl.ds(start, length), :]
        vc = v_s[pl.ds(start, length), :]
        dc = d_s[pl.ds(start, length), :]
        ea_row = ea_s[pl.ds(ci, 1), :]
        mem_out, new_st = _chunk_step(kc, vc, dc, ea_row[:, 0:H],
                                      ea_row[:, H:2 * H], st, update=update)
        out_c = _dot(mem_out, wo_bf) * g_s[pl.ds(start, length), :]
        o_ref[pl.ds(start, length), :] = out_c.astype(o_ref.dtype)
        return new_st

    num_full = S // chunk_size
    rem = S - num_full * chunk_size

    if num_full <= 8:
        # short trip count: fully unroll (static offsets, LLO cross-iteration view)
        for ci in range(num_full):
            state = run_chunk(ci, ci * chunk_size, chunk_size, state, True)
    else:
        def body(ci, st):
            start = pl.multiple_of(ci * chunk_size, chunk_size)
            return run_chunk(ci, start, chunk_size, st, True)
        state = lax.fori_loop(0, num_full, body, state, unroll=4)

    if rem:  # ragged tail chunk (static size); its state update is never used
        run_chunk(num_full, num_full * chunk_size, rem, state, False)


def yaad_forward(x, params, chunk_size=DEFAULT_CHUNK_SIZE):
    B, S, D = x.shape
    H = params["wo_t"].shape[0]
    num_chunks = (S + chunk_size - 1) // chunk_size
    plist = [params[n] for n in PARAM_NAMES]

    in_specs = [pl.BlockSpec((None, S, D), lambda b: (b, 0, 0))]
    in_specs += [pl.BlockSpec(p.shape, lambda b: (0, 0)) for p in plist]
    out_spec = pl.BlockSpec((None, S, D), lambda b: (b, 0, 0))

    scratch_shapes = [
        pltpu.VMEM((S + CONV_PAD_ROWS, 2 * H), jnp.float32),  # conv input, zero-padded top
        pltpu.VMEM((S, H), jnp.bfloat16),                     # key (post conv + LN)
        pltpu.VMEM((S, H), jnp.float32),                      # value (post conv)
        pltpu.VMEM((S, H), jnp.float32),                      # delta
        pltpu.VMEM((S, D), jnp.float32),                      # gate (hoisted)
        pltpu.VMEM((num_chunks, 2 * H), jnp.float32),         # eta|alpha at chunk-final rows
    ]

    kern = functools.partial(yaad_kernel, seq_len=S, chunk_size=chunk_size,
                             model_dim=D, head_dim=H)
    return pl.pallas_call(
        kern,
        out_shape=jax.ShapeDtypeStruct((B, S, D), x.dtype),
        grid=(B,),
        in_specs=in_specs,
        out_specs=out_spec,
        scratch_shapes=scratch_shapes,
        compiler_params=pltpu.CompilerParams(
            dimension_semantics=("parallel",),
            vmem_limit_bytes=32 * 1024 * 1024),
    )(x, *plist)


# ---------------------------------------------------------------------------
# pure-JAX reference (same math, no Pallas) for an in-script sanity check
# ---------------------------------------------------------------------------
def _dwconv_ref(x, w, b):
    # x: (S, C), w: (K, C), b: (1, C); causal (left-pad 3) depthwise conv.
    S, C = x.shape
    xp = jnp.concatenate([jnp.zeros((CONV_PADDING, C), x.dtype), x], axis=0)
    out = jnp.broadcast_to(b, (S, C))
    for k in range(CONV_KERNEL_SIZE):
        out = out + w[k][None, :] * xp[k:k + S, :]
    return out


def _yaad_reference(xb, p, chunk_size):
    S, D = xb.shape
    H = p["wo_t"].shape[0]
    x = xb.astype(jnp.float32)

    proj = _dot(x, p["w_fused"])
    gate = jax.nn.sigmoid(proj[:, 2 * H:2 * H + D])
    delta = _softplus(proj[:, 2 * H + D:3 * H + D])
    kv = _dwconv_ref(proj[:, 0:2 * H], p["conv_w"], p["conv_b"])
    k = _layernorm(kv[:, 0:H], p["ln_k_g"], p["ln_k_b"])
    v = kv[:, H:2 * H]
    ea = _dot(x, p["w_ea"])
    eta = _softplus(ea[:, 0:H])
    alpha = jax.nn.sigmoid(ea[:, H:2 * H])

    state = (p["mem_w1t"], p["mem_b1"], p["mem_w2t"], p["mem_b2"])
    num_chunks = (S + chunk_size - 1) // chunk_size
    outs = []
    for ci in range(num_chunks):
        s = ci * chunk_size
        e = min(s + chunk_size, S)
        mem_out, state = _chunk_step(k[s:e], v[s:e], delta[s:e],
                                     eta[e - 1:e], alpha[e - 1:e], state)
        outs.append(mem_out)
    combined = jnp.concatenate(outs, axis=0)
    return _dot(combined, p["wo_t"]) * gate


# ---------------------------------------------------------------------------
# deterministic parameter construction (torch-shaped, then packed for the kernel)
# ---------------------------------------------------------------------------
def init_params(key, model_dim, head_dim, state_dim, low_rank_dim, expansion):
    inner = state_dim * expansion
    keys = jax.random.split(key, 20)

    def lin(k, out_f, in_f):  # torch Linear weight (out_f, in_f)
        bound = 1.0 / math.sqrt(in_f)
        return jax.random.uniform(k, (out_f, in_f), jnp.float32, -bound, bound)

    _Wq = lin(keys[0], head_dim, model_dim)   # present in the module, dead in fwd
    Wk = lin(keys[1], head_dim, model_dim)
    Wv = lin(keys[2], head_dim, model_dim)
    Wo = lin(keys[3], model_dim, head_dim)
    Wg = lin(keys[4], model_dim, model_dim)
    We1 = lin(keys[5], low_rank_dim, model_dim)
    We2 = lin(keys[6], head_dim, low_rank_dim)
    Wd1 = lin(keys[7], low_rank_dim, model_dim)
    Wd2 = lin(keys[8], head_dim, low_rank_dim)
    Wa1 = lin(keys[9], low_rank_dim, model_dim)
    Wa2 = lin(keys[10], head_dim, low_rank_dim)

    cbound = 1.0 / math.sqrt(CONV_KERNEL_SIZE)  # depthwise: fan_in = 1*K
    conv_w = jax.random.uniform(keys[11], (head_dim, CONV_KERNEL_SIZE),
                                jnp.float32, -cbound, cbound)
    conv_b = jax.random.uniform(keys[12], (head_dim,), jnp.float32, -cbound, cbound)

    m1b = 1.0 / math.sqrt(head_dim)   # fan_in of memory_weight1
    m2b = 1.0 / math.sqrt(inner)      # fan_in of memory_weight2
    mem_w1 = jax.random.uniform(keys[13], (inner, head_dim), jnp.float32, -m1b, m1b)
    mem_b1 = jax.random.uniform(keys[14], (inner,), jnp.float32, -m1b, m1b)
    mem_w2 = jax.random.uniform(keys[15], (head_dim, inner), jnp.float32, -m2b, m2b)
    mem_b2 = jax.random.uniform(keys[16], (head_dim,), jnp.float32, -m2b, m2b)

    # ----- pack / fold for the kernel (forward-equivalent transformations) -----
    # the eta/delta/alpha heads are two Linears with no nonlinearity between:
    #   x @ W1^T @ W2^T == x @ (W2 @ W1)^T  -> fold into a single [D, H] weight
    Wd_full = (Wd2 @ Wd1).T
    We_full = (We2 @ We1).T
    Wa_full = (Wa2 @ Wa1).T
    # fused phase-1 projection: [ k | v | gate | delta ], zero-padded to 128 lanes
    w_fused = jnp.concatenate([Wk.T, Wv.T, Wg.T, Wd_full], axis=1)
    pad = (-w_fused.shape[1]) % 128
    if pad:
        w_fused = jnp.pad(w_fused, ((0, 0), (0, pad)))
    w_ea = jnp.concatenate([We_full, Wa_full], axis=1)            # (D, 2H)
    conv_w2 = jnp.tile(conv_w.T, (1, 2))                          # (K, 2H), same taps for k|v
    conv_b2 = jnp.tile(conv_b[None, :], (1, 2))                   # (1, 2H)

    return {
        "w_fused": w_fused,
        "w_ea": w_ea,
        "conv_w": conv_w2,
        "conv_b": conv_b2,
        "ln_k_g": jnp.ones((1, head_dim), jnp.float32),
        "ln_k_b": jnp.zeros((1, head_dim), jnp.float32),
        "wo_t": Wo.T,
        "mem_w1t": mem_w1.T,           # (H, I) transposed memory state
        "mem_b1": mem_b1[None, :],     # (1, I)
        "mem_w2t": mem_w2.T,           # (I, H)
        "mem_b2": mem_b2[None, :],     # (1, H)
    }


if __name__ == "__main__":
    B, S = 2, 160
    MODEL_DIM, HEAD_DIM, STATE_DIM, LOW_RANK, EXPANSION = 32, 16, 16, 8, 2
    CHUNK_SIZE = 64  # 2 full chunks + ragged tail of 32: exercises both paths

    key = jax.random.PRNGKey(0)
    kx, kp = jax.random.split(key)
    x = jax.random.normal(kx, (B, S, MODEL_DIM), jnp.float32)
    params = init_params(kp, MODEL_DIM, HEAD_DIM, STATE_DIM, LOW_RANK, EXPANSION)

    out = yaad_forward(x, params, CHUNK_SIZE)
    out = jax.block_until_ready(out)
    assert out.shape == (B, S, MODEL_DIM)

    ref = jax.vmap(lambda xb: _yaad_reference(xb, params, CHUNK_SIZE))(x)
    ref = jax.block_until_ready(ref)
    max_err = float(jnp.max(jnp.abs(out - ref)))
    assert jnp.allclose(out, ref, rtol=2e-2, atol=2e-2), f"max abs err {max_err}"

    print("KERNEL_OK")
</pallas_src>

<mosaic_0001>
module attributes {stable_mosaic.version = 11 : i64} {
  func.func @yaad_kernel(%arg0: i32, %arg1: memref<1x160x32xf32, #tpu.memory_space<vmem>>, %arg2: memref<32x128xf32, #tpu.memory_space<vmem>>, %arg3: memref<32x32xf32, #tpu.memory_space<vmem>>, %arg4: memref<4x32xf32, #tpu.memory_space<vmem>>, %arg5: memref<1x32xf32, #tpu.memory_space<vmem>>, %arg6: memref<1x16xf32, #tpu.memory_space<vmem>>, %arg7: memref<1x16xf32, #tpu.memory_space<vmem>>, %arg8: memref<16x32xf32, #tpu.memory_space<vmem>>, %arg9: memref<16x32xf32, #tpu.memory_space<vmem>>, %arg10: memref<1x32xf32, #tpu.memory_space<vmem>>, %arg11: memref<32x16xf32, #tpu.memory_space<vmem>>, %arg12: memref<1x16xf32, #tpu.memory_space<vmem>>, %arg13: memref<1x160x32xf32, #tpu.memory_space<vmem>>, %arg14: memref<168x32xf32, #tpu.memory_space<vmem>>, %arg15: memref<160x16xbf16, #tpu.memory_space<vmem>>, %arg16: memref<160x16xf32, #tpu.memory_space<vmem>>, %arg17: memref<160x16xf32, #tpu.memory_space<vmem>>, %arg18: memref<160x32xf32, #tpu.memory_space<vmem>>, %arg19: memref<3x32xf32, #tpu.memory_space<vmem>>) attributes {dimension_semantics = [#tpu.dimension_semantics<parallel>], iteration_bounds = array<i64: 2>, scalar_prefetch = 0 : i64, scratch_operands = 6 : i64, tpu.core_type = #tpu.core_type<tc>, window_params = [{transform_indices = @transform_0, window_bounds = array<i64: 1, 160, 32>}, {pipeline_mode = #tpu.pipeline_mode<synchronous>, transform_indices = @transform_1, window_bounds = array<i64: 32, 128>}, {pipeline_mode = #tpu.pipeline_mode<synchronous>, transform_indices = @transform_2, window_bounds = array<i64: 32, 32>}, {pipeline_mode = #tpu.pipeline_mode<synchronous>, transform_indices = @transform_3, window_bounds = array<i64: 4, 32>}, {pipeline_mode = #tpu.pipeline_mode<synchronous>, transform_indices = @transform_4, window_bounds = array<i64: 1, 32>}, {pipeline_mode = #tpu.pipeline_mode<synchronous>, transform_indices = @transform_5, window_bounds = array<i64: 1, 16>}, {pipeline_mode = #tpu.pipeline_mode<synchronous>, transform_indices = @transform_6, window_bounds = array<i64: 1, 16>}, {pipeline_mode = #tpu.pipeline_mode<synchronous>, transform_indices = @transform_7, window_bounds = array<i64: 16, 32>}, {pipeline_mode = #tpu.pipeline_mode<synchronous>, transform_indices = @transform_8, window_bounds = array<i64: 16, 32>}, {pipeline_mode = #tpu.pipeline_mode<synchronous>, transform_indices = @transform_9, window_bounds = array<i64: 1, 32>}, {pipeline_mode = #tpu.pipeline_mode<synchronous>, transform_indices = @transform_10, window_bounds = array<i64: 32, 16>}, {pipeline_mode = #tpu.pipeline_mode<synchronous>, transform_indices = @transform_11, window_bounds = array<i64: 1, 16>}, {transform_indices = @transform_12, window_bounds = array<i64: 1, 160, 32>}]} {
    %c0 = arith.constant 0 : index
    %c0_0 = arith.constant 0 : index
    %c0_1 = arith.constant 0 : index
    %0 = vector.load %arg1[%c0, %c0_0, %c0_1] : memref<1x160x32xf32, #tpu.memory_space<vmem>>, vector<1x160x32xf32>
    %1 = vector.shape_cast %0 : vector<1x160x32xf32> to vector<160x32xf32>
    %c0_2 = arith.constant 0 : index
    %c0_3 = arith.constant 0 : index
    %2 = vector.load %arg2[%c0_2, %c0_3] : memref<32x128xf32, #tpu.memory_space<vmem>>, vector<32x128xf32>
    %3 = arith.truncf %1 : vector<160x32xf32> to vector<160x32xbf16>
    %4 = arith.truncf %2 : vector<32x128xf32> to vector<32x128xbf16>
    %cst = arith.constant dense<0.000000e+00> : vector<160x128xf32>
    %5 = tpu.matmul %3, %4, %cst {dimension_numbers = #tpu.dot_dimension_numbers<[1], [0], [0], [1], [0, 0, 1, 1], [], []>} : vector<160x32xbf16>, vector<32x128xbf16>, vector<160x128xf32> -> vector<160x128xf32>
    %6 = vector.extract_strided_slice %5 {offsets = [0, 32], sizes = [160, 32], strides = [1, 1]} : vector<160x128xf32> to vector<160x32xf32>
    %7 = arith.negf %6 : vector<160x32xf32>
    %8 = math.exp %7 : vector<160x32xf32>
    %cst_4 = arith.constant 1.000000e+00 : f32
    %9 = vector.broadcast %cst_4 : f32 to vector<160x32xf32>
    %10 = arith.addf %9, %8 : vector<160x32xf32>
    %11 = arith.divf %9, %10 : vector<160x32xf32>
    %c0_5 = arith.constant 0 : index
    %c0_6 = arith.constant 0 : index
    %12 = vector.load %arg18[%c0_5, %c0_6] : memref<160x32xf32, #tpu.memory_space<vmem>>, vector<160x32xf32>
    tpu.vector_store %arg18[%c0_5, %c0_6], %11 {strides = array<i32>} : memref<160x32xf32, #tpu.memory_space<vmem>>, vector<160x32xf32>,
    %13 = vector.extract_strided_slice %5 {offsets = [0, 64], sizes = [160, 16], strides = [1, 1]} : vector<160x128xf32> to vector<160x16xf32>
    %cst_7 = arith.constant 2.000000e+01 : f32
    %14 = vector.broadcast %cst_7 : f32 to vector<160x16xf32>
    %15 = arith.cmpf ogt, %13, %14 : vector<160x16xf32>
    %cst_8 = arith.constant 2.000000e+01 : f32
    %16 = vector.broadcast %cst_8 : f32 to vector<160x16xf32>
    %17 = arith.minimumf %13, %16 : vector<160x16xf32>
    %18 = math.exp %17 : vector<160x16xf32>
    %19 = math.log1p %18 : vector<160x16xf32>
    %20 = arith.select %15, %13, %19 : vector<160x16xi1>, vector<160x16xf32>
    %c0_9 = arith.constant 0 : index
    %c0_10 = arith.constant 0 : index
    %21 = vector.load %arg17[%c0_9, %c0_10] : memref<160x16xf32, #tpu.memory_space<vmem>>, vector<160x16xf32>
    tpu.vector_store %arg17[%c0_9, %c0_10], %20 {strides = array<i32>} : memref<160x16xf32, #tpu.memory_space<vmem>>, vector<160x16xf32>,
    %cst_11 = arith.constant 0.000000e+00 : f32
    %22 = vector.broadcast %cst_11 : f32 to vector<8x32xf32>
    %c0_12 = arith.constant 0 : index
    %c0_13 = arith.constant 0 : index
    %23 = vector.load %arg14[%c0_12, %c0_13] : memref<168x32xf32, #tpu.memory_space<vmem>>, vector<8x32xf32>
    tpu.vector_store %arg14[%c0_12, %c0_13], %22 {strides = array<i32>} : memref<168x32xf32, #tpu.memory_space<vmem>>, vector<8x32xf32>,
    %24 = vector.extract_strided_slice %5 {offsets = [0, 0], sizes = [160, 32], strides = [1, 1]} : vector<160x128xf32> to vector<160x32xf32>
    %c8 = arith.constant 8 : index
    %c0_14 = arith.constant 0 : index
    %25 = vector.load %arg14[%c8, %c0_14] : memref<168x32xf32, #tpu.memory_space<vmem>>, vector<160x32xf32>
    tpu.vector_store %arg14[%c8, %c0_14], %24 {strides = array<i32>} : memref<168x32xf32, #tpu.memory_space<vmem>>, vector<160x32xf32>,
    %c0_15 = arith.constant 0 : index
    %c0_16 = arith.constant 0 : index
    %26 = vector.load %arg4[%c0_15, %c0_16] : memref<4x32xf32, #tpu.memory_space<vmem>>, vector<4x32xf32>
    %c0_17 = arith.constant 0 : index
    %c0_18 = arith.constant 0 : index
    %27 = vector.load %arg5[%c0_17, %c0_18] : memref<1x32xf32, #tpu.memory_space<vmem>>, vector<1x32xf32>
    %28 = vector.shape_cast %27 : vector<1x32xf32> to vector<1x32xf32>
    %29 = vector.broadcast %28 : vector<1x32xf32> to vector<160x32xf32>
    %30 = vector.extract_strided_slice %26 {offsets = [0, 0], sizes = [1, 32], strides = [1, 1]} : vector<4x32xf32> to vector<1x32xf32>
    %c5 = arith.constant 5 : index
    %c0_19 = arith.constant 0 : index
    %31 = vector.load %arg14[%c5, %c0_19] : memref<168x32xf32, #tpu.memory_space<vmem>>, vector<160x32xf32>
    %32 = vector.broadcast %30 : vector<1x32xf32> to vector<160x32xf32>
    %33 = arith.mulf %32, %31 : vector<160x32xf32>
    %34 = arith.addf %29, %33 : vector<160x32xf32>
    %35 = vector.extract_strided_slice %26 {offsets = [1, 0], sizes = [1, 32], strides = [1, 1]} : vector<4x32xf32> to vector<1x32xf32>
    %c6 = arith.constant 6 : index
    %c0_20 = arith.constant 0 : index
    %36 = vector.load %arg14[%c6, %c0_20] : memref<168x32xf32, #tpu.memory_space<vmem>>, vector<160x32xf32>
    %37 = vector.broadcast %35 : vector<1x32xf32> to vector<160x32xf32>
    %38 = arith.mulf %37, %36 : vector<160x32xf32>
    %39 = arith.addf %34, %38 : vector<160x32xf32>
    %40 = vector.extract_strided_slice %26 {offsets = [2, 0], sizes = [1, 32], strides = [1, 1]} : vector<4x32xf32> to vector<1x32xf32>
    %c7 = arith.constant 7 : index
    %c0_21 = arith.constant 0 : index
    %41 = vector.load %arg14[%c7, %c0_21] : memref<168x32xf32, #tpu.memory_space<vmem>>, vector<160x32xf32>
    %42 = vector.broadcast %40 : vector<1x32xf32> to vector<160x32xf32>
    %43 = arith.mulf %42, %41 : vector<160x32xf32>
    %44 = arith.addf %39, %43 : vector<160x32xf32>
    %45 = vector.extract_strided_slice %26 {offsets = [3, 0], sizes = [1, 32], strides = [1, 1]} : vector<4x32xf32> to vector<1x32xf32>
    %c8_22 = arith.constant 8 : index
    %c0_23 = arith.constant 0 : index
    %46 = vector.load %arg14[%c8_22, %c0_23] : memref<168x32xf32, #tpu.memory_space<vmem>>, vector<160x32xf32>
    %47 = vector.broadcast %45 : vector<1x32xf32> to vector<160x32xf32>
    %48 = arith.mulf %47, %46 : vector<160x32xf32>
    %49 = arith.addf %44, %48 : vector<160x32xf32>
    %50 = vector.extract_strided_slice %49 {offsets = [0, 0], sizes = [160, 16], strides = [1, 1]} : vector<160x32xf32> to vector<160x16xf32>
    %c0_24 = arith.constant 0 : index
    %c0_25 = arith.constant 0 : index
    %51 = vector.load %arg6[%c0_24, %c0_25] : memref<1x16xf32, #tpu.memory_space<vmem>>, vector<1x16xf32>
    %c0_26 = arith.constant 0 : index
    %c0_27 = arith.constant 0 : index
    %52 = vector.load %arg7[%c0_26, %c0_27] : memref<1x16xf32, #tpu.memory_space<vmem>>, vector<1x16xf32>
    %cst_28 = arith.constant dense<0.000000e+00> : vector<160xf32>
    %53 = vector.multi_reduction <add>, %50, %cst_28 [1] : vector<160x16xf32> to vector<160xf32>
    %54 = vector.shape_cast %53 : vector<160xf32> to vector<160x1xf32>
    %cst_29 = arith.constant 1.600000e+01 : f32
    %55 = vector.broadcast %cst_29 : f32 to vector<160x1xf32>
    %56 = arith.divf %54, %55 : vector<160x1xf32>
    %57 = vector.broadcast %56 : vector<160x1xf32> to vector<160x16xf32>
    %58 = arith.subf %50, %57 : vector<160x16xf32>
    %59 = arith.mulf %58, %58 : vector<160x16xf32>
    %cst_30 = arith.constant dense<0.000000e+00> : vector<160xf32>
    %60 = vector.multi_reduction <add>, %59, %cst_30 [1] : vector<160x16xf32> to vector<160xf32>
    %61 = vector.shape_cast %60 : vector<160xf32> to vector<160x1xf32>
    %cst_31 = arith.constant 1.600000e+01 : f32
    %62 = vector.broadcast %cst_31 : f32 to vector<160x1xf32>
    %63 = arith.divf %61, %62 : vector<160x1xf32>
    %64 = vector.broadcast %56 : vector<160x1xf32> to vector<160x16xf32>
    %65 = arith.subf %50, %64 : vector<160x16xf32>
    %cst_32 = arith.constant 9.99999974E-6 : f32
    %66 = vector.broadcast %cst_32 : f32 to vector<160x1xf32>
    %67 = arith.addf %63, %66 : vector<160x1xf32>
    %68 = math.rsqrt %67 : vector<160x1xf32>
    %69 = vector.broadcast %68 : vector<160x1xf32> to vector<160x16xf32>
    %70 = arith.mulf %65, %69 : vector<160x16xf32>
    %71 = vector.broadcast %51 : vector<1x16xf32> to vector<160x16xf32>
    %72 = arith.mulf %70, %71 : vector<160x16xf32>
    %73 = vector.broadcast %52 : vector<1x16xf32> to vector<160x16xf32>
    %74 = arith.addf %72, %73 : vector<160x16xf32>
    %75 = arith.truncf %74 : vector<160x16xf32> to vector<160x16xbf16>
    %c0_33 = arith.constant 0 : index
    %c0_34 = arith.constant 0 : index
    %76 = vector.load %arg15[%c0_33, %c0_34] : memref<160x16xbf16, #tpu.memory_space<vmem>>, vector<160x16xbf16>
    tpu.vector_store %arg15[%c0_33, %c0_34], %75 {strides = array<i32>} : memref<160x16xbf16, #tpu.memory_space<vmem>>, vector<160x16xbf16>,
    %77 = vector.extract_strided_slice %49 {offsets = [0, 16], sizes = [160, 16], strides = [1, 1]} : vector<160x32xf32> to vector<160x16xf32>
    %c0_35 = arith.constant 0 : index
    %c0_36 = arith.constant 0 : index
    %78 = vector.load %arg16[%c0_35, %c0_36] : memref<160x16xf32, #tpu.memory_space<vmem>>, vector<160x16xf32>
    tpu.vector_store %arg16[%c0_35, %c0_36], %77 {strides = array<i32>} : memref<160x16xf32, #tpu.memory_space<vmem>>, vector<160x16xf32>,
    %79 = vector.extract_strided_slice %1 {offsets = [63, 0], sizes = [1, 32], strides = [1, 1]} : vector<160x32xf32> to vector<1x32xf32>
    %80 = vector.extract_strided_slice %1 {offsets = [127, 0], sizes = [1, 32], strides = [1, 1]} : vector<160x32xf32> to vector<1x32xf32>
    %81 = vector.extract_strided_slice %1 {offsets = [159, 0], sizes = [1, 32], strides = [1, 1]} : vector<160x32xf32> to vector<1x32xf32>
    %82 = tpu.concatenate %79, %80, %81 in 0 : vector<1x32xf32>, vector<1x32xf32>, vector<1x32xf32> -> vector<3x32xf32>
    %c0_37 = arith.constant 0 : index
    %c0_38 = arith.constant 0 : index
    %83 = vector.load %arg3[%c0_37, %c0_38] : memref<32x32xf32, #tpu.memory_space<vmem>>, vector<32x32xf32>
    %84 = arith.truncf %82 : vector<3x32xf32> to vector<3x32xbf16>
    %85 = arith.truncf %83 : vector<32x32xf32> to vector<32x32xbf16>
    %cst_39 = arith.constant dense<0.000000e+00> : vector<3x32xf32>
    %86 = tpu.matmul %84, %85, %cst_39 {dimension_numbers = #tpu.dot_dimension_numbers<[1], [0], [0], [1], [0, 0, 1, 1], [], []>} : vector<3x32xbf16>, vector<32x32xbf16>, vector<3x32xf32> -> vector<3x32xf32>
    %87 = tpu.iota {dimensions = array<i32: 1>} : vector<3x32xi32>
    %c16_i32 = arith.constant 16 : i32
    %88 = vector.broadcast %c16_i32 : i32 to vector<3x32xi32>
    %89 = arith.cmpi slt, %87, %88 : vector<3x32xi32>
    %cst_40 = arith.constant 2.000000e+01 : f32
    %90 = vector.broadcast %cst_40 : f32 to vector<3x32xf32>
    %91 = arith.cmpf ogt, %86, %90 : vector<3x32xf32>
    %cst_41 = arith.constant 2.000000e+01 : f32
    %92 = vector.broadcast %cst_41 : f32 to vector<3x32xf32>
    %93 = arith.minimumf %86, %92 : vector<3x32xf32>
    %94 = math.exp %93 : vector<3x32xf32>
    %95 = math.log1p %94 : vector<3x32xf32>
    %96 = arith.select %91, %86, %95 : vector<3x32xi1>, vector<3x32xf32>
    %97 = arith.negf %86 : vector<3x32xf32>
    %98 = math.exp %97 : vector<3x32xf32>
    %cst_42 = arith.constant 1.000000e+00 : f32
    %99 = vector.broadcast %cst_42 : f32 to vector<3x32xf32>
    %100 = arith.addf %99, %98 : vector<3x32xf32>
    %101 = arith.divf %99, %100 : vector<3x32xf32>
    %102 = arith.select %89, %96, %101 : vector<3x32xi1>, vector<3x32xf32>
    %c0_43 = arith.constant 0 : index
    %c0_44 = arith.constant 0 : index
    %103 = vector.load %arg19[%c0_43, %c0_44] : memref<3x32xf32, #tpu.memory_space<vmem>>, vector<3x32xf32>
    tpu.vector_store %arg19[%c0_43, %c0_44], %102 {strides = array<i32>} : memref<3x32xf32, #tpu.memory_space<vmem>>, vector<3x32xf32>,
    %c0_45 = arith.constant 0 : index
    %c0_46 = arith.constant 0 : index
    %104 = vector.load %arg8[%c0_45, %c0_46] : memref<16x32xf32, #tpu.memory_space<vmem>>, vector<16x32xf32>
    %105 = arith.truncf %104 : vector<16x32xf32> to vector<16x32xbf16>
    %c0_47 = arith.constant 0 : index
    %c0_48 = arith.constant 0 : index
    %106 = vector.load %arg9[%c0_47, %c0_48] : memref<16x32xf32, #tpu.memory_space<vmem>>, vector<16x32xf32>
    %c0_49 = arith.constant 0 : index
    %c0_50 = arith.constant 0 : index
    %107 = vector.load %arg10[%c0_49, %c0_50] : memref<1x32xf32, #tpu.memory_space<vmem>>, vector<1x32xf32>
    %c0_51 = arith.constant 0 : index
    %c0_52 = arith.constant 0 : index
    %108 = vector.load %arg11[%c0_51, %c0_52] : memref<32x16xf32, #tpu.memory_space<vmem>>, vector<32x16xf32>
    %c0_53 = arith.constant 0 : index
    %c0_54 = arith.constant 0 : index
    %109 = vector.load %arg12[%c0_53, %c0_54] : memref<1x16xf32, #tpu.memory_space<vmem>>, vector<1x16xf32>
    %c0_55 = arith.constant 0 : index
    %c0_56 = arith.constant 0 : index
    %110 = vector.load %arg15[%c0_55, %c0_56] : memref<160x16xbf16, #tpu.memory_space<vmem>>, vector<64x16xbf16>
    %c0_57 = arith.constant 0 : index
    %c0_58 = arith.constant 0 : index
    %111 = vector.load %arg16[%c0_57, %c0_58] : memref<160x16xf32, #tpu.memory_space<vmem>>, vector<64x16xf32>
    %c0_59 = arith.constant 0 : index
    %c0_60 = arith.constant 0 : index
    %112 = vector.load %arg17[%c0_59, %c0_60] : memref<160x16xf32, #tpu.memory_space<vmem>>, vector<64x16xf32>
    %c0_61 = arith.constant 0 : index
    %c0_62 = arith.constant 0 : index
    %113 = vector.load %arg19[%c0_61, %c0_62] : memref<3x32xf32, #tpu.memory_space<vmem>>, vector<1x32xf32>
    %114 = vector.extract_strided_slice %113 {offsets = [0, 0], sizes = [1, 16], strides = [1, 1]} : vector<1x32xf32> to vector<1x16xf32>
    %115 = vector.extract_strided_slice %113 {offsets = [0, 16], sizes = [1, 16], strides = [1, 1]} : vector<1x32xf32> to vector<1x16xf32>
    %116 = arith.truncf %106 : vector<16x32xf32> to vector<16x32xbf16>
    %cst_63 = arith.constant dense<0.000000e+00> : vector<64x32xf32>
    %117 = tpu.matmul %110, %116, %cst_63 {dimension_numbers = #tpu.dot_dimension_numbers<[1], [0], [0], [1], [0, 0, 1, 1], [], []>} : vector<64x16xbf16>, vector<16x32xbf16>, vector<64x32xf32> -> vector<64x32xf32>
    %118 = vector.broadcast %107 : vector<1x32xf32> to vector<64x32xf32>
    %119 = arith.addf %117, %118 : vector<64x32xf32>
    %cst_64 = arith.constant 5.000000e-01 : f32
    %120 = vector.broadcast %cst_64 : f32 to vector<64x32xf32>
    %121 = arith.mulf %120, %119 : vector<64x32xf32>
    %cst_65 = arith.constant 0.707106769 : f32
    %122 = vector.broadcast %cst_65 : f32 to vector<64x32xf32>
    %123 = arith.mulf %119, %122 : vector<64x32xf32>
    %124 = math.erf %123 : vector<64x32xf32>
    %cst_66 = arith.constant 1.000000e+00 : f32
    %125 = vector.broadcast %cst_66 : f32 to vector<64x32xf32>
    %126 = arith.addf %125, %124 : vector<64x32xf32>
    %127 = arith.mulf %121, %126 : vector<64x32xf32>
    %128 = arith.truncf %127 : vector<64x32xf32> to vector<64x32xbf16>
    %129 = arith.truncf %108 : vector<32x16xf32> to vector<32x16xbf16>
    %cst_67 = arith.constant dense<0.000000e+00> : vector<64x16xf32>
    %130 = tpu.matmul %128, %129, %cst_67 {dimension_numbers = #tpu.dot_dimension_numbers<[1], [0], [0], [1], [0, 0, 1, 1], [], []>} : vector<64x32xbf16>, vector<32x16xbf16>, vector<64x16xf32> -> vector<64x16xf32>
    %131 = vector.broadcast %109 : vector<1x16xf32> to vector<64x16xf32>
    %132 = arith.addf %130, %131 : vector<64x16xf32>
    %133 = arith.subf %132, %111 : vector<64x16xf32>
    %134 = arith.mulf %133, %133 : vector<64x16xf32>
    %cst_68 = arith.constant dense<0.000000e+00> : vector<64xf32>
    %135 = vector.multi_reduction <add>, %134, %cst_68 [1] : vector<64x16xf32> to vector<64xf32>
    %136 = vector.shape_cast %135 : vector<64xf32> to vector<64x1xf32>
    %137 = math.sqrt %136 : vector<64x1xf32>
    %cst_69 = arith.constant 9.99999971E-10 : f32
    %138 = vector.broadcast %cst_69 : f32 to vector<64x1xf32>
    %139 = arith.addf %137, %138 : vector<64x1xf32>
    %140 = vector.broadcast %139 : vector<64x1xf32> to vector<64x16xf32>
    %141 = arith.divf %133, %140 : vector<64x16xf32>
    %142 = arith.mulf %112, %141 : vector<64x16xf32>
    %143 = vector.broadcast %137 : vector<64x1xf32> to vector<64x16xf32>
    %144 = arith.cmpf ogt, %143, %112 : vector<64x16xf32>
    %145 = arith.select %144, %142, %133 : vector<64x16xi1>, vector<64x16xf32>
    %cst_70 = arith.constant dense<0.000000e+00> : vector<1xf32>
    %146 = vector.multi_reduction <add>, %115, %cst_70 [1] : vector<1x16xf32> to vector<1xf32>
    %147 = vector.shape_cast %146 : vector<1xf32> to vector<1x1xf32>
    %cst_71 = arith.constant 1.600000e+01 : f32
    %148 = vector.broadcast %cst_71 : f32 to vector<1x1xf32>
    %149 = arith.divf %147, %148 : vector<1x1xf32>
    %cst_72 = arith.constant dense<0.000000e+00> : vector<1xf32>
    %150 = vector.multi_reduction <add>, %114, %cst_72 [1] : vector<1x16xf32> to vector<1xf32>
    %151 = vector.shape_cast %150 : vector<1xf32> to vector<1x1xf32>
    %cst_73 = arith.constant 1.600000e+01 : f32
    %152 = vector.broadcast %cst_73 : f32 to vector<1x1xf32>
    %153 = arith.divf %151, %152 : vector<1x1xf32>
    %cst_74 = arith.constant dense<0.000000e+00> : vector<16xf32>
    %154 = vector.multi_reduction <add>, %145, %cst_74 [0] : vector<64x16xf32> to vector<16xf32>
    %155 = vector.shape_cast %154 : vector<16xf32> to vector<1x16xf32>
    %cst_75 = arith.constant 6.400000e+01 : f32
    %156 = vector.broadcast %cst_75 : f32 to vector<1x16xf32>
    %157 = arith.divf %155, %156 : vector<1x16xf32>
    %cst_76 = arith.constant dense<0.000000e+00> : vector<32xf32>
    %158 = vector.multi_reduction <add>, %127, %cst_76 [0] : vector<64x32xf32> to vector<32xf32>
    %159 = vector.shape_cast %158 : vector<32xf32> to vector<1x32xf32>
    %cst_77 = arith.constant 6.400000e+01 : f32
    %160 = vector.broadcast %cst_77 : f32 to vector<1x32xf32>
    %161 = arith.divf %159, %160 : vector<1x32xf32>
    %162 = vector.broadcast %149 : vector<1x1xf32> to vector<16x32xf32>
    %163 = arith.mulf %162, %106 : vector<16x32xf32>
    %164 = tpu.transpose %157, [1, 0] : vector<1x16xf32> -> vector<16x1xf32>
    %165 = vector.broadcast %164 : vector<16x1xf32> to vector<16x32xf32>
    %166 = vector.broadcast %161 : vector<1x32xf32> to vector<16x32xf32>
    %167 = arith.mulf %165, %166 : vector<16x32xf32>
    %168 = vector.broadcast %153 : vector<1x1xf32> to vector<16x32xf32>
    %169 = arith.mulf %168, %167 : vector<16x32xf32>
    %170 = arith.subf %163, %169 : vector<16x32xf32>
    %171 = vector.broadcast %149 : vector<1x1xf32> to vector<32x16xf32>
    %172 = arith.mulf %171, %108 : vector<32x16xf32>
    %173 = tpu.transpose %161, [1, 0] : vector<1x32xf32> -> vector<32x1xf32>
    %174 = vector.broadcast %173 : vector<32x1xf32> to vector<32x16xf32>
    %175 = vector.broadcast %157 : vector<1x16xf32> to vector<32x16xf32>
    %176 = arith.mulf %174, %175 : vector<32x16xf32>
    %177 = vector.broadcast %153 : vector<1x1xf32> to vector<32x16xf32>
    %178 = arith.mulf %177, %176 : vector<32x16xf32>
    %179 = arith.subf %172, %178 : vector<32x16xf32>
    %180 = arith.mulf %115, %109 : vector<1x16xf32>
    %181 = arith.mulf %114, %157 : vector<1x16xf32>
    %182 = arith.subf %180, %181 : vector<1x16xf32>
    %183 = vector.broadcast %157 : vector<1x16xf32> to vector<32x16xf32>
    %184 = arith.mulf %108, %183 : vector<32x16xf32>
    %cst_78 = arith.constant dense<0.000000e+00> : vector<32xf32>
    %185 = vector.multi_reduction <add>, %184, %cst_78 [1] : vector<32x16xf32> to vector<32xf32>
    %186 = vector.shape_cast %185 : vector<32xf32> to vector<32x1xf32>
    %187 = tpu.transpose %186, [1, 0] : vector<32x1xf32> -> vector<1x32xf32>
    %188 = arith.mulf %157, %157 : vector<1x16xf32>
    %cst_79 = arith.constant dense<0.000000e+00> : vector<1xf32>
    %189 = vector.multi_reduction <add>, %188, %cst_79 [1] : vector<1x16xf32> to vector<1xf32>
    %190 = vector.shape_cast %189 : vector<1xf32> to vector<1x1xf32>
    %191 = vector.broadcast %149 : vector<1x1xf32> to vector<1x32xf32>
    %192 = arith.mulf %191, %187 : vector<1x32xf32>
    %193 = arith.mulf %153, %190 : vector<1x1xf32>
    %194 = vector.broadcast %193 : vector<1x1xf32> to vector<1x32xf32>
    %195 = arith.mulf %194, %161 : vector<1x32xf32>
    %196 = arith.subf %192, %195 : vector<1x32xf32>
    %197 = vector.broadcast %149 : vector<1x1xf32> to vector<1x32xf32>
    %198 = arith.mulf %197, %107 : vector<1x32xf32>
    %199 = vector.broadcast %153 : vector<1x1xf32> to vector<1x32xf32>
    %200 = arith.mulf %199, %196 : vector<1x32xf32>
    %201 = arith.subf %198, %200 : vector<1x32xf32>
    %202 = arith.truncf %132 : vector<64x16xf32> to vector<64x16xbf16>
    %cst_80 = arith.constant dense<0.000000e+00> : vector<64x32xf32>
    %203 = tpu.matmul %202, %105, %cst_80 {dimension_numbers = #tpu.dot_dimension_numbers<[1], [0], [0], [1], [0, 0, 1, 1], [], []>} : vector<64x16xbf16>, vector<16x32xbf16>, vector<64x32xf32> -> vector<64x32xf32>
    %c0_81 = arith.constant 0 : index
    %c0_82 = arith.constant 0 : index
    %204 = vector.load %arg18[%c0_81, %c0_82] : memref<160x32xf32, #tpu.memory_space<vmem>>, vector<64x32xf32>
    %205 = arith.mulf %203, %204 : vector<64x32xf32>
    %c0_83 = arith.constant 0 : index
    %c0_84 = arith.constant 0 : index
    %c0_85 = arith.constant 0 : index
    %206 = vector.load %arg13[%c0_83, %c0_84, %c0_85] : memref<1x160x32xf32, #tpu.memory_space<vmem>>, vector<1x64x32xf32>
    %207 = vector.shape_cast %206 : vector<1x64x32xf32> to vector<64x32xf32>
    %208 = vector.shape_cast %205 : vector<64x32xf32> to vector<1x64x32xf32>
    tpu.vector_store %arg13[%c0_83, %c0_84, %c0_85], %208 {strides = array<i32>} : memref<1x160x32xf32, #tpu.memory_space<vmem>>, vector<1x64x32xf32>,
    %c64 = arith.constant 64 : index
    %c0_86 = arith.constant 0 : index
    %209 = vector.load %arg15[%c64, %c0_86] : memref<160x16xbf16, #tpu.memory_space<vmem>>, vector<64x16xbf16>
    %c64_87 = arith.constant 64 : index
    %c0_88 = arith.constant 0 : index
    %210 = vector.load %arg16[%c64_87, %c0_88] : memref<160x16xf32, #tpu.memory_space<vmem>>, vector<64x16xf32>
    %c64_89 = arith.constant 64 : index
    %c0_90 = arith.constant 0 : index
    %211 = vector.load %arg17[%c64_89, %c0_90] : memref<160x16xf32, #tpu.memory_space<vmem>>, vector<64x16xf32>
    %c1 = arith.constant 1 : index
    %c0_91 = arith.constant 0 : index
    %212 = vector.load %arg19[%c1, %c0_91] : memref<3x32xf32, #tpu.memory_space<vmem>>, vector<1x32xf32>
    %213 = vector.extract_strided_slice %212 {offsets = [0, 0], sizes = [1, 16], strides = [1, 1]} : vector<1x32xf32> to vector<1x16xf32>
    %214 = vector.extract_strided_slice %212 {offsets = [0, 16], sizes = [1, 16], strides = [1, 1]} : vector<1x32xf32> to vector<1x16xf32>
    %215 = arith.truncf %170 : vector<16x32xf32> to vector<16x32xbf16>
    %cst_92 = arith.constant dense<0.000000e+00> : vector<64x32xf32>
    %216 = tpu.matmul %209, %215, %cst_92 {dimension_numbers = #tpu.dot_dimension_numbers<[1], [0], [0], [1], [0, 0, 1, 1], [], []>} : vector<64x16xbf16>, vector<16x32xbf16>, vector<64x32xf32> -> vector<64x32xf32>
    %217 = vector.broadcast %201 : vector<1x32xf32> to vector<64x32xf32>
    %218 = arith.addf %216, %217 : vector<64x32xf32>
    %cst_93 = arith.constant 5.000000e-01 : f32
    %219 = vector.broadcast %cst_93 : f32 to vector<64x32xf32>
    %220 = arith.mulf %219, %218 : vector<64x32xf32>
    %cst_94 = arith.constant 0.707106769 : f32
    %221 = vector.broadcast %cst_94 : f32 to vector<64x32xf32>
    %222 = arith.mulf %218, %221 : vector<64x32xf32>
    %223 = math.erf %222 : vector<64x32xf32>
    %cst_95 = arith.constant 1.000000e+00 : f32
    %224 = vector.broadcast %cst_95 : f32 to vector<64x32xf32>
    %225 = arith.addf %224, %223 : vector<64x32xf32>
    %226 = arith.mulf %220, %225 : vector<64x32xf32>
    %227 = arith.truncf %226 : vector<64x32xf32> to vector<64x32xbf16>
    %228 = arith.truncf %179 : vector<32x16xf32> to vector<32x16xbf16>
    %cst_96 = arith.constant dense<0.000000e+00> : vector<64x16xf32>
    %229 = tpu.matmul %227, %228, %cst_96 {dimension_numbers = #tpu.dot_dimension_numbers<[1], [0], [0], [1], [0, 0, 1, 1], [], []>} : vector<64x32xbf16>, vector<32x16xbf16>, vector<64x16xf32> -> vector<64x16xf32>
    %230 = vector.broadcast %182 : vector<1x16xf32> to vector<64x16xf32>
    %231 = arith.addf %229, %230 : vector<64x16xf32>
    %232 = arith.subf %231, %210 : vector<64x16xf32>
    %233 = arith.mulf %232, %232 : vector<64x16xf32>
    %cst_97 = arith.constant dense<0.000000e+00> : vector<64xf32>
    %234 = vector.multi_reduction <add>, %233, %cst_97 [1] : vector<64x16xf32> to vector<64xf32>
    %235 = vector.shape_cast %234 : vector<64xf32> to vector<64x1xf32>
    %236 = math.sqrt %235 : vector<64x1xf32>
    %cst_98 = arith.constant 9.99999971E-10 : f32
    %237 = vector.broadcast %cst_98 : f32 to vector<64x1xf32>
    %238 = arith.addf %236, %237 : vector<64x1xf32>
    %239 = vector.broadcast %238 : vector<64x1xf32> to vector<64x16xf32>
    %240 = arith.divf %232, %239 : vector<64x16xf32>
    %241 = arith.mulf %211, %240 : vector<64x16xf32>
    %242 = vector.broadcast %236 : vector<64x1xf32> to vector<64x16xf32>
    %243 = arith.cmpf ogt, %242, %211 : vector<64x16xf32>
    %244 = arith.select %243, %241, %232 : vector<64x16xi1>, vector<64x16xf32>
    %cst_99 = arith.constant dense<0.000000e+00> : vector<1xf32>
    %245 = vector.multi_reduction <add>, %214, %cst_99 [1] : vector<1x16xf32> to vector<1xf32>
    %246 = vector.shape_cast %245 : vector<1xf32> to vector<1x1xf32>
    %cst_100 = arith.constant 1.600000e+01 : f32
    %247 = vector.broadcast %cst_100 : f32 to vector<1x1xf32>
    %248 = arith.divf %246, %247 : vector<1x1xf32>
    %cst_101 = arith.constant dense<0.000000e+00> : vector<1xf32>
    %249 = vector.multi_reduction <add>, %213, %cst_101 [1] : vector<1x16xf32> to vector<1xf32>
    %250 = vector.shape_cast %249 : vector<1xf32> to vector<1x1xf32>
    %cst_102 = arith.constant 1.600000e+01 : f32
    %251 = vector.broadcast %cst_102 : f32 to vector<1x1xf32>
    %252 = arith.divf %250, %251 : vector<1x1xf32>
    %cst_103 = arith.constant dense<0.000000e+00> : vector<16xf32>
    %253 = vector.multi_reduction <add>, %244, %cst_103 [0] : vector<64x16xf32> to vector<16xf32>
    %254 = vector.shape_cast %253 : vector<16xf32> to vector<1x16xf32>
    %cst_104 = arith.constant 6.400000e+01 : f32
    %255 = vector.broadcast %cst_104 : f32 to vector<1x16xf32>
    %256 = arith.divf %254, %255 : vector<1x16xf32>
    %cst_105 = arith.constant dense<0.000000e+00> : vector<32xf32>
    %257 = vector.multi_reduction <add>, %226, %cst_105 [0] : vector<64x32xf32> to vector<32xf32>
    %258 = vector.shape_cast %257 : vector<32xf32> to vector<1x32xf32>
    %cst_106 = arith.constant 6.400000e+01 : f32
    %259 = vector.broadcast %cst_106 : f32 to vector<1x32xf32>
    %260 = arith.divf %258, %259 : vector<1x32xf32>
    %261 = vector.broadcast %248 : vector<1x1xf32> to vector<16x32xf32>
    %262 = arith.mulf %261, %170 : vector<16x32xf32>
    %263 = tpu.transpose %256, [1, 0] : vector<1x16xf32> -> vector<16x1xf32>
    %264 = vector.broadcast %263 : vector<16x1xf32> to vector<16x32xf32>
    %265 = vector.broadcast %260 : vector<1x32xf32> to vector<16x32xf32>
    %266 = arith.mulf %264, %265 : vector<16x32xf32>
    %267 = vector.broadcast %252 : vector<1x1xf32> to vector<16x32xf32>
    %268 = arith.mulf %267, %266 : vector<16x32xf32>
    %269 = arith.subf %262, %268 : vector<16x32xf32>
    %270 = vector.broadcast %248 : vector<1x1xf32> to vector<32x16xf32>
    %271 = arith.mulf %270, %179 : vector<32x16xf32>
    %272 = tpu.transpose %260, [1, 0] : vector<1x32xf32> -> vector<32x1xf32>
    %273 = vector.broadcast %272 : vector<32x1xf32> to vector<32x16xf32>
    %274 = vector.broadcast %256 : vector<1x16xf32> to vector<32x16xf32>
    %275 = arith.mulf %273, %274 : vector<32x16xf32>
    %276 = vector.broadcast %252 : vector<1x1xf32> to vector<32x16xf32>
    %277 = arith.mulf %276, %275 : vector<32x16xf32>
    %278 = arith.subf %271, %277 : vector<32x16xf32>
    %279 = arith.mulf %214, %182 : vector<1x16xf32>
    %280 = arith.mulf %213, %256 : vector<1x16xf32>
    %281 = arith.subf %279, %280 : vector<1x16xf32>
    %282 = vector.broadcast %256 : vector<1x16xf32> to vector<32x16xf32>
    %283 = arith.mulf %179, %282 : vector<32x16xf32>
    %cst_107 = arith.constant dense<0.000000e+00> : vector<32xf32>
    %284 = vector.multi_reduction <add>, %283, %cst_107 [1] : vector<32x16xf32> to vector<32xf32>
    %285 = vector.shape_cast %284 : vector<32xf32> to vector<32x1xf32>
    %286 = tpu.transpose %285, [1, 0] : vector<32x1xf32> -> vector<1x32xf32>
    %287 = arith.mulf %256, %256 : vector<1x16xf32>
    %cst_108 = arith.constant dense<0.000000e+00> : vector<1xf32>
    %288 = vector.multi_reduction <add>, %287, %cst_108 [1] : vector<1x16xf32> to vector<1xf32>
    %289 = vector.shape_cast %288 : vector<1xf32> to vector<1x1xf32>
    %290 = vector.broadcast %248 : vector<1x1xf32> to vector<1x32xf32>
    %291 = arith.mulf %290, %286 : vector<1x32xf32>
    %292 = arith.mulf %252, %289 : vector<1x1xf32>
    %293 = vector.broadcast %292 : vector<1x1xf32> to vector<1x32xf32>
    %294 = arith.mulf %293, %260 : vector<1x32xf32>
    %295 = arith.subf %291, %294 : vector<1x32xf32>
    %296 = vector.broadcast %248 : vector<1x1xf32> to vector<1x32xf32>
    %297 = arith.mulf %296, %201 : vector<1x32xf32>
    %298 = vector.broadcast %252 : vector<1x1xf32> to vector<1x32xf32>
    %299 = arith.mulf %298, %295 : vector<1x32xf32>
    %300 = arith.subf %297, %299 : vector<1x32xf32>
    %301 = arith.truncf %231 : vector<64x16xf32> to vector<64x16xbf16>
    %cst_109 = arith.constant dense<0.000000e+00> : vector<64x32xf32>
    %302 = tpu.matmul %301, %105, %cst_109 {dimension_numbers = #tpu.dot_dimension_numbers<[1], [0], [0], [1], [0, 0, 1, 1], [], []>} : vector<64x16xbf16>, vector<16x32xbf16>, vector<64x32xf32> -> vector<64x32xf32>
    %c64_110 = arith.constant 64 : index
    %c0_111 = arith.constant 0 : index
    %303 = vector.load %arg18[%c64_110, %c0_111] : memref<160x32xf32, #tpu.memory_space<vmem>>, vector<64x32xf32>
    %304 = arith.mulf %302, %303 : vector<64x32xf32>
    %c0_112 = arith.constant 0 : index
    %c64_113 = arith.constant 64 : index
    %c0_114 = arith.constant 0 : index
    %305 = vector.load %arg13[%c0_112, %c64_113, %c0_114] : memref<1x160x32xf32, #tpu.memory_space<vmem>>, vector<1x64x32xf32>
    %306 = vector.shape_cast %305 : vector<1x64x32xf32> to vector<64x32xf32>
    %307 = vector.shape_cast %304 : vector<64x32xf32> to vector<1x64x32xf32>
    tpu.vector_store %arg13[%c0_112, %c64_113, %c0_114], %307 {strides = array<i32>} : memref<1x160x32xf32, #tpu.memory_space<vmem>>, vector<1x64x32xf32>,
    %c128 = arith.constant 128 : index
    %c0_115 = arith.constant 0 : index
    %308 = vector.load %arg15[%c128, %c0_115] : memref<160x16xbf16, #tpu.memory_space<vmem>>, vector<32x16xbf16>
    %309 = arith.truncf %269 : vector<16x32xf32> to vector<16x32xbf16>
    %cst_116 = arith.constant dense<0.000000e+00> : vector<32x32xf32>
    %310 = tpu.matmul %308, %309, %cst_116 {dimension_numbers = #tpu.dot_dimension_numbers<[1], [0], [0], [1], [0, 0, 1, 1], [], []>} : vector<32x16xbf16>, vector<16x32xbf16>, vector<32x32xf32> -> vector<32x32xf32>
    %311 = vector.broadcast %300 : vector<1x32xf32> to vector<32x32xf32>
    %312 = arith.addf %310, %311 : vector<32x32xf32>
    %cst_117 = arith.constant 5.000000e-01 : f32
    %313 = vector.broadcast %cst_117 : f32 to vector<32x32xf32>
    %314 = arith.mulf %313, %312 : vector<32x32xf32>
    %cst_118 = arith.constant 0.707106769 : f32
    %315 = vector.broadcast %cst_118 : f32 to vector<32x32xf32>
    %316 = arith.mulf %312, %315 : vector<32x32xf32>
    %317 = math.erf %316 : vector<32x32xf32>
    %cst_119 = arith.constant 1.000000e+00 : f32
    %318 = vector.broadcast %cst_119 : f32 to vector<32x32xf32>
    %319 = arith.addf %318, %317 : vector<32x32xf32>
    %320 = arith.mulf %314, %319 : vector<32x32xf32>
    %321 = arith.truncf %320 : vector<32x32xf32> to vector<32x32xbf16>
    %322 = arith.truncf %278 : vector<32x16xf32> to vector<32x16xbf16>
    %cst_120 = arith.constant dense<0.000000e+00> : vector<32x16xf32>
    %323 = tpu.matmul %321, %322, %cst_120 {dimension_numbers = #tpu.dot_dimension_numbers<[1], [0], [0], [1], [0, 0, 1, 1], [], []>} : vector<32x32xbf16>, vector<32x16xbf16>, vector<32x16xf32> -> vector<32x16xf32>
    %324 = vector.broadcast %281 : vector<1x16xf32> to vector<32x16xf32>
    %325 = arith.addf %323, %324 : vector<32x16xf32>
    %326 = arith.truncf %325 : vector<32x16xf32> to vector<32x16xbf16>
    %cst_121 = arith.constant dense<0.000000e+00> : vector<32x32xf32>
    %327 = tpu.matmul %326, %105, %cst_121 {dimension_numbers = #tpu.dot_dimension_numbers<[1], [0], [0], [1], [0, 0, 1, 1], [], []>} : vector<32x16xbf16>, vector<16x32xbf16>, vector<32x32xf32> -> vector<32x32xf32>
    %c128_122 = arith.constant 128 : index
    %c0_123 = arith.constant 0 : index
    %328 = vector.load %arg18[%c128_122, %c0_123] : memref<160x32xf32, #tpu.memory_space<vmem>>, vector<32x32xf32>
    %329 = arith.mulf %327, %328 : vector<32x32xf32>
    %c0_124 = arith.constant 0 : index
    %c128_125 = arith.constant 128 : index
    %c0_126 = arith.constant 0 : index
    %330 = vector.load %arg13[%c0_124, %c128_125, %c0_126] : memref<1x160x32xf32, #tpu.memory_space<vmem>>, vector<1x32x32xf32>
    %331 = vector.shape_cast %330 : vector<1x32x32xf32> to vector<32x32xf32>
    %332 = vector.shape_cast %329 : vector<32x32xf32> to vector<1x32x32xf32>
    tpu.vector_store %arg13[%c0_124, %c128_125, %c0_126], %332 {strides = array<i32>} : memref<1x160x32xf32, #tpu.memory_space<vmem>>, vector<1x32x32xf32>,
    return
  }
  func.func @transform_0(%arg0: i32) -> (i32, i32, i32) {
    %c0_i32 = arith.constant 0 : i32
    %c0_i32_0 = arith.constant 0 : i32
    %c0_i32_1 = arith.constant 0 : i32
    return %arg0, %c0_i32, %c0_i32_0 : i32, i32, i32
  }
  func.func @transform_1(%arg0: i32) -> (i32, i32) {
    %c0_i32 = arith.constant 0 : i32
    %c0_i32_0 = arith.constant 0 : i32
    %c0_i32_1 = arith.constant 0 : i32
    return %c0_i32, %c0_i32_0 : i32, i32
  }
  func.func @transform_2(%arg0: i32) -> (i32, i32) {
    %c0_i32 = arith.constant 0 : i32
    %c0_i32_0 = arith.constant 0 : i32
    %c0_i32_1 = arith.constant 0 : i32
    return %c0_i32, %c0_i32_0 : i32, i32
  }
  func.func @transform_3(%arg0: i32) -> (i32, i32) {
    %c0_i32 = arith.constant 0 : i32
    %c0_i32_0 = arith.constant 0 : i32
    %c0_i32_1 = arith.constant 0 : i32
    return %c0_i32, %c0_i32_0 : i32, i32
  }
  func.func @transform_4(%arg0: i32) -> (i32, i32) {
    %c0_i32 = arith.constant 0 : i32
    %c0_i32_0 = arith.constant 0 : i32
    %c0_i32_1 = arith.constant 0 : i32
    return %c0_i32, %c0_i32_0 : i32, i32
  }
  func.func @transform_5(%arg0: i32) -> (i32, i32) {
    %c0_i32 = arith.constant 0 : i32
    %c0_i32_0 = arith.constant 0 : i32
    %c0_i32_1 = arith.constant 0 : i32
    return %c0_i32, %c0_i32_0 : i32, i32
  }
  func.func @transform_6(%arg0: i32) -> (i32, i32) {
    %c0_i32 = arith.constant 0 : i32
    %c0_i32_0 = arith.constant 0 : i32
    %c0_i32_1 = arith.constant 0 : i32
    return %c0_i32, %c0_i32_0 : i32, i32
  }
  func.func @transform_7(%arg0: i32) -> (i32, i32) {
    %c0_i32 = arith.constant 0 : i32
    %c0_i32_0 = arith.constant 0 : i32
    %c0_i32_1 = arith.constant 0 : i32
    return %c0_i32, %c0_i32_0 : i32, i32
  }
  func.func @transform_8(%arg0: i32) -> (i32, i32) {
    %c0_i32 = arith.constant 0 : i32
    %c0_i32_0 = arith.constant 0 : i32
    %c0_i32_1 = arith.constant 0 : i32
    return %c0_i32, %c0_i32_0 : i32, i32
  }
  func.func @transform_9(%arg0: i32) -> (i32, i32) {
    %c0_i32 = arith.constant 0 : i32
    %c0_i32_0 = arith.constant 0 : i32
    %c0_i32_1 = arith.constant 0 : i32
    return %c0_i32, %c0_i32_0 : i32, i32
  }
  func.func @transform_10(%arg0: i32) -> (i32, i32) {
    %c0_i32 = arith.constant 0 : i32
    %c0_i32_0 = arith.constant 0 : i32
    %c0_i32_1 = arith.constant 0 : i32
    return %c0_i32, %c0_i32_0 : i32, i32
  }
  func.func @transform_11(%arg0: i32) -> (i32, i32) {
    %c0_i32 = arith.constant 0 : i32
    %c0_i32_0 = arith.constant 0 : i32
    %c0_i32_1 = arith.constant 0 : i32
    return %c0_i32, %c0_i32_0 : i32, i32
  }
  func.func @transform_12(%arg0: i32) -> (i32, i32, i32) {
    %c0_i32 = arith.constant 0 : i32
    %c0_i32_0 = arith.constant 0 : i32
    %c0_i32_1 = arith.constant 0 : i32
    return %arg0, %c0_i32, %c0_i32_0 : i32, i32, i32
  }
}

</mosaic_0001>

<llo_original>
// kernel: tpu_custom_call.1
$region0: #{tpu_custom_call.1}
  #allocation0 [shape = 'u32[]', space=smem, size = 0x4, offset = 0x4, fixed_abs, tag = 'smem constant byte address 0x4 - core index']
  #allocation1 [shape = 'u32[144,128]{1,0:T(1,128)}', space=vmem, size = 0x12000, scoped, tag = 'internal scratch']
  #allocation2 [shape = 'f32[168,32]{1,0:T(8,128)}', space=vmem, size = 0x15000, scoped, tag = 'scratch operand']
  #allocation3 [shape = 'bf16[160,16]{1,0:T(8,128)(2,1)}', space=vmem, size = 0xa000, scoped, tag = 'scratch operand']
  #allocation4 [shape = 'f32[160,16]{1,0:T(8,128)}', space=vmem, size = 0x14000, scoped, tag = 'scratch operand']
  #allocation5 [shape = 'f32[160,16]{1,0:T(8,128)}', space=vmem, size = 0x14000, scoped, tag = 'scratch operand']
  #allocation6 [shape = 'f32[160,32]{1,0:T(8,128)}', space=vmem, size = 0x14000, scoped, tag = 'scratch operand']
  #allocation7 [shape = 'f32[3,32]{1,0:T(4,128)}', space=vmem, size = 0x800, scoped, tag = 'scratch operand']
  %s0 = inlined_call_operand.vmem [shape: f32[2,160,32], index: 0, kind: input, shape index: {}]
  %s1 = inlined_call_operand.vmem [shape: f32[32,128], index: 1, kind: input, shape index: {}]
  %s2 = inlined_call_operand.vmem [shape: f32[32,32], index: 2, kind: input, shape index: {}]
  %s3 = inlined_call_operand.vmem [shape: f32[4,32], index: 3, kind: input, shape index: {}]
  %s4 = inlined_call_operand.vmem [shape: f32[1,32], index: 4, kind: input, shape index: {}]
  %s5 = inlined_call_operand.vmem [shape: f32[1,16], index: 5, kind: input, shape index: {}]
  %s6 = inlined_call_operand.vmem [shape: f32[1,16], index: 6, kind: input, shape index: {}]
  %s7 = inlined_call_operand.vmem [shape: f32[16,32], index: 7, kind: input, shape index: {}]
  %s8 = inlined_call_operand.vmem [shape: f32[16,32], index: 8, kind: input, shape index: {}]
  %s9 = inlined_call_operand.vmem [shape: f32[1,32], index: 9, kind: input, shape index: {}]
  %s10 = inlined_call_operand.vmem [shape: f32[32,16], index: 10, kind: input, shape index: {}]
  %s11 = inlined_call_operand.vmem [shape: f32[1,16], index: 11, kind: input, shape index: {}]
  %s12 = inlined_call_operand.vmem [shape: f32[2,160,32], index: 12, kind: output, shape index: {}]
  %s13 = sld [smem:[#allocation0]]
  $region81: #{tpu_custom_call.1} parent=0
    _
  %s15 = ssub.s32 1, %s13
  %s16 = scalar_select 0, %s15, %s13
  loop: start=0, step=1, limit=4
  $region2: #{tpu_custom_call.1} parent=0 // loop_pre_header
    _
  $region3: #{tpu_custom_call.1} parent=0 // loop_header
    %s18 = sphi 0, %s22
    %p19 = scmp.ge.s32.totalorder %s18, 4
    %s28 = sphi 0, %s30
    %s31 = sphi 0, %s28
    %s32 = sphi 0, %s31
    %s48 = sphi 0, %s32
    %s52 = sphi 0, %s52
    %s54 = sphi 0, %s52
    %s55 = sphi 0, %s54
    %s69 = sphi 0, %s55
    %s73 = sphi 0, %s73
    %s75 = sphi 0, %s73
    %s76 = sphi 0, %s75
    %s90 = sphi 0, %s76
    %s94 = sphi 0, %s94
    %s96 = sphi 0, %s94
    %s97 = sphi 0, %s96
    %s111 = sphi 0, %s97
    %s115 = sphi 0, %s115
    %s117 = sphi 0, %s115
    %s118 = sphi 0, %s117
    %s132 = sphi 0, %s118
    %s136 = sphi 0, %s136
    %s138 = sphi 0, %s136
    %s139 = sphi 0, %s138
    %s153 = sphi 0, %s139
    %s157 = sphi 0, %s157
    %s159 = sphi 0, %s157
    %s160 = sphi 0, %s159
    %s174 = sphi 0, %s160
    %s178 = sphi 0, %s178
    %s180 = sphi 0, %s178
    %s181 = sphi 0, %s180
    %s195 = sphi 0, %s181
    %s199 = sphi 0, %s199
    %s201 = sphi 0, %s199
    %s202 = sphi 0, %s201
    %s216 = sphi 0, %s202
    %s220 = sphi 0, %s220
    %s222 = sphi 0, %s220
    %s223 = sphi 0, %s222
    %s237 = sphi 0, %s223
    %s241 = sphi 0, %s241
    %s243 = sphi 0, %s241
    %s244 = sphi 0, %s243
    %s258 = sphi 0, %s244
    %s262 = sphi 0, %s262
    %s264 = sphi 0, %s262
    %s265 = sphi 0, %s264
    %s279 = sphi 0, %s265
    %s285 = sphi 0, %s287
    %s288 = sphi 0, %s285
    %s289 = sphi 0, %s288
    %s305 = sphi 0, %s289
  $region4: #{tpu_custom_call.1} parent=0 // loop_header_branch
    %21 = sbr.rel (%p19) target = $region8
  $region5: #{tpu_custom_call.1} parent=0 // loop_body
    %s23 = ssub.s32 %s18, 1
    %s24 = ssub.s32 %s18, 2
    %s25 = sadd.s32 %s18, 1
    %s26 = ssub.s32 %s18, %s25
    %p27 = scmp.eq.s32.totalorder %s26, 0
    %s29 = sadd.s32 %s28, 1
    %s30 = scalar_select %p27, %s28, %s29
    %p33 = pneg %p27
    %p34 = scmp.eq.s32.totalorder %s18, 1
    %p35 = por %p33, %p34
    %p36 = scmp.ne.s32.totalorder %s28, %s31
    %p37 = scmp.eq.s32.totalorder %s18, 0
    %p38 = por %p36, %p37
    %p39 = scmp.ne.s32.totalorder %s28, %s31
    %p40 = scmp.eq.s32.totalorder %s23, 1
    %p41 = por %p39, %p40
    %p42 = scmp.ne.s32.totalorder %s31, %s32
    %p43 = scmp.eq.s32.totalorder %s23, 0
    %p44 = por %p42, %p43
    %p45 = scmp.ne.s32.totalorder %s31, %s32
    %p46 = scmp.eq.s32.totalorder %s24, 1
    %p47 = por %p45, %p46
    %p49 = scmp.ne.s32.totalorder %s32, %s48
    %p50 = scmp.eq.s32.totalorder %s24, 0
    %p51 = por %p49, %p50
    %s53 = sadd.s32 %s52, 1
    %p56 = scmp.eq.s32.totalorder %s18, 1
    %p57 = scmp.ne.s32.totalorder %s52, %s54
    %p58 = scmp.eq.s32.totalorder %s18, 0
    %p59 = por %p57, %p58
    %p60 = scmp.ne.s32.totalorder %s52, %s54
    %p61 = scmp.eq.s32.totalorder %s23, 1
    %p62 = por %p60, %p61
    %p63 = scmp.ne.s32.totalorder %s54, %s55
    %p64 = scmp.eq.s32.totalorder %s23, 0
    %p65 = por %p63, %p64
    %p66 = scmp.ne.s32.totalorder %s54, %s55
    %p67 = scmp.eq.s32.totalorder %s24, 1
    %p68 = por %p66, %p67
    %p70 = scmp.ne.s32.totalorder %s55, %s69
    %p71 = scmp.eq.s32.totalorder %s24, 0
    %p72 = por %p70, %p71
    %s74 = sadd.s32 %s73, 1
    %p77 = scmp.eq.s32.totalorder %s18, 1
    %p78 = scmp.ne.s32.totalorder %s73, %s75
    %p79 = scmp.eq.s32.totalorder %s18, 0
    %p80 = por %p78, %p79
    %p81 = scmp.ne.s32.totalorder %s73, %s75
    %p82 = scmp.eq.s32.totalorder %s23, 1
    %p83 = por %p81, %p82
    %p84 = scmp.ne.s32.totalorder %s75, %s76
    %p85 = scmp.eq.s32.totalorder %s23, 0
    %p86 = por %p84, %p85
    %p87 = scmp.ne.s32.totalorder %s75, %s76
    %p88 = scmp.eq.s32.totalorder %s24, 1
    %p89 = por %p87, %p88
    %p91 = scmp.ne.s32.totalorder %s76, %s90
    %p92 = scmp.eq.s32.totalorder %s24, 0
    %p93 = por %p91, %p92
    %s95 = sadd.s32 %s94, 1
    %p98 = scmp.eq.s32.totalorder %s18, 1
    %p99 = scmp.ne.s32.totalorder %s94, %s96
    %p100 = scmp.eq.s32.totalorder %s18, 0
    %p101 = por %p99, %p100
    %p102 = scmp.ne.s32.totalorder %s94, %s96
    %p103 = scmp.eq.s32.totalorder %s23, 1
    %p104 = por %p102, %p103
    %p105 = scmp.ne.s32.totalorder %s96, %s97
    %p106 = scmp.eq.s32.totalorder %s23, 0
    %p107 = por %p105, %p106
    %p108 = scmp.ne.s32.totalorder %s96, %s97
    %p109 = scmp.eq.s32.totalorder %s24, 1
    %p110 = por %p108, %p109
    %p112 = scmp.ne.s32.totalorder %s97, %s111
    %p113 = scmp.eq.s32.totalorder %s24, 0
    %p114 = por %p112, %p113
    %s116 = sadd.s32 %s115, 1
    %p119 = scmp.eq.s32.totalorder %s18, 1
    %p120 = scmp.ne.s32.totalorder %s115, %s117
    %p121 = scmp.eq.s32.totalorder %s18, 0
    %p122 = por %p120, %p121
    %p123 = scmp.ne.s32.totalorder %s115, %s117
    %p124 = scmp.eq.s32.totalorder %s23, 1
    %p125 = por %p123, %p124
    %p126 = scmp.ne.s32.totalorder %s117, %s118
    %p127 = scmp.eq.s32.totalorder %s23, 0
    %p128 = por %p126, %p127
    %p129 = scmp.ne.s32.totalorder %s117, %s118
    %p130 = scmp.eq.s32.totalorder %s24, 1
    %p131 = por %p129, %p130
    %p133 = scmp.ne.s32.totalorder %s118, %s132
    %p134 = scmp.eq.s32.totalorder %s24, 0
    %p135 = por %p133, %p134
    %s137 = sadd.s32 %s136, 1
    %p140 = scmp.eq.s32.totalorder %s18, 1
    %p141 = scmp.ne.s32.totalorder %s136, %s138
    %p142 = scmp.eq.s32.totalorder %s18, 0
    %p143 = por %p141, %p142
    %p144 = scmp.ne.s32.totalorder %s136, %s138
    %p145 = scmp.eq.s32.totalorder %s23, 1
    %p146 = por %p144, %p145
    %p147 = scmp.ne.s32.totalorder %s138, %s139
    %p148 = scmp.eq.s32.totalorder %s23, 0
    %p149 = por %p147, %p148
    %p150 = scmp.ne.s32.totalorder %s138, %s139
    %p151 = scmp.eq.s32.totalorder %s24, 1
    %p152 = por %p150, %p151
    %p154 = scmp.ne.s32.totalorder %s139, %s153
    %p155 = scmp.eq.s32.totalorder %s24, 0
    %p156 = por %p154, %p155
    %s158 = sadd.s32 %s157, 1
    %p161 = scmp.eq.s32.totalorder %s18, 1
    %p162 = scmp.ne.s32.totalorder %s157, %s159
    %p163 = scmp.eq.s32.totalorder %s18, 0
    %p164 = por %p162, %p163
    %p165 = scmp.ne.s32.totalorder %s157, %s159
    %p166 = scmp.eq.s32.totalorder %s23, 1
    %p167 = por %p165, %p166
    %p168 = scmp.ne.s32.totalorder %s159, %s160
    %p169 = scmp.eq.s32.totalorder %s23, 0
    %p170 = por %p168, %p169
    %p171 = scmp.ne.s32.totalorder %s159, %s160
    %p172 = scmp.eq.s32.totalorder %s24, 1
    %p173 = por %p171, %p172
    %p175 = scmp.ne.s32.totalorder %s160, %s174
    %p176 = scmp.eq.s32.totalorder %s24, 0
    %p177 = por %p175, %p176
    %s179 = sadd.s32 %s178, 1
    %p182 = scmp.eq.s32.totalorder %s18, 1
    %p183 = scmp.ne.s32.totalorder %s178, %s180
    %p184 = scmp.eq.s32.totalorder %s18, 0
    %p185 = por %p183, %p184
    %p186 = scmp.ne.s32.totalorder %s178, %s180
    %p187 = scmp.eq.s32.totalorder %s23, 1
    %p188 = por %p186, %p187
    %p189 = scmp.ne.s32.totalorder %s180, %s181
    %p190 = scmp.eq.s32.totalorder %s23, 0
    %p191 = por %p189, %p190
    %p192 = scmp.ne.s32.totalorder %s180, %s181
    %p193 = scmp.eq.s32.totalorder %s24, 1
    %p194 = por %p192, %p193
    %p196 = scmp.ne.s32.totalorder %s181, %s195
    %p197 = scmp.eq.s32.totalorder %s24, 0
    %p198 = por %p196, %p197
    %s200 = sadd.s32 %s199, 1
    %p203 = scmp.eq.s32.totalorder %s18, 1
    %p204 = scmp.ne.s32.totalorder %s199, %s201
    %p205 = scmp.eq.s32.totalorder %s18, 0
    %p206 = por %p204, %p205
    %p207 = scmp.ne.s32.totalorder %s199, %s201
    %p208 = scmp.eq.s32.totalorder %s23, 1
    %p209 = por %p207, %p208
    %p210 = scmp.ne.s32.totalorder %s201, %s202
    %p211 = scmp.eq.s32.totalorder %s23, 0
    %p212 = por %p210, %p211
    %p213 = scmp.ne.s32.totalorder %s201, %s202
    %p214 = scmp.eq.s32.totalorder %s24, 1
    %p215 = por %p213, %p214
    %p217 = scmp.ne.s32.totalorder %s202, %s216
    %p218 = scmp.eq.s32.totalorder %s24, 0
    %p219 = por %p217, %p218
    %s221 = sadd.s32 %s220, 1
    %p224 = scmp.eq.s32.totalorder %s18, 1
    %p225 = scmp.ne.s32.totalorder %s220, %s222
    %p226 = scmp.eq.s32.totalorder %s18, 0
    %p227 = por %p225, %p226
    %p228 = scmp.ne.s32.totalorder %s220, %s222
    %p229 = scmp.eq.s32.totalorder %s23, 1
    %p230 = por %p228, %p229
    %p231 = scmp.ne.s32.totalorder %s222, %s223
    %p232 = scmp.eq.s32.totalorder %s23, 0
    %p233 = por %p231, %p232
    %p234 = scmp.ne.s32.totalorder %s222, %s223
    %p235 = scmp.eq.s32.totalorder %s24, 1
    %p236 = por %p234, %p235
    %p238 = scmp.ne.s32.totalorder %s223, %s237
    %p239 = scmp.eq.s32.totalorder %s24, 0
    %p240 = por %p238, %p239
    %s242 = sadd.s32 %s241, 1
    %p245 = scmp.eq.s32.totalorder %s18, 1
    %p246 = scmp.ne.s32.totalorder %s241, %s243
    %p247 = scmp.eq.s32.totalorder %s18, 0
    %p248 = por %p246, %p247
    %p249 = scmp.ne.s32.totalorder %s241, %s243
    %p250 = scmp.eq.s32.totalorder %s23, 1
    %p251 = por %p249, %p250
    %p252 = scmp.ne.s32.totalorder %s243, %s244
    %p253 = scmp.eq.s32.totalorder %s23, 0
    %p254 = por %p252, %p253
    %p255 = scmp.ne.s32.totalorder %s243, %s244
    %p256 = scmp.eq.s32.totalorder %s24, 1
    %p257 = por %p255, %p256
    %p259 = scmp.ne.s32.totalorder %s244, %s258
    %p260 = scmp.eq.s32.totalorder %s24, 0
    %p261 = por %p259, %p260
    %s263 = sadd.s32 %s262, 1
    %p266 = scmp.eq.s32.totalorder %s18, 1
    %p267 = scmp.ne.s32.totalorder %s262, %s264
    %p268 = scmp.eq.s32.totalorder %s18, 0
    %p269 = por %p267, %p268
    %p270 = scmp.ne.s32.totalorder %s262, %s264
    %p271 = scmp.eq.s32.totalorder %s23, 1
    %p272 = por %p270, %p271
    %p273 = scmp.ne.s32.totalorder %s264, %s265
    %p274 = scmp.eq.s32.totalorder %s23, 0
    %p275 = por %p273, %p274
    %p276 = scmp.ne.s32.totalorder %s264, %s265
    %p277 = scmp.eq.s32.totalorder %s24, 1
    %p278 = por %p276, %p277
    %p280 = scmp.ne.s32.totalorder %s265, %s279
    %p281 = scmp.eq.s32.totalorder %s24, 0
    %p282 = por %p280, %p281
    %s283 = ssub.s32 %s18, %s25
    %p284 = scmp.eq.s32.totalorder %s283, 0
    %s286 = sadd.s32 %s285, 1
    %s287 = scalar_select %p284, %s285, %s286
    %p290 = pneg %p284
    %p291 = scmp.eq.s32.totalorder %s18, 1
    %p292 = por %p290, %p291
    %p293 = scmp.ne.s32.totalorder %s285, %s288
    %p294 = scmp.eq.s32.totalorder %s18, 0
    %p295 = por %p293, %p294
    %p296 = scmp.ne.s32.totalorder %s285, %s288
    %p297 = scmp.eq.s32.totalorder %s23, 1
    %p298 = por %p296, %p297
    %p299 = scmp.ne.s32.totalorder %s288, %s289
    %p300 = scmp.eq.s32.totalorder %s23, 0
    %p301 = por %p299, %p300
    %p302 = scmp.ne.s32.totalorder %s288, %s289
    %p303 = scmp.eq.s32.totalorder %s24, 1
    %p304 = por %p302, %p303
    %p306 = scmp.ne.s32.totalorder %s289, %s305
    %p307 = scmp.eq.s32.totalorder %s24, 0
    %p308 = por %p306, %p307
    %p309 = scmp.le.s32.totalorder 1, %s18
    %p310 = scmp.lt.s32.totalorder %s18, 3
    %p311 = pnand %p309, %p310
    %p312 = pneg %p311
    // Predicated region
    $region9: #{tpu_custom_call.1} parent=5 // pred_check
      _
    $region10: #{tpu_custom_call.1} parent=5 // pred_check_branch
      %314 = sbr.rel (%p311) target = $region12
    $region11: #{tpu_custom_call.1} parent=5 // pred_region
      %s315 = ssub.s32 %s18, 1
      // Predicated region
      $region13: #{tpu_custom_call.1} parent=11 // pred_check
        %p316 = pneg %p65
      $region14: #{tpu_custom_call.1} parent=11 // pred_check_branch
        %318 = sbr.rel (%p316) target = $region16
      $region15: #{tpu_custom_call.1} parent=11 // pred_region
        _
      $region16: #{tpu_custom_call.1} parent=11 // pred_fallthru
        _
      // Predicated region
      $region17: #{tpu_custom_call.1} parent=11 // pred_check
        %p319 = pneg %p86
      $region18: #{tpu_custom_call.1} parent=11 // pred_check_branch
        %321 = sbr.rel (%p319) target = $region20
      $region19: #{tpu_custom_call.1} parent=11 // pred_region
        _
      $region20: #{tpu_custom_call.1} parent=11 // pred_fallthru
        _
      // Predicated region
      $region21: #{tpu_custom_call.1} parent=11 // pred_check
        %p322 = pneg %p107
      $region22: #{tpu_custom_call.1} parent=11 // pred_check_branch
        %324 = sbr.rel (%p322) target = $region24
      $region23: #{tpu_custom_call.1} parent=11 // pred_region
        _
      $region24: #{tpu_custom_call.1} parent=11 // pred_fallthru
        _
      // Predicated region
      $region25: #{tpu_custom_call.1} parent=11 // pred_check
        %p325 = pneg %p128
      $region26: #{tpu_custom_call.1} parent=11 // pred_check_branch
        %327 = sbr.rel (%p325) target = $region28
      $region27: #{tpu_custom_call.1} parent=11 // pred_region
        _
      $region28: #{tpu_custom_call.1} parent=11 // pred_fallthru
        _
      // Predicated region
      $region29: #{tpu_custom_call.1} parent=11 // pred_check
        %p328 = pneg %p149
      $region30: #{tpu_custom_call.1} parent=11 // pred_check_branch
        %330 = sbr.rel (%p328) target = $region32
      $region31: #{tpu_custom_call.1} parent=11 // pred_region
        _
      $region32: #{tpu_custom_call.1} parent=11 // pred_fallthru
        _
      // Predicated region
      $region33: #{tpu_custom_call.1} parent=11 // pred_check
        %p331 = pneg %p170
      $region34: #{tpu_custom_call.1} parent=11 // pred_check_branch
        %333 = sbr.rel (%p331) target = $region36
      $region35: #{tpu_custom_call.1} parent=11 // pred_region
        _
      $region36: #{tpu_custom_call.1} parent=11 // pred_fallthru
        _
      // Predicated region
      $region37: #{tpu_custom_call.1} parent=11 // pred_check
        %p334 = pneg %p191
      $region38: #{tpu_custom_call.1} parent=11 // pred_check_branch
        %336 = sbr.rel (%p334) target = $region40
      $region39: #{tpu_custom_call.1} parent=11 // pred_region
        _
      $region40: #{tpu_custom_call.1} parent=11 // pred_fallthru
        _
      // Predicated region
      $region41: #{tpu_custom_call.1} parent=11 // pred_check
        %p337 = pneg %p212
      $region42: #{tpu_custom_call.1} parent=11 // pred_check_branch
        %339 = sbr.rel (%p337) target = $region44
      $region43: #{tpu_custom_call.1} parent=11 // pred_region
        _
      $region44: #{tpu_custom_call.1} parent=11 // pred_fallthru
        _
      // Predicated region
      $region45: #{tpu_custom_call.1} parent=11 // pred_check
        %p340 = pneg %p233
      $region46: #{tpu_custom_call.1} parent=11 // pred_check_branch
        %342 = sbr.rel (%p340) target = $region48
      $region47: #{tpu_custom_call.1} parent=11 // pred_region
        _
      $region48: #{tpu_custom_call.1} parent=11 // pred_fallthru
        _
      // Predicated region
      $region49: #{tpu_custom_call.1} parent=11 // pred_check
        %p343 = pneg %p254
      $region50: #{tpu_custom_call.1} parent=11 // pred_check_branch
        %345 = sbr.rel (%p343) target = $region52
      $region51: #{tpu_custom_call.1} parent=11 // pred_region
        _
      $region52: #{tpu_custom_call.1} parent=11 // pred_fallthru
        _
      // Predicated region
      $region53: #{tpu_custom_call.1} parent=11 // pred_check
        %p346 = pneg %p275
      $region54: #{tpu_custom_call.1} parent=11 // pred_check_branch
        %348 = sbr.rel (%p346) target = $region56
      $region55: #{tpu_custom_call.1} parent=11 // pred_region
        _
      $region56: #{tpu_custom_call.1} parent=11 // pred_fallthru
        _
    $region12: #{tpu_custom_call.1} parent=5 // pred_fallthru
      _
    %p349 = scmp.lt.s32.totalorder %s18, 2
    // Predicated region
    $region57: #{tpu_custom_call.1} parent=5 // pred_check
      %p350 = pneg %p349
    $region58: #{tpu_custom_call.1} parent=5 // pred_check_branch
      %352 = sbr.rel (%p350) target = $region60
    $region59: #{tpu_custom_call.1} parent=5 // pred_region
      // Predicated region
      $region61: #{tpu_custom_call.1} parent=59 // pred_check
        %p353 = pneg %p38
      $region62: #{tpu_custom_call.1} parent=59 // pred_check_branch
        %355 = sbr.rel (%p353) target = $region64
      $region63: #{tpu_custom_call.1} parent=59 // pred_region
        %p356 = scmp.lt.s32.totalorder %s18, 1
        %s357 = scalar_select %p356, %s18, 1
        %s358 = smul.addr %s357, 20
        %s359 = smul.addr %s358, 8
        %s360 = scalar_lea.vmem %s0, %s359
      $region64: #{tpu_custom_call.1} parent=59 // pred_fallthru
        _
    $region60: #{tpu_custom_call.1} parent=5 // pred_fallthru
      _
    %p361 = scmp.le.s32.totalorder 1, %s18
    %p362 = scmp.lt.s32.totalorder %s18, 3
    %p363 = pnand %p361, %p362
    %p364 = pneg %p363
    // Predicated region
    $region65: #{tpu_custom_call.1} parent=5 // pred_check
      _
    $region66: #{tpu_custom_call.1} parent=5 // pred_check_branch
      %366 = sbr.rel (%p363) target = $region68
    $region67: #{tpu_custom_call.1} parent=5 // pred_region
      %s367 = ssub.s32 %s18, 1
      %p368 = scmp.lt.s32.totalorder %s23, 1
      %s369 = scalar_select %p368, %s23, 1
      %s370 = smul.addr %s369, 20
      %s371 = smul.addr %s370, 8
      %s372 = scalar_lea.vmem %s0, %s371
      %p373 = pneg %p44
      %p374 = pneg %p41
      %p375 = pneg %p65
      %p376 = pneg %p62
      %p377 = pneg %p86
      %p378 = pneg %p83
      %p379 = pneg %p107
      %p380 = pneg %p104
      %p381 = pneg %p128
      %p382 = pneg %p125
      %p383 = pneg %p149
      %p384 = pneg %p146
      %p385 = pneg %p170
      %p386 = pneg %p167
      %p387 = pneg %p191
      %p388 = pneg %p188
      %p389 = pneg %p212
      %p390 = pneg %p209
      %p391 = pneg %p233
      %p392 = pneg %p230
      %p393 = pneg %p254
      %p394 = pneg %p251
      %p395 = pneg %p275
      %p396 = pneg %p272
      %p397 = pneg %p301
      %p398 = pneg %p298
      %p399 = scmp.lt.s32.totalorder %s23, 1
      %s400 = scalar_select %p399, %s23, 1
      %s401 = smul.addr %s400, 20
      %s402 = smul.addr %s401, 8
      %s403 = scalar_lea.vmem %s12, %s402
      %p404 = scmp.lt.s32.totalorder %s23, 1
      %s405 = scalar_select %p404, %s23, 1
      %s406 = smul.addr %s405, 20
      %s407 = smul.addr %s406, 8
      %s408 = scalar_lea.vmem %s0, %s407
      %p409 = scmp.lt.s32.totalorder %s23, 1
      %s410 = scalar_select %p409, %s23, 1
      %s411 = smul.addr %s410, 20
      %s412 = smul.addr %s411, 8
      %s413 = scalar_lea.vmem %s12, %s412
      %v415 = vld [vmem:[%s408] sm:$0xff]
      %v416 = vld [vmem:[%s408 + $0x8] sm:$0xff]
      %v417 = vld [vmem:[%s408 + $0x10] sm:$0xff]
      %v418 = vld [vmem:[%s408 + $0x18] sm:$0xff]
      %v419 = vld [vmem:[%s408 + $0x20] sm:$0xff]
      %v420 = vld [vmem:[%s408 + $0x28] sm:$0xff]
      %v421 = vld [vmem:[%s408 + $0x30] sm:$0xff]
      %v422 = vld [vmem:[%s408 + $0x38] sm:$0xff]
      %v423 = vld [vmem:[%s408 + $0x40] sm:$0xff]
      %v424 = vld [vmem:[%s408 + $0x48] sm:$0xff]
      %v425 = vld [vmem:[%s408 + $0x50] sm:$0xff]
      %v426 = vld [vmem:[%s408 + $0x58] sm:$0xff]
      %v427 = vld [vmem:[%s408 + $0x60] sm:$0xff]
      %v428 = vld [vmem:[%s408 + $0x68] sm:$0xff]
      %v429 = vld [vmem:[%s408 + $0x70] sm:$0xff]
      %v430 = vld [vmem:[%s408 + $0x78] sm:$0xff]
      %v431 = vld [vmem:[%s408 + $0x80] sm:$0xff]
      %v432 = vld [vmem:[%s408 + $0x88] sm:$0xff]
      %v433 = vld [vmem:[%s408 + $0x90] sm:$0xff]
      %v434 = vld [vmem:[%s408 + $0x98] sm:$0xff]
      %v435 = vld [vmem:[%s1] sm:$0xff]
      %v436 = vld [vmem:[%s1 + $0x8] sm:$0xff]
      %v437 = vld [vmem:[%s1 + $0x10] sm:$0xff]
      %v438 = vld [vmem:[%s1 + $0x18] sm:$0xff]
      %v439 = vpack.c.bf16 %v416, %v415
      %v440 = vpack.c.bf16 %v418, %v417
      %v441 = vpack.c.bf16 %v420, %v419
      %v442 = vpack.c.bf16 %v422, %v421
      %v443 = vpack.c.bf16 %v424, %v423
      %v444 = vpack.c.bf16 %v426, %v425
      %v445 = vpack.c.bf16 %v428, %v427
      %v446 = vpack.c.bf16 %v430, %v429
      %v447 = vpack.c.bf16 %v432, %v431
      %v448 = vpack.c.bf16 %v434, %v433
      %v449 = vpack.c.bf16 %v436, %v435
      %v450 = vpack.c.bf16 %v438, %v437
      %vm451 = vcmask 261120
      %v453 = vsel %vm451, %v439, 0
      %v456 = vsel %vm451, %v440, 0
      %v459 = vsel %vm451, %v441, 0
      %v462 = vsel %vm451, %v442, 0
      %v465 = vsel %vm451, %v443, 0
      %v468 = vsel %vm451, %v444, 0
      %v471 = vsel %vm451, %v445, 0
      %v474 = vsel %vm451, %v446, 0
      %v477 = vsel %vm451, %v447, 0
      %v480 = vsel %vm451, %v448, 0
      %482 = vmatprep.subr.bf16.mxu0 0
      %483 = vmatpush1.bf16.msra.mxu0 0
      %484 = vmatprep.subr.bf16.mxu0 0
      %485 = vmatpush1.bf16.msra.mxu0 0
      %486 = vmatprep.subr.bf16.mxu0 0
      %487 = vmatpush1.bf16.msra.mxu0 0
      %488 = vmatprep.subr.bf16.mxu0 0
      %489 = vmatpush1.bf16.msra.mxu0 0
      %490 = vmatprep.subr.bf16.mxu0 0
      %491 = vmatpush1.bf16.msra.mxu0 0
      %492 = vmatprep.subr.bf16.mxu0 0
      %493 = vmatpush1.bf16.msra.mxu0 0
      %494 = vmatprep.subr.bf16.mxu0 0
      %495 = vmatpush1.bf16.msra.mxu0 %v450
      %496 = vmatprep.subr.bf16.mxu0 0
      %497 = vmatpush1.bf16.msra.mxu0 %v449
      %498 = vmatprep.subr.bf16.mxu0 0
      %499 = vmatpush2.bf16.msra.mxu0 0
      %500 = vmatprep.subr.bf16.mxu0 0
      %501 = vmatpush2.bf16.msra.mxu0 0
      %502 = vmatprep.subr.bf16.mxu0 0
      %503 = vmatpush2.bf16.msra.mxu0 0
      %504 = vmatprep.subr.bf16.mxu0 0
      %505 = vmatpush2.bf16.msra.mxu0 0
      %506 = vmatprep.subr.bf16.mxu0 0
      %507 = vmatpush2.bf16.msra.mxu0 0
      %508 = vmatprep.subr.bf16.mxu0 0
      %509 = vmatpush2.bf16.msra.mxu0 0
      %510 = vmatprep.subr.bf16.mxu0 0
      %511 = vmatpush2.bf16.msra.mxu0 0
      %512 = vmatprep.subr.bf16.mxu0 0
      %513 = vmatpush2.bf16.msra.mxu0 0
      %514 = vmatprep.mubr.bf16.mxu0 0
      %515 = vmatmul.mubr.bf16.gmra.mxu0 %v453
      %v516 = vpop.f32.mrf.mxu0
      %v517 = vadd.f32 0.0, %v516
      %v518 = vpop.f32.mrf.mxu0
      %v519 = vpop.f32.mrf.mxu0
      %v520 = vadd.f32 0.0, %v519
      %v521 = vpop.f32.mrf.mxu0
      %522 = vmatprep.mubr.bf16.mxu0 0
      %523 = vmatmul.mubr.bf16.gmra.mxu0 %v456
      %v524 = vpop.f32.mrf.mxu0
      %v525 = vadd.f32 0.0, %v524
      %v526 = vpop.f32.mrf.mxu0
      %v527 = vpop.f32.mrf.mxu0
      %v528 = vadd.f32 0.0, %v527
      %v529 = vpop.f32.mrf.mxu0
      %530 = vmatprep.mubr.bf16.mxu0 0
      %531 = vmatmul.mubr.bf16.gmra.mxu0 %v459
      %v532 = vpop.f32.mrf.mxu0
      %v533 = vadd.f32 0.0, %v532
      %v534 = vpop.f32.mrf.mxu0
      %v535 = vpop.f32.mrf.mxu0
      %v536 = vadd.f32 0.0, %v535
      %v537 = vpop.f32.mrf.mxu0
      %538 = vmatprep.mubr.bf16.mxu0 0
      %539 = vmatmul.mubr.bf16.gmra.mxu0 %v462
      %v540 = vpop.f32.mrf.mxu0
      %v541 = vadd.f32 0.0, %v540
      %v542 = vpop.f32.mrf.mxu0
      %v543 = vpop.f32.mrf.mxu0
      %v544 = vadd.f32 0.0, %v543
      %v545 = vpop.f32.mrf.mxu0
      %546 = vmatprep.mubr.bf16.mxu0 0
      %547 = vmatmul.mubr.bf16.gmra.mxu0 %v465
      %v548 = vpop.f32.mrf.mxu0
      %v549 = vadd.f32 0.0, %v548
      %v550 = vpop.f32.mrf.mxu0
      %v551 = vpop.f32.mrf.mxu0
      %v552 = vadd.f32 0.0, %v551
      %v553 = vpop.f32.mrf.mxu0
      %554 = vmatprep.mubr.bf16.mxu0 0
      %555 = vmatmul.mubr.bf16.gmra.mxu0 %v468
      %v556 = vpop.f32.mrf.mxu0
      %v557 = vadd.f32 0.0, %v556
      %v558 = vpop.f32.mrf.mxu0
      %v559 = vpop.f32.mrf.mxu0
      %v560 = vadd.f32 0.0, %v559
      %v561 = vpop.f32.mrf.mxu0
      %562 = vmatprep.mubr.bf16.mxu0 0
      %563 = vmatmul.mubr.bf16.gmra.mxu0 %v471
      %v564 = vpop.f32.mrf.mxu0
      %v565 = vadd.f32 0.0, %v564
      %v566 = vpop.f32.mrf.mxu0
      %v567 = vpop.f32.mrf.mxu0
      %v568 = vadd.f32 0.0, %v567
      %v569 = vpop.f32.mrf.mxu0
      %570 = vmatprep.mubr.bf16.mxu0 0
      %571 = vmatmul.mubr.bf16.gmra.mxu0 %v474
      %v572 = vpop.f32.mrf.mxu0
      %v573 = vadd.f32 0.0, %v572
      %v574 = vpop.f32.mrf.mxu0
      %v575 = vpop.f32.mrf.mxu0
      %v576 = vadd.f32 0.0, %v575
      %v577 = vpop.f32.mrf.mxu0
      %578 = vmatprep.mubr.bf16.mxu0 0
      %579 = vmatmul.mubr.bf16.gmra.mxu0 %v477
      %v580 = vpop.f32.mrf.mxu0
      %v581 = vadd.f32 0.0, %v580
      %v582 = vpop.f32.mrf.mxu0
      %v583 = vpop.f32.mrf.mxu0
      %v584 = vadd.f32 0.0, %v583
      %v585 = vpop.f32.mrf.mxu0
      %586 = vmatprep.mubr.bf16.mxu0 0
      %587 = vmatmul.mubr.bf16.gmra.mxu0 %v480
      %v588 = vpop.f32.mrf.mxu0
      %v589 = vadd.f32 0.0, %v588
      %v590 = vpop.f32.mrf.mxu0
      %v591 = vpop.f32.mrf.mxu0
      %v592 = vadd.f32 0.0, %v591
      %v593 = vpop.f32.mrf.mxu0
      %594 = vdwg.mxu0
      %v595 = vxor.u32 %v517, 2147483648
      %v596 = vxor.u32 %v520, 2147483648
      %v597 = vxor.u32 %v525, 2147483648
      %v598 = vxor.u32 %v528, 2147483648
      %v599 = vxor.u32 %v533, 2147483648
      %v600 = vxor.u32 %v536, 2147483648
      %v601 = vxor.u32 %v541, 2147483648
      %v602 = vxor.u32 %v544, 2147483648
      %v603 = vxor.u32 %v549, 2147483648
      %v604 = vxor.u32 %v552, 2147483648
      %v605 = vxor.u32 %v557, 2147483648
      %v606 = vxor.u32 %v560, 2147483648
      %v607 = vxor.u32 %v565, 2147483648
      %v608 = vxor.u32 %v568, 2147483648
      %v609 = vxor.u32 %v573, 2147483648
      %v610 = vxor.u32 %v576, 2147483648
      %v611 = vxor.u32 %v581, 2147483648
      %v612 = vxor.u32 %v584, 2147483648
      %v613 = vxor.u32 %v589, 2147483648
      %v614 = vxor.u32 %v592, 2147483648
      %v615 = vmul.f32 %v595, 1.442695
      %v616 = vpow.pop %v615
      %v617 = vmul.f32 %v596, 1.442695
      %v618 = vpow.pop %v617
      %v619 = vmul.f32 %v597, 1.442695
      %v620 = vpow.pop %v619
      %v621 = vmul.f32 %v598, 1.442695
      %v622 = vpow.pop %v621
      %v623 = vmul.f32 %v599, 1.442695
      %v624 = vpow.pop %v623
      %v625 = vmul.f32 %v600, 1.442695
      %v626 = vpow.pop %v625
      %v627 = vmul.f32 %v601, 1.442695
      %v628 = vpow.pop %v627
      %v629 = vmul.f32 %v602, 1.442695
      %v630 = vpow.pop %v629
      %v631 = vmul.f32 %v603, 1.442695
      %v632 = vpow.pop %v631
      %v633 = vmul.f32 %v604, 1.442695
      %v634 = vpow.pop %v633
      %v635 = vmul.f32 %v605, 1.442695
      %v636 = vpow.pop %v635
      %v637 = vmul.f32 %v606, 1.442695
      %v638 = vpow.pop %v637
      %v639 = vmul.f32 %v607, 1.442695
      %v640 = vpow.pop %v639
      %v641 = vmul.f32 %v608, 1.442695
      %v642 = vpow.pop %v641
      %v643 = vmul.f32 %v609, 1.442695
      %v644 = vpow.pop %v643
      %v645 = vmul.f32 %v610, 1.442695
      %v646 = vpow.pop %v645
      %v647 = vmul.f32 %v611, 1.442695
      %v648 = vpow.pop %v647
      %v649 = vmul.f32 %v612, 1.442695
      %v650 = vpow.pop %v649
      %v651 = vmul.f32 %v613, 1.442695
      %v652 = vpow.pop %v651
      %v653 = vmul.f32 %v614, 1.442695
      %v654 = vpow.pop %v653
      %v655 = vadd.f32 %v616, 1.0
      %v656 = vadd.f32 %v618, 1.0
      %v657 = vadd.f32 %v620, 1.0
      %v658 = vadd.f32 %v622, 1.0
      %v659 = vadd.f32 %v624, 1.0
      %v660 = vadd.f32 %v626, 1.0
      %v661 = vadd.f32 %v628, 1.0
      %v662 = vadd.f32 %v630, 1.0
      %v663 = vadd.f32 %v632, 1.0
      %v664 = vadd.f32 %v634, 1.0
      %v665 = vadd.f32 %v636, 1.0
      %v666 = vadd.f32 %v638, 1.0
      %v667 = vadd.f32 %v640, 1.0
      %v668 = vadd.f32 %v642, 1.0
      %v669 = vadd.f32 %v644, 1.0
      %v670 = vadd.f32 %v646, 1.0
      %v671 = vadd.f32 %v648, 1.0
      %v672 = vadd.f32 %v650, 1.0
      %v673 = vadd.f32 %v652, 1.0
      %v674 = vadd.f32 %v654, 1.0
      %v675 = vrcp.pop %v655
      %v676 = vmul.f32 1.0, %v675
      %v677 = vrcp.pop %v656
      %v678 = vmul.f32 1.0, %v677
      %v679 = vrcp.pop %v657
      %v680 = vmul.f32 1.0, %v679
      %v681 = vrcp.pop %v658
      %v682 = vmul.f32 1.0, %v681
      %v683 = vrcp.pop %v659
      %v684 = vmul.f32 1.0, %v683
      %v685 = vrcp.pop %v660
      %v686 = vmul.f32 1.0, %v685
      %v687 = vrcp.pop %v661
      %v688 = vmul.f32 1.0, %v687
      %v689 = vrcp.pop %v662
      %v690 = vmul.f32 1.0, %v689
      %v691 = vrcp.pop %v663
      %v692 = vmul.f32 1.0, %v691
      %v693 = vrcp.pop %v664
      %v694 = vmul.f32 1.0, %v693
      %v695 = vrcp.pop %v665
      %v696 = vmul.f32 1.0, %v695
      %v697 = vrcp.pop %v666
      %v698 = vmul.f32 1.0, %v697
      %v699 = vrcp.pop %v667
      %v700 = vmul.f32 1.0, %v699
      %v701 = vrcp.pop %v668
      %v702 = vmul.f32 1.0, %v701
      %v703 = vrcp.pop %v669
      %v704 = vmul.f32 1.0, %v703
      %v705 = vrcp.pop %v670
      %v706 = vmul.f32 1.0, %v705
      %v707 = vrcp.pop %v671
      %v708 = vmul.f32 1.0, %v707
      %v709 = vrcp.pop %v672
      %v710 = vmul.f32 1.0, %v709
      %v711 = vrcp.pop %v673
      %v712 = vmul.f32 1.0, %v711
      %v713 = vrcp.pop %v674
      %v714 = vmul.f32 1.0, %v713
      %735 = vrot.lane.b32.xlu0 %v676, 96
      %v736 = vpop.permute.xlu0 %735
      %737 = vrot.lane.b32.xlu0 %v678, 96
      %v738 = vpop.permute.xlu0 %737
      %739 = vrot.lane.b32.xlu0 %v680, 96
      %v740 = vpop.permute.xlu0 %739
      %741 = vrot.lane.b32.xlu0 %v682, 96
      %v742 = vpop.permute.xlu0 %741
      %743 = vrot.lane.b32.xlu0 %v684, 96
      %v744 = vpop.permute.xlu0 %743
      %745 = vrot.lane.b32.xlu0 %v686, 96
      %v746 = vpop.permute.xlu0 %745
      %747 = vrot.lane.b32.xlu0 %v688, 96
      %v748 = vpop.permute.xlu0 %747
      %749 = vrot.lane.b32.xlu0 %v690, 96
      %v750 = vpop.permute.xlu0 %749
      %751 = vrot.lane.b32.xlu0 %v692, 96
      %v752 = vpop.permute.xlu0 %751
      %753 = vrot.lane.b32.xlu0 %v694, 96
      %v754 = vpop.permute.xlu0 %753
      %755 = vrot.lane.b32.xlu0 %v696, 96
      %v756 = vpop.permute.xlu0 %755
      %757 = vrot.lane.b32.xlu0 %v698, 96
      %v758 = vpop.permute.xlu0 %757
      %759 = vrot.lane.b32.xlu0 %v700, 96
      %v760 = vpop.permute.xlu0 %759
      %761 = vrot.lane.b32.xlu0 %v702, 96
      %v762 = vpop.permute.xlu0 %761
      %763 = vrot.lane.b32.xlu0 %v704, 96
      %v764 = vpop.permute.xlu0 %763
      %765 = vrot.lane.b32.xlu0 %v706, 96
      %v766 = vpop.permute.xlu0 %765
      %767 = vrot.lane.b32.xlu0 %v708, 96
      %v768 = vpop.permute.xlu0 %767
      %769 = vrot.lane.b32.xlu0 %v710, 96
      %v770 = vpop.permute.xlu0 %769
      %771 = vrot.lane.b32.xlu0 %v712, 96
      %v772 = vpop.permute.xlu0 %771
      %773 = vrot.lane.b32.xlu0 %v714, 96
      %v774 = vpop.permute.xlu0 %773
      %795 = vst.msk [vmem:[#allocation6] sm:$0xff] %vm451, %v736
      %796 = vst.msk [vmem:[#allocation6 + $0x8] sm:$0xff] %vm451, %v738
      %797 = vst.msk [vmem:[#allocation6 + $0x10] sm:$0xff] %vm451, %v740
      %798 = vst.msk [vmem:[#allocation6 + $0x18] sm:$0xff] %vm451, %v742
      %799 = vst.msk [vmem:[#allocation6 + $0x20] sm:$0xff] %vm451, %v744
      %800 = vst.msk [vmem:[#allocation6 + $0x28] sm:$0xff] %vm451, %v746
      %801 = vst.msk [vmem:[#allocation6 + $0x30] sm:$0xff] %vm451, %v748
      %802 = vst.msk [vmem:[#allocation6 + $0x38] sm:$0xff] %vm451, %v750
      %803 = vst.msk [vmem:[#allocation6 + $0x40] sm:$0xff] %vm451, %v752
      %804 = vst.msk [vmem:[#allocation6 + $0x48] sm:$0xff] %vm451, %v754
      %805 = vst.msk [vmem:[#allocation6 + $0x50] sm:$0xff] %vm451, %v756
      %806 = vst.msk [vmem:[#allocation6 + $0x58] sm:$0xff] %vm451, %v758
      %807 = vst.msk [vmem:[#allocation6 + $0x60] sm:$0xff] %vm451, %v760
      %808 = vst.msk [vmem:[#allocation6 + $0x68] sm:$0xff] %vm451, %v762
      %809 = vst.msk [vmem:[#allocation6 + $0x70] sm:$0xff] %vm451, %v764
      %810 = vst.msk [vmem:[#allocation6 + $0x78] sm:$0xff] %vm451, %v766
      %811 = vst.msk [vmem:[#allocation6 + $0x80] sm:$0xff] %vm451, %v768
      %812 = vst.msk [vmem:[#allocation6 + $0x88] sm:$0xff] %vm451, %v770
      %813 = vst.msk [vmem:[#allocation6 + $0x90] sm:$0xff] %vm451, %v772
      %814 = vst.msk [vmem:[#allocation6 + $0x98] sm:$0xff] %vm451, %v774
      %vm815 = vcmp.gt.f32.partialorder %v517, 20.0
      %vm816 = vcmp.gt.f32.partialorder %v520, 20.0
      %vm817 = vcmp.gt.f32.partialorder %v525, 20.0
      %vm818 = vcmp.gt.f32.partialorder %v528, 20.0
      %vm819 = vcmp.gt.f32.partialorder %v533, 20.0
      %vm820 = vcmp.gt.f32.partialorder %v536, 20.0
      %vm821 = vcmp.gt.f32.partialorder %v541, 20.0
      %vm822 = vcmp.gt.f32.partialorder %v544, 20.0
      %vm823 = vcmp.gt.f32.partialorder %v549, 20.0
      %vm824 = vcmp.gt.f32.partialorder %v552, 20.0
      %vm825 = vcmp.gt.f32.partialorder %v557, 20.0
      %vm826 = vcmp.gt.f32.partialorder %v560, 20.0
      %vm827 = vcmp.gt.f32.partialorder %v565, 20.0
      %vm828 = vcmp.gt.f32.partialorder %v568, 20.0
      %vm829 = vcmp.gt.f32.partialorder %v573, 20.0
      %vm830 = vcmp.gt.f32.partialorder %v576, 20.0
      %vm831 = vcmp.gt.f32.partialorder %v581, 20.0
      %vm832 = vcmp.gt.f32.partialorder %v584, 20.0
      %vm833 = vcmp.gt.f32.partialorder %v589, 20.0
      %vm834 = vcmp.gt.f32.partialorder %v592, 20.0
      %v835 = vmin.f32 %v517, 20.0
      %v836 = vmin.f32 %v520, 20.0
      %v837 = vmin.f32 %v525, 20.0
      %v838 = vmin.f32 %v528, 20.0
      %v839 = vmin.f32 %v533, 20.0
      %v840 = vmin.f32 %v536, 20.0
      %v841 = vmin.f32 %v541, 20.0
      %v842 = vmin.f32 %v544, 20.0
      %v843 = vmin.f32 %v549, 20.0
      %v844 = vmin.f32 %v552, 20.0
      %v845 = vmin.f32 %v557, 20.0
      %v846 = vmin.f32 %v560, 20.0
      %v847 = vmin.f32 %v565, 20.0
      %v848 = vmin.f32 %v568, 20.0
      %v849 = vmin.f32 %v573, 20.0
      %v850 = vmin.f32 %v576, 20.0
      %v851 = vmin.f32 %v581, 20.0
      %v852 = vmin.f32 %v584, 20.0
      %v853 = vmin.f32 %v589, 20.0
      %v854 = vmin.f32 %v592, 20.0
      %v855 = vmul.f32 %v835, 1.442695
      %v856 = vpow.pop %v855
      %v857 = vmul.f32 %v836, 1.442695
      %v858 = vpow.pop %v857
      %v859 = vmul.f32 %v837, 1.442695
      %v860 = vpow.pop %v859
      %v861 = vmul.f32 %v838, 1.442695
      %v862 = vpow.pop %v861
      %v863 = vmul.f32 %v839, 1.442695
      %v864 = vpow.pop %v863
      %v865 = vmul.f32 %v840, 1.442695
      %v866 = vpow.pop %v865
      %v867 = vmul.f32 %v841, 1.442695
      %v868 = vpow.pop %v867
      %v869 = vmul.f32 %v842, 1.442695
      %v870 = vpow.pop %v869
      %v871 = vmul.f32 %v843, 1.442695
      %v872 = vpow.pop %v871
      %v873 = vmul.f32 %v844, 1.442695
      %v874 = vpow.pop %v873
      %v875 = vmul.f32 %v845, 1.442695
      %v876 = vpow.pop %v875
      %v877 = vmul.f32 %v846, 1.442695
      %v878 = vpow.pop %v877
      %v879 = vmul.f32 %v847, 1.442695
      %v880 = vpow.pop %v879
      %v881 = vmul.f32 %v848, 1.442695
      %v882 = vpow.pop %v881
      %v883 = vmul.f32 %v849, 1.442695
      %v884 = vpow.pop %v883
      %v885 = vmul.f32 %v850, 1.442695
      %v886 = vpow.pop %v885
      %v887 = vmul.f32 %v851, 1.442695
      %v888 = vpow.pop %v887
      %v889 = vmul.f32 %v852, 1.442695
      %v890 = vpow.pop %v889
      %v891 = vmul.f32 %v853, 1.442695
      %v892 = vpow.pop %v891
      %v893 = vmul.f32 %v854, 1.442695
      %v894 = vpow.pop %v893
      %v895 = vadd.f32 %v856, 1.0
      %v896 = vlog2.pop %v895
      %v897 = vmul.f32 %v896, 0.6931472
      %v898 = vmul.f32 -0.5, %v856
      %v899 = vadd.f32 %v898, 1.0
      %v900 = vmul.f32 %v899, %v856
      %v901 = vand.u32 2147483647, %v856
      %vm902 = vcmp.lt.f32.partialorder %v901, 0.0004427343
      %v903 = vsel %vm902, %v900, %v897
      %v904 = vadd.f32 %v858, 1.0
      %v905 = vlog2.pop %v904
      %v906 = vmul.f32 %v905, 0.6931472
      %v907 = vmul.f32 -0.5, %v858
      %v908 = vadd.f32 %v907, 1.0
      %v909 = vmul.f32 %v908, %v858
      %v910 = vand.u32 2147483647, %v858
      %vm911 = vcmp.lt.f32.partialorder %v910, 0.0004427343
      %v912 = vsel %vm911, %v909, %v906
      %v913 = vadd.f32 %v860, 1.0
      %v914 = vlog2.pop %v913
      %v915 = vmul.f32 %v914, 0.6931472
      %v916 = vmul.f32 -0.5, %v860
      %v917 = vadd.f32 %v916, 1.0
      %v918 = vmul.f32 %v917, %v860
      %v919 = vand.u32 2147483647, %v860
      %vm920 = vcmp.lt.f32.partialorder %v919, 0.0004427343
      %v921 = vsel %vm920, %v918, %v915
      %v922 = vadd.f32 %v862, 1.0
      %v923 = vlog2.pop %v922
      %v924 = vmul.f32 %v923, 0.6931472
      %v925 = vmul.f32 -0.5, %v862
      %v926 = vadd.f32 %v925, 1.0
      %v927 = vmul.f32 %v926, %v862
      %v928 = vand.u32 2147483647, %v862
      %vm929 = vcmp.lt.f32.partialorder %v928, 0.0004427343
      %v930 = vsel %vm929, %v927, %v924
      %v931 = vadd.f32 %v864, 1.0
      %v932 = vlog2.pop %v931
      %v933 = vmul.f32 %v932, 0.6931472
      %v934 = vmul.f32 -0.5, %v864
      %v935 = vadd.f32 %v934, 1.0
      %v936 = vmul.f32 %v935, %v864
      %v937 = vand.u32 2147483647, %v864
      %vm938 = vcmp.lt.f32.partialorder %v937, 0.0004427343
      %v939 = vsel %vm938, %v936, %v933
      %v940 = vadd.f32 %v866, 1.0
      %v941 = vlog2.pop %v940
      %v942 = vmul.f32 %v941, 0.6931472
      %v943 = vmul.f32 -0.5, %v866
      %v944 = vadd.f32 %v943, 1.0
      %v945 = vmul.f32 %v944, %v866
      %v946 = vand.u32 2147483647, %v866
      %vm947 = vcmp.lt.f32.partialorder %v946, 0.0004427343
      %v948 = vsel %vm947, %v945, %v942
      %v949 = vadd.f32 %v868, 1.0
      %v950 = vlog2.pop %v949
      %v951 = vmul.f32 %v950, 0.6931472
      %v952 = vmul.f32 -0.5, %v868
      %v953 = vadd.f32 %v952, 1.0
      %v954 = vmul.f32 %v953, %v868
      %v955 = vand.u32 2147483647, %v868
      %vm956 = vcmp.lt.f32.partialorder %v955, 0.0004427343
      %v957 = vsel %vm956, %v954, %v951
      %v958 = vadd.f32 %v870, 1.0
      %v959 = vlog2.pop %v958
      %v960 = vmul.f32 %v959, 0.6931472
      %v961 = vmul.f32 -0.5, %v870
      %v962 = vadd.f32 %v961, 1.0
      %v963 = vmul.f32 %v962, %v870
      %v964 = vand.u32 2147483647, %v870
      %vm965 = vcmp.lt.f32.partialorder %v964, 0.0004427343
      %v966 = vsel %vm965, %v963, %v960
      %v967 = vadd.f32 %v872, 1.0
      %v968 = vlog2.pop %v967
      %v969 = vmul.f32 %v968, 0.6931472
      %v970 = vmul.f32 -0.5, %v872
      %v971 = vadd.f32 %v970, 1.0
      %v972 = vmul.f32 %v971, %v872
      %v973 = vand.u32 2147483647, %v872
      %vm974 = vcmp.lt.f32.partialorder %v973, 0.0004427343
      %v975 = vsel %vm974, %v972, %v969
      %v976 = vadd.f32 %v874, 1.0
      %v977 = vlog2.pop %v976
      %v978 = vmul.f32 %v977, 0.6931472
      %v979 = vmul.f32 -0.5, %v874
      %v980 = vadd.f32 %v979, 1.0
      %v981 = vmul.f32 %v980, %v874
      %v982 = vand.u32 2147483647, %v874
      %vm983 = vcmp.lt.f32.partialorder %v982, 0.0004427343
      %v984 = vsel %vm983, %v981, %v978
      %v985 = vadd.f32 %v876, 1.0
      %v986 = vlog2.pop %v985
      %v987 = vmul.f32 %v986, 0.6931472
      %v988 = vmul.f32 -0.5, %v876
      %v989 = vadd.f32 %v988, 1.0
      %v990 = vmul.f32 %v989, %v876
      %v991 = vand.u32 2147483647, %v876
      %vm992 = vcmp.lt.f32.partialorder %v991, 0.0004427343
      %v993 = vsel %vm992, %v990, %v987
      %v994 = vadd.f32 %v878, 1.0
      %v995 = vlog2.pop %v994
      %v996 = vmul.f32 %v995, 0.6931472
      %v997 = vmul.f32 -0.5, %v878
      %v998 = vadd.f32 %v997, 1.0
      %v999 = vmul.f32 %v998, %v878
      %v1000 = vand.u32 2147483647, %v878
      %vm1001 = vcmp.lt.f32.partialorder %v1000, 0.0004427343
      %v1002 = vsel %vm1001, %v999, %v996
      %v1003 = vadd.f32 %v880, 1.0
      %v1004 = vlog2.pop %v1003
      %v1005 = vmul.f32 %v1004, 0.6931472
      %v1006 = vmul.f32 -0.5, %v880
      %v1007 = vadd.f32 %v1006, 1.0
      %v1008 = vmul.f32 %v1007, %v880
      %v1009 = vand.u32 2147483647, %v880
      %vm1010 = vcmp.lt.f32.partialorder %v1009, 0.0004427343
      %v1011 = vsel %vm1010, %v1008, %v1005
      %v1012 = vadd.f32 %v882, 1.0
      %v1013 = vlog2.pop %v1012
      %v1014 = vmul.f32 %v1013, 0.6931472
      %v1015 = vmul.f32 -0.5, %v882
      %v1016 = vadd.f32 %v1015, 1.0
      %v1017 = vmul.f32 %v1016, %v882
      %v1018 = vand.u32 2147483647, %v882
      %vm1019 = vcmp.lt.f32.partialorder %v1018, 0.0004427343
      %v1020 = vsel %vm1019, %v1017, %v1014
      %v1021 = vadd.f32 %v884, 1.0
      %v1022 = vlog2.pop %v1021
      %v1023 = vmul.f32 %v1022, 0.6931472
      %v1024 = vmul.f32 -0.5, %v884
      %v1025 = vadd.f32 %v1024, 1.0
      %v1026 = vmul.f32 %v1025, %v884
      %v1027 = vand.u32 2147483647, %v884
      %vm1028 = vcmp.lt.f32.partialorder %v1027, 0.0004427343
      %v1029 = vsel %vm1028, %v1026, %v1023
      %v1030 = vadd.f32 %v886, 1.0
      %v1031 = vlog2.pop %v1030
      %v1032 = vmul.f32 %v1031, 0.6931472
      %v1033 = vmul.f32 -0.5, %v886
      %v1034 = vadd.f32 %v1033, 1.0
      %v1035 = vmul.f32 %v1034, %v886
      %v1036 = vand.u32 2147483647, %v886
      %vm1037 = vcmp.lt.f32.partialorder %v1036, 0.0004427343
      %v1038 = vsel %vm1037, %v1035, %v1032
      %v1039 = vadd.f32 %v888, 1.0
      %v1040 = vlog2.pop %v1039
      %v1041 = vmul.f32 %v1040, 0.6931472
      %v1042 = vmul.f32 -0.5, %v888
      %v1043 = vadd.f32 %v1042, 1.0
      %v1044 = vmul.f32 %v1043, %v888
      %v1045 = vand.u32 2147483647, %v888
      %vm1046 = vcmp.lt.f32.partialorder %v1045, 0.0004427343
      %v1047 = vsel %vm1046, %v1044, %v1041
      %v1048 = vadd.f32 %v890, 1.0
      %v1049 = vlog2.pop %v1048
      %v1050 = vmul.f32 %v1049, 0.6931472
      %v1051 = vmul.f32 -0.5, %v890
      %v1052 = vadd.f32 %v1051, 1.0
      %v1053 = vmul.f32 %v1052, %v890
      %v1054 = vand.u32 2147483647, %v890
      %vm1055 = vcmp.lt.f32.partialorder %v1054, 0.0004427343
      %v1056 = vsel %vm1055, %v1053, %v1050
      %v1057 = vadd.f32 %v892, 1.0
      %v1058 = vlog2.pop %v1057
      %v1059 = vmul.f32 %v1058, 0.6931472
      %v1060 = vmul.f32 -0.5, %v892
      %v1061 = vadd.f32 %v1060, 1.0
      %v1062 = vmul.f32 %v1061, %v892
      %v1063 = vand.u32 2147483647, %v892
      %vm1064 = vcmp.lt.f32.partialorder %v1063, 0.0004427343
      %v1065 = vsel %vm1064, %v1062, %v1059
      %v1066 = vadd.f32 %v894, 1.0
      %v1067 = vlog2.pop %v1066
      %v1068 = vmul.f32 %v1067, 0.6931472
      %v1069 = vmul.f32 -0.5, %v894
      %v1070 = vadd.f32 %v1069, 1.0
      %v1071 = vmul.f32 %v1070, %v894
      %v1072 = vand.u32 2147483647, %v894
      %vm1073 = vcmp.lt.f32.partialorder %v1072, 0.0004427343
      %v1074 = vsel %vm1073, %v1071, %v1068
      %v1075 = vsel %vm815, %v517, %v903
      %v1076 = vsel %vm816, %v520, %v912
      %v1077 = vsel %vm817, %v525, %v921
      %v1078 = vsel %vm818, %v528, %v930
      %v1079 = vsel %vm819, %v533, %v939
      %v1080 = vsel %vm820, %v536, %v948
      %v1081 = vsel %vm821, %v541, %v957
      %v1082 = vsel %vm822, %v544, %v966
      %v1083 = vsel %vm823, %v549, %v975
      %v1084 = vsel %vm824, %v552, %v984
      %v1085 = vsel %vm825, %v557, %v993
      %v1086 = vsel %vm826, %v560, %v1002
      %v1087 = vsel %vm827, %v565, %v1011
      %v1088 = vsel %vm828, %v568, %v1020
      %v1089 = vsel %vm829, %v573, %v1029
      %v1090 = vsel %vm830, %v576, %v1038
      %v1091 = vsel %vm831, %v581, %v1047
      %v1092 = vsel %vm832, %v584, %v1056
      %v1093 = vsel %vm833, %v589, %v1065
      %v1094 = vsel %vm834, %v592, %v1074
      %1115 = vrot.lane.b32.xlu0 %v1075, 64
      %v1116 = vpop.permute.xlu0 %1115
      %1117 = vrot.lane.b32.xlu0 %v1076, 64
      %v1118 = vpop.permute.xlu0 %1117
      %1119 = vrot.lane.b32.xlu0 %v1077, 64
      %v1120 = vpop.permute.xlu0 %1119
      %1121 = vrot.lane.b32.xlu0 %v1078, 64
      %v1122 = vpop.permute.xlu0 %1121
      %1123 = vrot.lane.b32.xlu0 %v1079, 64
      %v1124 = vpop.permute.xlu0 %1123
      %1125 = vrot.lane.b32.xlu0 %v1080, 64
      %v1126 = vpop.permute.xlu0 %1125
      %1127 = vrot.lane.b32.xlu0 %v1081, 64
      %v1128 = vpop.permute.xlu0 %1127
      %1129 = vrot.lane.b32.xlu0 %v1082, 64
      %v1130 = vpop.permute.xlu0 %1129
      %1131 = vrot.lane.b32.xlu0 %v1083, 64
      %v1132 = vpop.permute.xlu0 %1131
      %1133 = vrot.lane.b32.xlu0 %v1084, 64
      %v1134 = vpop.permute.xlu0 %1133
      %1135 = vrot.lane.b32.xlu0 %v1085, 64
      %v1136 = vpop.permute.xlu0 %1135
      %1137 = vrot.lane.b32.xlu0 %v1086, 64
      %v1138 = vpop.permute.xlu0 %1137
      %1139 = vrot.lane.b32.xlu0 %v1087, 64
      %v1140 = vpop.permute.xlu0 %1139
      %1141 = vrot.lane.b32.xlu0 %v1088, 64
      %v1142 = vpop.permute.xlu0 %1141
      %1143 = vrot.lane.b32.xlu0 %v1089, 64
      %v1144 = vpop.permute.xlu0 %1143
      %1145 = vrot.lane.b32.xlu0 %v1090, 64
      %v1146 = vpop.permute.xlu0 %1145
      %1147 = vrot.lane.b32.xlu0 %v1091, 64
      %v1148 = vpop.permute.xlu0 %1147
      %1149 = vrot.lane.b32.xlu0 %v1092, 64
      %v1150 = vpop.permute.xlu0 %1149
      %1151 = vrot.lane.b32.xlu0 %v1093, 64
      %v1152 = vpop.permute.xlu0 %1151
      %1153 = vrot.lane.b32.xlu0 %v1094, 64
      %v1154 = vpop.permute.xlu0 %1153
      %vm1175 = vcmask 130048
      %1176 = vst.msk [vmem:[#allocation5] sm:$0xff] %vm1175, %v1116
      %1177 = vst.msk [vmem:[#allocation5 + $0x8] sm:$0xff] %vm1175, %v1118
      %1178 = vst.msk [vmem:[#allocation5 + $0x10] sm:$0xff] %vm1175, %v1120
      %1179 = vst.msk [vmem:[#allocation5 + $0x18] sm:$0xff] %vm1175, %v1122
      %1180 = vst.msk [vmem:[#allocation5 + $0x20] sm:$0xff] %vm1175, %v1124
      %1181 = vst.msk [vmem:[#allocation5 + $0x28] sm:$0xff] %vm1175, %v1126
      %1182 = vst.msk [vmem:[#allocation5 + $0x30] sm:$0xff] %vm1175, %v1128
      %1183 = vst.msk [vmem:[#allocation5 + $0x38] sm:$0xff] %vm1175, %v1130
      %1184 = vst.msk [vmem:[#allocation5 + $0x40] sm:$0xff] %vm1175, %v1132
      %1185 = vst.msk [vmem:[#allocation5 + $0x48] sm:$0xff] %vm1175, %v1134
      %1186 = vst.msk [vmem:[#allocation5 + $0x50] sm:$0xff] %vm1175, %v1136
      %1187 = vst.msk [vmem:[#allocation5 + $0x58] sm:$0xff] %vm1175, %v1138
      %1188 = vst.msk [vmem:[#allocation5 + $0x60] sm:$0xff] %vm1175, %v1140
      %1189 = vst.msk [vmem:[#allocation5 + $0x68] sm:$0xff] %vm1175, %v1142
      %1190 = vst.msk [vmem:[#allocation5 + $0x70] sm:$0xff] %vm1175, %v1144
      %1191 = vst.msk [vmem:[#allocation5 + $0x78] sm:$0xff] %vm1175, %v1146
      %1192 = vst.msk [vmem:[#allocation5 + $0x80] sm:$0xff] %vm1175, %v1148
      %1193 = vst.msk [vmem:[#allocation5 + $0x88] sm:$0xff] %vm1175, %v1150
      %1194 = vst.msk [vmem:[#allocation5 + $0x90] sm:$0xff] %vm1175, %v1152
      %1195 = vst.msk [vmem:[#allocation5 + $0x98] sm:$0xff] %vm1175, %v1154
      %1196 = vst.msk [vmem:[#allocation2] sm:$0xff] %vm451, 0.0
      %1197 = vst.msk [vmem:[#allocation2 + $0x8] sm:$0xff] %vm451, %v517
      %1198 = vst.msk [vmem:[#allocation2 + $0x10] sm:$0xff] %vm451, %v520
      %1199 = vst.msk [vmem:[#allocation2 + $0x18] sm:$0xff] %vm451, %v525
      %1200 = vst.msk [vmem:[#allocation2 + $0x20] sm:$0xff] %vm451, %v528
      %1201 = vst.msk [vmem:[#allocation2 + $0x28] sm:$0xff] %vm451, %v533
      %1202 = vst.msk [vmem:[#allocation2 + $0x30] sm:$0xff] %vm451, %v536
      %1203 = vst.msk [vmem:[#allocation2 + $0x38] sm:$0xff] %vm451, %v541
      %1204 = vst.msk [vmem:[#allocation2 + $0x40] sm:$0xff] %vm451, %v544
      %1205 = vst.msk [vmem:[#allocation2 + $0x48] sm:$0xff] %vm451, %v549
      %1206 = vst.msk [vmem:[#allocation2 + $0x50] sm:$0xff] %vm451, %v552
      %1207 = vst.msk [vmem:[#allocation2 + $0x58] sm:$0xff] %vm451, %v557
      %1208 = vst.msk [vmem:[#allocation2 + $0x60] sm:$0xff] %vm451, %v560
      %1209 = vst.msk [vmem:[#allocation2 + $0x68] sm:$0xff] %vm451, %v565
      %1210 = vst.msk [vmem:[#allocation2 + $0x70] sm:$0xff] %vm451, %v568
      %1211 = vst.msk [vmem:[#allocation2 + $0x78] sm:$0xff] %vm451, %v573
      %1212 = vst.msk [vmem:[#allocation2 + $0x80] sm:$0xff] %vm451, %v576
      %1213 = vst.msk [vmem:[#allocation2 + $0x88] sm:$0xff] %vm451, %v581
      %1214 = vst.msk [vmem:[#allocation2 + $0x90] sm:$0xff] %vm451, %v584
      %1215 = vst.msk [vmem:[#allocation2 + $0x98] sm:$0xff] %vm451, %v589
      %1216 = vst.msk [vmem:[#allocation2 + $0xa0] sm:$0xff] %vm451, %v592
      %v1217 = vld [vmem:[%s3] sm:$0xf]
      %v1218 = vld [vmem:[%s4] sm:$0x1]
      %v1220 = vlaneseq
      %v1221 = vshrl.u32 %v1220, 7
      %v1222 = vsub.s32 0, %v1221
      %v1223 = vrot.slane %v1218, %v1222
      %v1225 = vld [vmem:[#allocation2 + $0x5] sm:$0xff]
      %v1226 = vld [vmem:[#allocation2 + $0xd] sm:$0xff]
      %v1227 = vld [vmem:[#allocation2 + $0x15] sm:$0xff]
      %v1228 = vld [vmem:[#allocation2 + $0x1d] sm:$0xff]
      %v1229 = vld [vmem:[#allocation2 + $0x25] sm:$0xff]
      %v1230 = vld [vmem:[#allocation2 + $0x2d] sm:$0xff]
      %v1231 = vld [vmem:[#allocation2 + $0x35] sm:$0xff]
      %v1232 = vld [vmem:[#allocation2 + $0x3d] sm:$0xff]
      %v1233 = vld [vmem:[#allocation2 + $0x45] sm:$0xff]
      %v1234 = vld [vmem:[#allocation2 + $0x4d] sm:$0xff]
      %v1235 = vld [vmem:[#allocation2 + $0x55] sm:$0xff]
      %v1236 = vld [vmem:[#allocation2 + $0x5d] sm:$0xff]
      %v1237 = vld [vmem:[#allocation2 + $0x65] sm:$0xff]
      %v1238 = vld [vmem:[#allocation2 + $0x6d] sm:$0xff]
      %v1239 = vld [vmem:[#allocation2 + $0x75] sm:$0xff]
      %v1240 = vld [vmem:[#allocation2 + $0x7d] sm:$0xff]
      %v1241 = vld [vmem:[#allocation2 + $0x85] sm:$0xff]
      %v1242 = vld [vmem:[#allocation2 + $0x8d] sm:$0xff]
      %v1243 = vld [vmem:[#allocation2 + $0x95] sm:$0xff]
      %v1244 = vld [vmem:[#allocation2 + $0x9d] sm:$0xff]
      %v1245 = vlaneseq
      %v1246 = vshrl.u32 %v1245, 7
      %v1247 = vsub.s32 0, %v1246
      %v1248 = vrot.slane %v1217, %v1247
      %v1249 = vmul.f32 %v1248, %v1225
      %v1250 = vmul.f32 %v1248, %v1226
      %v1251 = vmul.f32 %v1248, %v1227
      %v1252 = vmul.f32 %v1248, %v1228
      %v1253 = vmul.f32 %v1248, %v1229
      %v1254 = vmul.f32 %v1248, %v1230
      %v1255 = vmul.f32 %v1248, %v1231
      %v1256 = vmul.f32 %v1248, %v1232
      %v1257 = vmul.f32 %v1248, %v1233
      %v1258 = vmul.f32 %v1248, %v1234
      %v1259 = vmul.f32 %v1248, %v1235
      %v1260 = vmul.f32 %v1248, %v1236
      %v1261 = vmul.f32 %v1248, %v1237
      %v1262 = vmul.f32 %v1248, %v1238
      %v1263 = vmul.f32 %v1248, %v1239
      %v1264 = vmul.f32 %v1248, %v1240
      %v1265 = vmul.f32 %v1248, %v1241
      %v1266 = vmul.f32 %v1248, %v1242
      %v1267 = vmul.f32 %v1248, %v1243
      %v1268 = vmul.f32 %v1248, %v1244
      %v1269 = vadd.f32 %v1223, %v1249
      %v1270 = vadd.f32 %v1223, %v1250
      %v1271 = vadd.f32 %v1223, %v1251
      %v1272 = vadd.f32 %v1223, %v1252
      %v1273 = vadd.f32 %v1223, %v1253
      %v1274 = vadd.f32 %v1223, %v1254
      %v1275 = vadd.f32 %v1223, %v1255
      %v1276 = vadd.f32 %v1223, %v1256
      %v1277 = vadd.f32 %v1223, %v1257
      %v1278 = vadd.f32 %v1223, %v1258
      %v1279 = vadd.f32 %v1223, %v1259
      %v1280 = vadd.f32 %v1223, %v1260
      %v1281 = vadd.f32 %v1223, %v1261
      %v1282 = vadd.f32 %v1223, %v1262
      %v1283 = vadd.f32 %v1223, %v1263
      %v1284 = vadd.f32 %v1223, %v1264
      %v1285 = vadd.f32 %v1223, %v1265
      %v1286 = vadd.f32 %v1223, %v1266
      %v1287 = vadd.f32 %v1223, %v1267
      %v1288 = vadd.f32 %v1223, %v1268
      %v1289 = vld [vmem:[#allocation2 + $0x6] sm:$0xff]
      %v1290 = vld [vmem:[#allocation2 + $0xe] sm:$0xff]
      %v1291 = vld [vmem:[#allocation2 + $0x16] sm:$0xff]
      %v1292 = vld [vmem:[#allocation2 + $0x1e] sm:$0xff]
      %v1293 = vld [vmem:[#allocation2 + $0x26] sm:$0xff]
      %v1294 = vld [vmem:[#allocation2 + $0x2e] sm:$0xff]
      %v1295 = vld [vmem:[#allocation2 + $0x36] sm:$0xff]
      %v1296 = vld [vmem:[#allocation2 + $0x3e] sm:$0xff]
      %v1297 = vld [vmem:[#allocation2 + $0x46] sm:$0xff]
      %v1298 = vld [vmem:[#allocation2 + $0x4e] sm:$0xff]
      %v1299 = vld [vmem:[#allocation2 + $0x56] sm:$0xff]
      %v1300 = vld [vmem:[#allocation2 + $0x5e] sm:$0xff]
      %v1301 = vld [vmem:[#allocation2 + $0x66] sm:$0xff]
      %v1302 = vld [vmem:[#allocation2 + $0x6e] sm:$0xff]
      %v1303 = vld [vmem:[#allocation2 + $0x76] sm:$0xff]
      %v1304 = vld [vmem:[#allocation2 + $0x7e] sm:$0xff]
      %v1305 = vld [vmem:[#allocation2 + $0x86] sm:$0xff]
      %v1306 = vld [vmem:[#allocation2 + $0x8e] sm:$0xff]
      %v1307 = vld [vmem:[#allocation2 + $0x96] sm:$0xff]
      %v1308 = vld [vmem:[#allocation2 + $0x9e] sm:$0xff]
      %v1309 = vlaneseq
      %v1310 = vshrl.u32 %v1309, 7
      %v1311 = vsub.s32 1, %v1310
      %v1312 = vrot.slane %v1217, %v1311
      %v1313 = vmul.f32 %v1312, %v1289
      %v1314 = vmul.f32 %v1312, %v1290
      %v1315 = vmul.f32 %v1312, %v1291
      %v1316 = vmul.f32 %v1312, %v1292
      %v1317 = vmul.f32 %v1312, %v1293
      %v1318 = vmul.f32 %v1312, %v1294
      %v1319 = vmul.f32 %v1312, %v1295
      %v1320 = vmul.f32 %v1312, %v1296
      %v1321 = vmul.f32 %v1312, %v1297
      %v1322 = vmul.f32 %v1312, %v1298
      %v1323 = vmul.f32 %v1312, %v1299
      %v1324 = vmul.f32 %v1312, %v1300
      %v1325 = vmul.f32 %v1312, %v1301
      %v1326 = vmul.f32 %v1312, %v1302
      %v1327 = vmul.f32 %v1312, %v1303
      %v1328 = vmul.f32 %v1312, %v1304
      %v1329 = vmul.f32 %v1312, %v1305
      %v1330 = vmul.f32 %v1312, %v1306
      %v1331 = vmul.f32 %v1312, %v1307
      %v1332 = vmul.f32 %v1312, %v1308
      %v1333 = vadd.f32 %v1269, %v1313
      %v1334 = vadd.f32 %v1270, %v1314
      %v1335 = vadd.f32 %v1271, %v1315
      %v1336 = vadd.f32 %v1272, %v1316
      %v1337 = vadd.f32 %v1273, %v1317
      %v1338 = vadd.f32 %v1274, %v1318
      %v1339 = vadd.f32 %v1275, %v1319
      %v1340 = vadd.f32 %v1276, %v1320
      %v1341 = vadd.f32 %v1277, %v1321
      %v1342 = vadd.f32 %v1278, %v1322
      %v1343 = vadd.f32 %v1279, %v1323
      %v1344 = vadd.f32 %v1280, %v1324
      %v1345 = vadd.f32 %v1281, %v1325
      %v1346 = vadd.f32 %v1282, %v1326
      %v1347 = vadd.f32 %v1283, %v1327
      %v1348 = vadd.f32 %v1284, %v1328
      %v1349 = vadd.f32 %v1285, %v1329
      %v1350 = vadd.f32 %v1286, %v1330
      %v1351 = vadd.f32 %v1287, %v1331
      %v1352 = vadd.f32 %v1288, %v1332
      %v1353 = vld [vmem:[#allocation2 + $0x7] sm:$0xff]
      %v1354 = vld [vmem:[#allocation2 + $0xf] sm:$0xff]
      %v1355 = vld [vmem:[#allocation2 + $0x17] sm:$0xff]
      %v1356 = vld [vmem:[#allocation2 + $0x1f] sm:$0xff]
      %v1357 = vld [vmem:[#allocation2 + $0x27] sm:$0xff]
      %v1358 = vld [vmem:[#allocation2 + $0x2f] sm:$0xff]
      %v1359 = vld [vmem:[#allocation2 + $0x37] sm:$0xff]
      %v1360 = vld [vmem:[#allocation2 + $0x3f] sm:$0xff]
      %v1361 = vld [vmem:[#allocation2 + $0x47] sm:$0xff]
      %v1362 = vld [vmem:[#allocation2 + $0x4f] sm:$0xff]
      %v1363 = vld [vmem:[#allocation2 + $0x57] sm:$0xff]
      %v1364 = vld [vmem:[#allocation2 + $0x5f] sm:$0xff]
      %v1365 = vld [vmem:[#allocation2 + $0x67] sm:$0xff]
      %v1366 = vld [vmem:[#allocation2 + $0x6f] sm:$0xff]
      %v1367 = vld [vmem:[#allocation2 + $0x77] sm:$0xff]
      %v1368 = vld [vmem:[#allocation2 + $0x7f] sm:$0xff]
      %v1369 = vld [vmem:[#allocation2 + $0x87] sm:$0xff]
      %v1370 = vld [vmem:[#allocation2 + $0x8f] sm:$0xff]
      %v1371 = vld [vmem:[#allocation2 + $0x97] sm:$0xff]
      %v1372 = vld [vmem:[#allocation2 + $0x9f] sm:$0xff]
      %v1373 = vlaneseq
      %v1374 = vshrl.u32 %v1373, 7
      %v1375 = vsub.s32 2, %v1374
      %v1376 = vrot.slane %v1217, %v1375
      %v1377 = vmul.f32 %v1376, %v1353
      %v1378 = vmul.f32 %v1376, %v1354
      %v1379 = vmul.f32 %v1376, %v1355
      %v1380 = vmul.f32 %v1376, %v1356
      %v1381 = vmul.f32 %v1376, %v1357
      %v1382 = vmul.f32 %v1376, %v1358
      %v1383 = vmul.f32 %v1376, %v1359
      %v1384 = vmul.f32 %v1376, %v1360
      %v1385 = vmul.f32 %v1376, %v1361
      %v1386 = vmul.f32 %v1376, %v1362
      %v1387 = vmul.f32 %v1376, %v1363
      %v1388 = vmul.f32 %v1376, %v1364
      %v1389 = vmul.f32 %v1376, %v1365
      %v1390 = vmul.f32 %v1376, %v1366
      %v1391 = vmul.f32 %v1376, %v1367
      %v1392 = vmul.f32 %v1376, %v1368
      %v1393 = vmul.f32 %v1376, %v1369
      %v1394 = vmul.f32 %v1376, %v1370
      %v1395 = vmul.f32 %v1376, %v1371
      %v1396 = vmul.f32 %v1376, %v1372
      %v1397 = vadd.f32 %v1333, %v1377
      %v1398 = vadd.f32 %v1334, %v1378
      %v1399 = vadd.f32 %v1335, %v1379
      %v1400 = vadd.f32 %v1336, %v1380
      %v1401 = vadd.f32 %v1337, %v1381
      %v1402 = vadd.f32 %v1338, %v1382
      %v1403 = vadd.f32 %v1339, %v1383
      %v1404 = vadd.f32 %v1340, %v1384
      %v1405 = vadd.f32 %v1341, %v1385
      %v1406 = vadd.f32 %v1342, %v1386
      %v1407 = vadd.f32 %v1343, %v1387
      %v1408 = vadd.f32 %v1344, %v1388
      %v1409 = vadd.f32 %v1345, %v1389
      %v1410 = vadd.f32 %v1346, %v1390
      %v1411 = vadd.f32 %v1347, %v1391
      %v1412 = vadd.f32 %v1348, %v1392
      %v1413 = vadd.f32 %v1349, %v1393
      %v1414 = vadd.f32 %v1350, %v1394
      %v1415 = vadd.f32 %v1351, %v1395
      %v1416 = vadd.f32 %v1352, %v1396
      %v1417 = vld [vmem:[#allocation2 + $0x8] sm:$0xff]
      %v1418 = vld [vmem:[#allocation2 + $0x10] sm:$0xff]
      %v1419 = vld [vmem:[#allocation2 + $0x18] sm:$0xff]
      %v1420 = vld [vmem:[#allocation2 + $0x20] sm:$0xff]
      %v1421 = vld [vmem:[#allocation2 + $0x28] sm:$0xff]
      %v1422 = vld [vmem:[#allocation2 + $0x30] sm:$0xff]
      %v1423 = vld [vmem:[#allocation2 + $0x38] sm:$0xff]
      %v1424 = vld [vmem:[#allocation2 + $0x40] sm:$0xff]
      %v1425 = vld [vmem:[#allocation2 + $0x48] sm:$0xff]
      %v1426 = vld [vmem:[#allocation2 + $0x50] sm:$0xff]
      %v1427 = vld [vmem:[#allocation2 + $0x58] sm:$0xff]
      %v1428 = vld [vmem:[#allocation2 + $0x60] sm:$0xff]
      %v1429 = vld [vmem:[#allocation2 + $0x68] sm:$0xff]
      %v1430 = vld [vmem:[#allocation2 + $0x70] sm:$0xff]
      %v1431 = vld [vmem:[#allocation2 + $0x78] sm:$0xff]
      %v1432 = vld [vmem:[#allocation2 + $0x80] sm:$0xff]
      %v1433 = vld [vmem:[#allocation2 + $0x88] sm:$0xff]
      %v1434 = vld [vmem:[#allocation2 + $0x90] sm:$0xff]
      %v1435 = vld [vmem:[#allocation2 + $0x98] sm:$0xff]
      %v1436 = vld [vmem:[#allocation2 + $0xa0] sm:$0xff]
      %v1437 = vlaneseq
      %v1438 = vshrl.u32 %v1437, 7
      %v1439 = vsub.s32 3, %v1438
      %v1440 = vrot.slane %v1217, %v1439
      %v1441 = vmul.f32 %v1440, %v1417
      %v1442 = vmul.f32 %v1440, %v1418
      %v1443 = vmul.f32 %v1440, %v1419
      %v1444 = vmul.f32 %v1440, %v1420
      %v1445 = vmul.f32 %v1440, %v1421
      %v1446 = vmul.f32 %v1440, %v1422
      %v1447 = vmul.f32 %v1440, %v1423
      %v1448 = vmul.f32 %v1440, %v1424
      %v1449 = vmul.f32 %v1440, %v1425
      %v1450 = vmul.f32 %v1440, %v1426
      %v1451 = vmul.f32 %v1440, %v1427
      %v1452 = vmul.f32 %v1440, %v1428
      %v1453 = vmul.f32 %v1440, %v1429
      %v1454 = vmul.f32 %v1440, %v1430
      %v1455 = vmul.f32 %v1440, %v1431
      %v1456 = vmul.f32 %v1440, %v1432
      %v1457 = vmul.f32 %v1440, %v1433
      %v1458 = vmul.f32 %v1440, %v1434
      %v1459 = vmul.f32 %v1440, %v1435
      %v1460 = vmul.f32 %v1440, %v1436
      %v1461 = vadd.f32 %v1397, %v1441
      %v1462 = vadd.f32 %v1398, %v1442
      %v1463 = vadd.f32 %v1399, %v1443
      %v1464 = vadd.f32 %v1400, %v1444
      %v1465 = vadd.f32 %v1401, %v1445
      %v1466 = vadd.f32 %v1402, %v1446
      %v1467 = vadd.f32 %v1403, %v1447
      %v1468 = vadd.f32 %v1404, %v1448
      %v1469 = vadd.f32 %v1405, %v1449
      %v1470 = vadd.f32 %v1406, %v1450
      %v1471 = vadd.f32 %v1407, %v1451
      %v1472 = vadd.f32 %v1408, %v1452
      %v1473 = vadd.f32 %v1409, %v1453
      %v1474 = vadd.f32 %v1410, %v1454
      %v1475 = vadd.f32 %v1411, %v1455
      %v1476 = vadd.f32 %v1412, %v1456
      %v1477 = vadd.f32 %v1413, %v1457
      %v1478 = vadd.f32 %v1414, %v1458
      %v1479 = vadd.f32 %v1415, %v1459
      %v1480 = vadd.f32 %v1416, %v1460
      %v1481 = vld [vmem:[%s5] sm:$0x1]
      %v1482 = vld [vmem:[%s6] sm:$0x1]
      %v1483 = vsel %vm1175, %v1461, 0.0
      %1484 = vadd.xlane.f32.xlu0 %v1483
      %v1485 = vpop.xlane.xlu0 %1484
      %v1486 = vsel %vm1175, %v1462, 0.0
      %1487 = vadd.xlane.f32.xlu0 %v1486
      %v1488 = vpop.xlane.xlu0 %1487
      %v1489 = vsel %vm1175, %v1463, 0.0
      %1490 = vadd.xlane.f32.xlu0 %v1489
      %v1491 = vpop.xlane.xlu0 %1490
      %v1492 = vsel %vm1175, %v1464, 0.0
      %1493 = vadd.xlane.f32.xlu0 %v1492
      %v1494 = vpop.xlane.xlu0 %1493
      %v1495 = vsel %vm1175, %v1465, 0.0
      %1496 = vadd.xlane.f32.xlu0 %v1495
      %v1497 = vpop.xlane.xlu0 %1496
      %v1498 = vsel %vm1175, %v1466, 0.0
      %1499 = vadd.xlane.f32.xlu0 %v1498
      %v1500 = vpop.xlane.xlu0 %1499
      %v1501 = vsel %vm1175, %v1467, 0.0
      %1502 = vadd.xlane.f32.xlu0 %v1501
      %v1503 = vpop.xlane.xlu0 %1502
      %v1504 = vsel %vm1175, %v1468, 0.0
      %1505 = vadd.xlane.f32.xlu0 %v1504
      %v1506 = vpop.xlane.xlu0 %1505
      %v1507 = vsel %vm1175, %v1469, 0.0
      %1508 = vadd.xlane.f32.xlu0 %v1507
      %v1509 = vpop.xlane.xlu0 %1508
      %v1510 = vsel %vm1175, %v1470, 0.0
      %1511 = vadd.xlane.f32.xlu0 %v1510
      %v1512 = vpop.xlane.xlu0 %1511
      %v1513 = vsel %vm1175, %v1471, 0.0
      %1514 = vadd.xlane.f32.xlu0 %v1513
      %v1515 = vpop.xlane.xlu0 %1514
      %v1516 = vsel %vm1175, %v1472, 0.0
      %1517 = vadd.xlane.f32.xlu0 %v1516
      %v1518 = vpop.xlane.xlu0 %1517
      %v1519 = vsel %vm1175, %v1473, 0.0
      %1520 = vadd.xlane.f32.xlu0 %v1519
      %v1521 = vpop.xlane.xlu0 %1520
      %v1522 = vsel %vm1175, %v1474, 0.0
      %1523 = vadd.xlane.f32.xlu0 %v1522
      %v1524 = vpop.xlane.xlu0 %1523
      %v1525 = vsel %vm1175, %v1475, 0.0
      %1526 = vadd.xlane.f32.xlu0 %v1525
      %v1527 = vpop.xlane.xlu0 %1526
      %v1528 = vsel %vm1175, %v1476, 0.0
      %1529 = vadd.xlane.f32.xlu0 %v1528
      %v1530 = vpop.xlane.xlu0 %1529
      %v1531 = vsel %vm1175, %v1477, 0.0
      %1532 = vadd.xlane.f32.xlu0 %v1531
      %v1533 = vpop.xlane.xlu0 %1532
      %v1534 = vsel %vm1175, %v1478, 0.0
      %1535 = vadd.xlane.f32.xlu0 %v1534
      %v1536 = vpop.xlane.xlu0 %1535
      %v1537 = vsel %vm1175, %v1479, 0.0
      %1538 = vadd.xlane.f32.xlu0 %v1537
      %v1539 = vpop.xlane.xlu0 %1538
      %v1540 = vsel %vm1175, %v1480, 0.0
      %1541 = vadd.xlane.f32.xlu0 %v1540
      %v1542 = vpop.xlane.xlu0 %1541
      %v1543 = vrcp.pop 16.0
      %v1544 = vmul.f32 %v1485, %v1543
      %v1545 = vmul.f32 %v1488, %v1543
      %v1546 = vmul.f32 %v1491, %v1543
      %v1547 = vmul.f32 %v1494, %v1543
      %v1548 = vmul.f32 %v1497, %v1543
      %v1549 = vmul.f32 %v1500, %v1543
      %v1550 = vmul.f32 %v1503, %v1543
      %v1551 = vmul.f32 %v1506, %v1543
      %v1552 = vmul.f32 %v1509, %v1543
      %v1553 = vmul.f32 %v1512, %v1543
      %v1554 = vmul.f32 %v1515, %v1543
      %v1555 = vmul.f32 %v1518, %v1543
      %v1556 = vmul.f32 %v1521, %v1543
      %v1557 = vmul.f32 %v1524, %v1543
      %v1558 = vmul.f32 %v1527, %v1543
      %v1559 = vmul.f32 %v1530, %v1543
      %v1560 = vmul.f32 %v1533, %v1543
      %v1561 = vmul.f32 %v1536, %v1543
      %v1562 = vmul.f32 %v1539, %v1543
      %v1563 = vmul.f32 %v1542, %v1543
      %v1564 = vsub.f32 %v1461, %v1544
      %v1565 = vsub.f32 %v1462, %v1545
      %v1566 = vsub.f32 %v1463, %v1546
      %v1567 = vsub.f32 %v1464, %v1547
      %v1568 = vsub.f32 %v1465, %v1548
      %v1569 = vsub.f32 %v1466, %v1549
      %v1570 = vsub.f32 %v1467, %v1550
      %v1571 = vsub.f32 %v1468, %v1551
      %v1572 = vsub.f32 %v1469, %v1552
      %v1573 = vsub.f32 %v1470, %v1553
      %v1574 = vsub.f32 %v1471, %v1554
      %v1575 = vsub.f32 %v1472, %v1555
      %v1576 = vsub.f32 %v1473, %v1556
      %v1577 = vsub.f32 %v1474, %v1557
      %v1578 = vsub.f32 %v1475, %v1558
      %v1579 = vsub.f32 %v1476, %v1559
      %v1580 = vsub.f32 %v1477, %v1560
      %v1581 = vsub.f32 %v1478, %v1561
      %v1582 = vsub.f32 %v1479, %v1562
      %v1583 = vsub.f32 %v1480, %v1563
      %v1584 = vmul.f32 %v1564, %v1564
      %v1585 = vmul.f32 %v1565, %v1565
      %v1586 = vmul.f32 %v1566, %v1566
      %v1587 = vmul.f32 %v1567, %v1567
      %v1588 = vmul.f32 %v1568, %v1568
      %v1589 = vmul.f32 %v1569, %v1569
      %v1590 = vmul.f32 %v1570, %v1570
      %v1591 = vmul.f32 %v1571, %v1571
      %v1592 = vmul.f32 %v1572, %v1572
      %v1593 = vmul.f32 %v1573, %v1573
      %v1594 = vmul.f32 %v1574, %v1574
      %v1595 = vmul.f32 %v1575, %v1575
      %v1596 = vmul.f32 %v1576, %v1576
      %v1597 = vmul.f32 %v1577, %v1577
      %v1598 = vmul.f32 %v1578, %v1578
      %v1599 = vmul.f32 %v1579, %v1579
      %v1600 = vmul.f32 %v1580, %v1580
      %v1601 = vmul.f32 %v1581, %v1581
      %v1602 = vmul.f32 %v1582, %v1582
      %v1603 = vmul.f32 %v1583, %v1583
      %v1604 = vsel %vm1175, %v1584, 0.0
      %1605 = vadd.xlane.f32.xlu0 %v1604
      %v1606 = vpop.xlane.xlu0 %1605
      %v1607 = vsel %vm1175, %v1585, 0.0
      %1608 = vadd.xlane.f32.xlu0 %v1607
      %v1609 = vpop.xlane.xlu0 %1608
      %v1610 = vsel %vm1175, %v1586, 0.0
      %1611 = vadd.xlane.f32.xlu0 %v1610
      %v1612 = vpop.xlane.xlu0 %1611
      %v1613 = vsel %vm1175, %v1587, 0.0
      %1614 = vadd.xlane.f32.xlu0 %v1613
      %v1615 = vpop.xlane.xlu0 %1614
      %v1616 = vsel %vm1175, %v1588, 0.0
      %1617 = vadd.xlane.f32.xlu0 %v1616
      %v1618 = vpop.xlane.xlu0 %1617
      %v1619 = vsel %vm1175, %v1589, 0.0
      %1620 = vadd.xlane.f32.xlu0 %v1619
      %v1621 = vpop.xlane.xlu0 %1620
      %v1622 = vsel %vm1175, %v1590, 0.0
      %1623 = vadd.xlane.f32.xlu0 %v1622
      %v1624 = vpop.xlane.xlu0 %1623
      %v1625 = vsel %vm1175, %v1591, 0.0
      %1626 = vadd.xlane.f32.xlu0 %v1625
      %v1627 = vpop.xlane.xlu0 %1626
      %v1628 = vsel %vm1175, %v1592, 0.0
      %1629 = vadd.xlane.f32.xlu0 %v1628
      %v1630 = vpop.xlane.xlu0 %1629
      %v1631 = vsel %vm1175, %v1593, 0.0
      %1632 = vadd.xlane.f32.xlu0 %v1631
      %v1633 = vpop.xlane.xlu0 %1632
      %v1634 = vsel %vm1175, %v1594, 0.0
      %1635 = vadd.xlane.f32.xlu0 %v1634
      %v1636 = vpop.xlane.xlu0 %1635
      %v1637 = vsel %vm1175, %v1595, 0.0
      %1638 = vadd.xlane.f32.xlu0 %v1637
      %v1639 = vpop.xlane.xlu0 %1638
      %v1640 = vsel %vm1175, %v1596, 0.0
      %1641 = vadd.xlane.f32.xlu0 %v1640
      %v1642 = vpop.xlane.xlu0 %1641
      %v1643 = vsel %vm1175, %v1597, 0.0
      %1644 = vadd.xlane.f32.xlu0 %v1643
      %v1645 = vpop.xlane.xlu0 %1644
      %v1646 = vsel %vm1175, %v1598, 0.0
      %1647 = vadd.xlane.f32.xlu0 %v1646
      %v1648 = vpop.xlane.xlu0 %1647
      %v1649 = vsel %vm1175, %v1599, 0.0
      %1650 = vadd.xlane.f32.xlu0 %v1649
      %v1651 = vpop.xlane.xlu0 %1650
      %v1652 = vsel %vm1175, %v1600, 0.0
      %1653 = vadd.xlane.f32.xlu0 %v1652
      %v1654 = vpop.xlane.xlu0 %1653
      %v1655 = vsel %vm1175, %v1601, 0.0
      %1656 = vadd.xlane.f32.xlu0 %v1655
      %v1657 = vpop.xlane.xlu0 %1656
      %v1658 = vsel %vm1175, %v1602, 0.0
      %1659 = vadd.xlane.f32.xlu0 %v1658
      %v1660 = vpop.xlane.xlu0 %1659
      %v1661 = vsel %vm1175, %v1603, 0.0
      %1662 = vadd.xlane.f32.xlu0 %v1661
      %v1663 = vpop.xlane.xlu0 %1662
      %v1664 = vmul.f32 %v1606, %v1543
      %v1665 = vmul.f32 %v1609, %v1543
      %v1666 = vmul.f32 %v1612, %v1543
      %v1667 = vmul.f32 %v1615, %v1543
      %v1668 = vmul.f32 %v1618, %v1543
      %v1669 = vmul.f32 %v1621, %v1543
      %v1670 = vmul.f32 %v1624, %v1543
      %v1671 = vmul.f32 %v1627, %v1543
      %v1672 = vmul.f32 %v1630, %v1543
      %v1673 = vmul.f32 %v1633, %v1543
      %v1674 = vmul.f32 %v1636, %v1543
      %v1675 = vmul.f32 %v1639, %v1543
      %v1676 = vmul.f32 %v1642, %v1543
      %v1677 = vmul.f32 %v1645, %v1543
      %v1678 = vmul.f32 %v1648, %v1543
      %v1679 = vmul.f32 %v1651, %v1543
      %v1680 = vmul.f32 %v1654, %v1543
      %v1681 = vmul.f32 %v1657, %v1543
      %v1682 = vmul.f32 %v1660, %v1543
      %v1683 = vmul.f32 %v1663, %v1543
      %v1684 = vadd.f32 %v1664, 1e-05
      %v1685 = vadd.f32 %v1665, 1e-05
      %v1686 = vadd.f32 %v1666, 1e-05
      %v1687 = vadd.f32 %v1667, 1e-05
      %v1688 = vadd.f32 %v1668, 1e-05
      %v1689 = vadd.f32 %v1669, 1e-05
      %v1690 = vadd.f32 %v1670, 1e-05
      %v1691 = vadd.f32 %v1671, 1e-05
      %v1692 = vadd.f32 %v1672, 1e-05
      %v1693 = vadd.f32 %v1673, 1e-05
      %v1694 = vadd.f32 %v1674, 1e-05
      %v1695 = vadd.f32 %v1675, 1e-05
      %v1696 = vadd.f32 %v1676, 1e-05
      %v1697 = vadd.f32 %v1677, 1e-05
      %v1698 = vadd.f32 %v1678, 1e-05
      %v1699 = vadd.f32 %v1679, 1e-05
      %v1700 = vadd.f32 %v1680, 1e-05
      %v1701 = vadd.f32 %v1681, 1e-05
      %v1702 = vadd.f32 %v1682, 1e-05
      %v1703 = vadd.f32 %v1683, 1e-05
      %v1704 = vrsqrt.pop %v1684
      %v1705 = vrsqrt.pop %v1685
      %v1706 = vrsqrt.pop %v1686
      %v1707 = vrsqrt.pop %v1687
      %v1708 = vrsqrt.pop %v1688
      %v1709 = vrsqrt.pop %v1689
      %v1710 = vrsqrt.pop %v1690
      %v1711 = vrsqrt.pop %v1691
      %v1712 = vrsqrt.pop %v1692
      %v1713 = vrsqrt.pop %v1693
      %v1714 = vrsqrt.pop %v1694
      %v1715 = vrsqrt.pop %v1695
      %v1716 = vrsqrt.pop %v1696
      %v1717 = vrsqrt.pop %v1697
      %v1718 = vrsqrt.pop %v1698
      %v1719 = vrsqrt.pop %v1699
      %v1720 = vrsqrt.pop %v1700
      %v1721 = vrsqrt.pop %v1701
      %v1722 = vrsqrt.pop %v1702
      %v1723 = vrsqrt.pop %v1703
      %v1724 = vmul.f32 %v1564, %v1704
      %v1725 = vmul.f32 %v1565, %v1705
      %v1726 = vmul.f32 %v1566, %v1706
      %v1727 = vmul.f32 %v1567, %v1707
      %v1728 = vmul.f32 %v1568, %v1708
      %v1729 = vmul.f32 %v1569, %v1709
      %v1730 = vmul.f32 %v1570, %v1710
      %v1731 = vmul.f32 %v1571, %v1711
      %v1732 = vmul.f32 %v1572, %v1712
      %v1733 = vmul.f32 %v1573, %v1713
      %v1734 = vmul.f32 %v1574, %v1714
      %v1735 = vmul.f32 %v1575, %v1715
      %v1736 = vmul.f32 %v1576, %v1716
      %v1737 = vmul.f32 %v1577, %v1717
      %v1738 = vmul.f32 %v1578, %v1718
      %v1739 = vmul.f32 %v1579, %v1719
      %v1740 = vmul.f32 %v1580, %v1720
      %v1741 = vmul.f32 %v1581, %v1721
      %v1742 = vmul.f32 %v1582, %v1722
      %v1743 = vmul.f32 %v1583, %v1723
      %v1745 = vlaneseq
      %v1746 = vshrl.u32 %v1745, 7
      %v1747 = vsub.s32 0, %v1746
      %v1748 = vrot.slane %v1481, %v1747
      %v1750 = vmul.f32 %v1724, %v1748
      %v1751 = vmul.f32 %v1725, %v1748
      %v1752 = vmul.f32 %v1726, %v1748
      %v1753 = vmul.f32 %v1727, %v1748
      %v1754 = vmul.f32 %v1728, %v1748
      %v1755 = vmul.f32 %v1729, %v1748
      %v1756 = vmul.f32 %v1730, %v1748
      %v1757 = vmul.f32 %v1731, %v1748
      %v1758 = vmul.f32 %v1732, %v1748
      %v1759 = vmul.f32 %v1733, %v1748
      %v1760 = vmul.f32 %v1734, %v1748
      %v1761 = vmul.f32 %v1735, %v1748
      %v1762 = vmul.f32 %v1736, %v1748
      %v1763 = vmul.f32 %v1737, %v1748
      %v1764 = vmul.f32 %v1738, %v1748
      %v1765 = vmul.f32 %v1739, %v1748
      %v1766 = vmul.f32 %v1740, %v1748
      %v1767 = vmul.f32 %v1741, %v1748
      %v1768 = vmul.f32 %v1742, %v1748
      %v1769 = vmul.f32 %v1743, %v1748
      %v1771 = vlaneseq
      %v1772 = vshrl.u32 %v1771, 7
      %v1773 = vsub.s32 0, %v1772
      %v1774 = vrot.slane %v1482, %v1773
      %v1776 = vadd.f32 %v1750, %v1774
      %v1777 = vadd.f32 %v1751, %v1774
      %v1778 = vadd.f32 %v1752, %v1774
      %v1779 = vadd.f32 %v1753, %v1774
      %v1780 = vadd.f32 %v1754, %v1774
      %v1781 = vadd.f32 %v1755, %v1774
      %v1782 = vadd.f32 %v1756, %v1774
      %v1783 = vadd.f32 %v1757, %v1774
      %v1784 = vadd.f32 %v1758, %v1774
      %v1785 = vadd.f32 %v1759, %v1774
      %v1786 = vadd.f32 %v1760, %v1774
      %v1787 = vadd.f32 %v1761, %v1774
      %v1788 = vadd.f32 %v1762, %v1774
      %v1789 = vadd.f32 %v1763, %v1774
      %v1790 = vadd.f32 %v1764, %v1774
      %v1791 = vadd.f32 %v1765, %v1774
      %v1792 = vadd.f32 %v1766, %v1774
      %v1793 = vadd.f32 %v1767, %v1774
      %v1794 = vadd.f32 %v1768, %v1774
      %v1795 = vadd.f32 %v1769, %v1774
      %v1796 = vpack.c.bf16 %v1777, %v1776
      %v1797 = vpack.c.bf16 %v1779, %v1778
      %v1798 = vpack.c.bf16 %v1781, %v1780
      %v1799 = vpack.c.bf16 %v1783, %v1782
      %v1800 = vpack.c.bf16 %v1785, %v1784
      %v1801 = vpack.c.bf16 %v1787, %v1786
      %v1802 = vpack.c.bf16 %v1789, %v1788
      %v1803 = vpack.c.bf16 %v1791, %v1790
      %v1804 = vpack.c.bf16 %v1793, %v1792
      %v1805 = vpack.c.bf16 %v1795, %v1794
      %v1816 = vunpack.c.l.b16 %v1796
      %v1817 = vunpack.c.h.b16 %v1796
      %v1818 = vunpack.c.l.b16 %v1797
      %v1819 = vunpack.c.h.b16 %v1797
      %v1820 = vunpack.c.l.b16 %v1798
      %v1821 = vunpack.c.h.b16 %v1798
      %v1822 = vunpack.c.l.b16 %v1799
      %v1823 = vunpack.c.h.b16 %v1799
      %v1824 = vunpack.c.l.b16 %v1800
      %v1825 = vunpack.c.h.b16 %v1800
      %v1826 = vunpack.c.l.b16 %v1801
      %v1827 = vunpack.c.h.b16 %v1801
      %v1828 = vunpack.c.l.b16 %v1802
      %v1829 = vunpack.c.h.b16 %v1802
      %v1830 = vunpack.c.l.b16 %v1803
      %v1831 = vunpack.c.h.b16 %v1803
      %v1832 = vunpack.c.l.b16 %v1804
      %v1833 = vunpack.c.h.b16 %v1804
      %v1834 = vunpack.c.l.b16 %v1805
      %v1835 = vunpack.c.h.b16 %v1805
      %v1836 = vpack.c.b16 %v1816, %v1816
      %v1837 = vpack.c.b16 %v1817, %v1817
      %v1838 = vpack.c.b16 %v1818, %v1818
      %v1839 = vpack.c.b16 %v1819, %v1819
      %v1840 = vpack.c.b16 %v1820, %v1820
      %v1841 = vpack.c.b16 %v1821, %v1821
      %v1842 = vpack.c.b16 %v1822, %v1822
      %v1843 = vpack.c.b16 %v1823, %v1823
      %v1844 = vpack.c.b16 %v1824, %v1824
      %v1845 = vpack.c.b16 %v1825, %v1825
      %v1846 = vpack.c.b16 %v1826, %v1826
      %v1847 = vpack.c.b16 %v1827, %v1827
      %v1848 = vpack.c.b16 %v1828, %v1828
      %v1849 = vpack.c.b16 %v1829, %v1829
      %v1850 = vpack.c.b16 %v1830, %v1830
      %v1851 = vpack.c.b16 %v1831, %v1831
      %v1852 = vpack.c.b16 %v1832, %v1832
      %v1853 = vpack.c.b16 %v1833, %v1833
      %v1854 = vpack.c.b16 %v1834, %v1834
      %v1855 = vpack.c.b16 %v1835, %v1835
      %vm1876 = vcmask 125952
      %1877 = vst.msk [vmem:[#allocation3] sm:$0xf] %vm1876, %v1836
      %1878 = vst.msk [vmem:[#allocation3 + $0x4] sm:$0xf] %vm1876, %v1837
      %1879 = vst.msk [vmem:[#allocation3 + $0x8] sm:$0xf] %vm1876, %v1838
      %1880 = vst.msk [vmem:[#allocation3 + $0xc] sm:$0xf] %vm1876, %v1839
      %1881 = vst.msk [vmem:[#allocation3 + $0x10] sm:$0xf] %vm1876, %v1840
      %1882 = vst.msk [vmem:[#allocation3 + $0x14] sm:$0xf] %vm1876, %v1841
      %1883 = vst.msk [vmem:[#allocation3 + $0x18] sm:$0xf] %vm1876, %v1842
      %1884 = vst.msk [vmem:[#allocation3 + $0x1c] sm:$0xf] %vm1876, %v1843
      %1885 = vst.msk [vmem:[#allocation3 + $0x20] sm:$0xf] %vm1876, %v1844
      %1886 = vst.msk [vmem:[#allocation3 + $0x24] sm:$0xf] %vm1876, %v1845
      %1887 = vst.msk [vmem:[#allocation3 + $0x28] sm:$0xf] %vm1876, %v1846
      %1888 = vst.msk [vmem:[#allocation3 + $0x2c] sm:$0xf] %vm1876, %v1847
      %1889 = vst.msk [vmem:[#allocation3 + $0x30] sm:$0xf] %vm1876, %v1848
      %1890 = vst.msk [vmem:[#allocation3 + $0x34] sm:$0xf] %vm1876, %v1849
      %1891 = vst.msk [vmem:[#allocation3 + $0x38] sm:$0xf] %vm1876, %v1850
      %1892 = vst.msk [vmem:[#allocation3 + $0x3c] sm:$0xf] %vm1876, %v1851
      %1893 = vst.msk [vmem:[#allocation3 + $0x40] sm:$0xf] %vm1876, %v1852
      %1894 = vst.msk [vmem:[#allocation3 + $0x44] sm:$0xf] %vm1876, %v1853
      %1895 = vst.msk [vmem:[#allocation3 + $0x48] sm:$0xf] %vm1876, %v1854
      %1896 = vst.msk [vmem:[#allocation3 + $0x4c] sm:$0xf] %vm1876, %v1855
      %1917 = vrot.lane.b32.xlu0 %v1461, 112
      %v1918 = vpop.permute.xlu0 %1917
      %1919 = vrot.lane.b32.xlu0 %v1462, 112
      %v1920 = vpop.permute.xlu0 %1919
      %1921 = vrot.lane.b32.xlu0 %v1463, 112
      %v1922 = vpop.permute.xlu0 %1921
      %1923 = vrot.lane.b32.xlu0 %v1464, 112
      %v1924 = vpop.permute.xlu0 %1923
      %1925 = vrot.lane.b32.xlu0 %v1465, 112
      %v1926 = vpop.permute.xlu0 %1925
      %1927 = vrot.lane.b32.xlu0 %v1466, 112
      %v1928 = vpop.permute.xlu0 %1927
      %1929 = vrot.lane.b32.xlu0 %v1467, 112
      %v1930 = vpop.permute.xlu0 %1929
      %1931 = vrot.lane.b32.xlu0 %v1468, 112
      %v1932 = vpop.permute.xlu0 %1931
      %1933 = vrot.lane.b32.xlu0 %v1469, 112
      %v1934 = vpop.permute.xlu0 %1933
      %1935 = vrot.lane.b32.xlu0 %v1470, 112
      %v1936 = vpop.permute.xlu0 %1935
      %1937 = vrot.lane.b32.xlu0 %v1471, 112
      %v1938 = vpop.permute.xlu0 %1937
      %1939 = vrot.lane.b32.xlu0 %v1472, 112
      %v1940 = vpop.permute.xlu0 %1939
      %1941 = vrot.lane.b32.xlu0 %v1473, 112
      %v1942 = vpop.permute.xlu0 %1941
      %1943 = vrot.lane.b32.xlu0 %v1474, 112
      %v1944 = vpop.permute.xlu0 %1943
      %1945 = vrot.lane.b32.xlu0 %v1475, 112
      %v1946 = vpop.permute.xlu0 %1945
      %1947 = vrot.lane.b32.xlu0 %v1476, 112
      %v1948 = vpop.permute.xlu0 %1947
      %1949 = vrot.lane.b32.xlu0 %v1477, 112
      %v1950 = vpop.permute.xlu0 %1949
      %1951 = vrot.lane.b32.xlu0 %v1478, 112
      %v1952 = vpop.permute.xlu0 %1951
      %1953 = vrot.lane.b32.xlu0 %v1479, 112
      %v1954 = vpop.permute.xlu0 %1953
      %1955 = vrot.lane.b32.xlu0 %v1480, 112
      %v1956 = vpop.permute.xlu0 %1955
      %1977 = vst.msk [vmem:[#allocation4] sm:$0xff] %vm1175, %v1918
      %1978 = vst.msk [vmem:[#allocation4 + $0x8] sm:$0xff] %vm1175, %v1920
      %1979 = vst.msk [vmem:[#allocation4 + $0x10] sm:$0xff] %vm1175, %v1922
      %1980 = vst.msk [vmem:[#allocation4 + $0x18] sm:$0xff] %vm1175, %v1924
      %1981 = vst.msk [vmem:[#allocation4 + $0x20] sm:$0xff] %vm1175, %v1926
      %1982 = vst.msk [vmem:[#allocation4 + $0x28] sm:$0xff] %vm1175, %v1928
      %1983 = vst.msk [vmem:[#allocation4 + $0x30] sm:$0xff] %vm1175, %v1930
      %1984 = vst.msk [vmem:[#allocation4 + $0x38] sm:$0xff] %vm1175, %v1932
      %1985 = vst.msk [vmem:[#allocation4 + $0x40] sm:$0xff] %vm1175, %v1934
      %1986 = vst.msk [vmem:[#allocation4 + $0x48] sm:$0xff] %vm1175, %v1936
      %1987 = vst.msk [vmem:[#allocation4 + $0x50] sm:$0xff] %vm1175, %v1938
      %1988 = vst.msk [vmem:[#allocation4 + $0x58] sm:$0xff] %vm1175, %v1940
      %1989 = vst.msk [vmem:[#allocation4 + $0x60] sm:$0xff] %vm1175, %v1942
      %1990 = vst.msk [vmem:[#allocation4 + $0x68] sm:$0xff] %vm1175, %v1944
      %1991 = vst.msk [vmem:[#allocation4 + $0x70] sm:$0xff] %vm1175, %v1946
      %1992 = vst.msk [vmem:[#allocation4 + $0x78] sm:$0xff] %vm1175, %v1948
      %1993 = vst.msk [vmem:[#allocation4 + $0x80] sm:$0xff] %vm1175, %v1950
      %1994 = vst.msk [vmem:[#allocation4 + $0x88] sm:$0xff] %vm1175, %v1952
      %1995 = vst.msk [vmem:[#allocation4 + $0x90] sm:$0xff] %vm1175, %v1954
      %1996 = vst.msk [vmem:[#allocation4 + $0x98] sm:$0xff] %vm1175, %v1956
      %v1998 = vrot.slane %v422, 7
      %v2001 = vrot.slane %v430, 6
      %v2004 = vrot.slane %v434, 5
      %vm2006 = vcmask 1040384
      %v2007 = vsel %vm2006, %v1998, %v2001
      %vm2008 = vcmask 1041408
      %v2009 = vsel %vm2008, %v2007, %v2004
      %v2010 = vld [vmem:[%s2] sm:$0xff]
      %v2011 = vld [vmem:[%s2 + $0x8] sm:$0xff]
      %v2012 = vld [vmem:[%s2 + $0x10] sm:$0xff]
      %v2013 = vld [vmem:[%s2 + $0x18] sm:$0xff]
      %v2014 = vpack.c.bf16 %v2009, %v2009
      %v2015 = vpack.c.bf16 %v2011, %v2010
      %v2016 = vpack.c.bf16 %v2013, %v2012
      %v2018 = vsel %vm451, %v2014, 0
      %2020 = vmatprep.subr.bf16.mxu0 0
      %2021 = vmatpush1.bf16.msra.mxu0 0
      %2022 = vmatprep.subr.bf16.mxu0 0
      %2023 = vmatpush1.bf16.msra.mxu0 0
      %2024 = vmatprep.subr.bf16.mxu0 0
      %2025 = vmatpush1.bf16.msra.mxu0 0
      %2026 = vmatprep.subr.bf16.mxu0 0
      %2027 = vmatpush1.bf16.msra.mxu0 0
      %2028 = vmatprep.subr.bf16.mxu0 0
      %2029 = vmatpush1.bf16.msra.mxu0 0
      %2030 = vmatprep.subr.bf16.mxu0 0
      %2031 = vmatpush1.bf16.msra.mxu0 0
      %2032 = vmatprep.subr.bf16.mxu0 0
      %2033 = vmatpush1.bf16.msra.mxu0 %v2016
      %2034 = vmatprep.subr.bf16.mxu0 0
      %2035 = vmatpush1.bf16.msra.mxu0 %v2015
      %2036 = vmatprep.subr.bf16.mxu0 0
      %2037 = vmatpush2.bf16.msra.mxu0 0
      %2038 = vmatprep.subr.bf16.mxu0 0
      %2039 = vmatpush2.bf16.msra.mxu0 0
      %2040 = vmatprep.subr.bf16.mxu0 0
      %2041 = vmatpush2.bf16.msra.mxu0 0
      %2042 = vmatprep.subr.bf16.mxu0 0
      %2043 = vmatpush2.bf16.msra.mxu0 0
      %2044 = vmatprep.subr.bf16.mxu0 0
      %2045 = vmatpush2.bf16.msra.mxu0 0
      %2046 = vmatprep.subr.bf16.mxu0 0
      %2047 = vmatpush2.bf16.msra.mxu0 0
      %2048 = vmatprep.subr.bf16.mxu0 0
      %2049 = vmatpush2.bf16.msra.mxu0 0
      %2050 = vmatprep.subr.bf16.mxu0 0
      %2051 = vmatpush2.bf16.msra.mxu0 0
      %2052 = vmatprep.mubr.bf16.mxu0 0
      %2053 = vmatmul.mubr.bf16.gmra.mxu0 %v2018
      %v2054 = vpop.f32.mrf.mxu0
      %v2055 = vadd.f32 0.0, %v2054
      %v2056 = vpop.f32.mrf.mxu0
      %v2057 = vpop.f32.mrf.mxu0
      %v2058 = vpop.f32.mrf.mxu0
      %2059 = vdwg.mxu0
      %v2060 = vlaneseq
      %v2061 = vand.u32 %v2060, 127
      %vm2062 = vcmp.lt.s32.totalorder %v2061, 16
      %vm2063 = vcmp.gt.f32.partialorder %v2055, 20.0
      %v2064 = vmin.f32 %v2055, 20.0
      %v2065 = vmul.f32 %v2064, 1.442695
      %v2066 = vpow.pop %v2065
      %v2067 = vadd.f32 %v2066, 1.0
      %v2068 = vlog2.pop %v2067
      %v2069 = vmul.f32 %v2068, 0.6931472
      %v2070 = vmul.f32 -0.5, %v2066
      %v2071 = vadd.f32 %v2070, 1.0
      %v2072 = vmul.f32 %v2071, %v2066
      %v2073 = vand.u32 2147483647, %v2066
      %vm2074 = vcmp.lt.f32.partialorder %v2073, 0.0004427343
      %v2075 = vsel %vm2074, %v2072, %v2069
      %v2076 = vsel %vm2063, %v2055, %v2075
      %v2077 = vxor.u32 %v2055, 2147483648
      %v2078 = vmul.f32 %v2077, 1.442695
      %v2079 = vpow.pop %v2078
      %v2080 = vadd.f32 %v2079, 1.0
      %v2081 = vrcp.pop %v2080
      %v2082 = vmul.f32 1.0, %v2081
      %v2083 = vsel %vm2062, %v2076, %v2082
      %vm2084 = vcmask 256000
      %2085 = vst.msk [vmem:[#allocation7] sm:$0x7] %vm2084, %v2083
      %v2086 = vld [vmem:[%s7] sm:$0xff]
      %v2087 = vld [vmem:[%s7 + $0x8] sm:$0xff]
      %v2088 = vpack.c.bf16 %v2087, %v2086
      %v2089 = vld [vmem:[%s8] sm:$0xff]
      %v2090 = vld [vmem:[%s8 + $0x8] sm:$0xff]
      %v2091 = vld [vmem:[%s9] sm:$0x1]
      %v2092 = vld [vmem:[%s10] sm:$0xff]
      %v2093 = vld [vmem:[%s10 + $0x8] sm:$0xff]
      %v2094 = vld [vmem:[%s10 + $0x10] sm:$0xff]
      %v2095 = vld [vmem:[%s10 + $0x18] sm:$0xff]
      %v2096 = vld [vmem:[%s11] sm:$0x1]
      %v2097 = vld [vmem:[#allocation3] sm:$0xf]
      %v2098 = vld [vmem:[#allocation3 + $0x4] sm:$0xf]
      %v2099 = vld [vmem:[#allocation3 + $0x8] sm:$0xf]
      %v2100 = vld [vmem:[#allocation3 + $0xc] sm:$0xf]
      %v2101 = vld [vmem:[#allocation3 + $0x10] sm:$0xf]
      %v2102 = vld [vmem:[#allocation3 + $0x14] sm:$0xf]
      %v2103 = vld [vmem:[#allocation3 + $0x18] sm:$0xf]
      %v2104 = vld [vmem:[#allocation3 + $0x1c] sm:$0xf]
      %v2105 = vld [vmem:[#allocation4] sm:$0xff]
      %v2106 = vld [vmem:[#allocation4 + $0x8] sm:$0xff]
      %v2107 = vld [vmem:[#allocation4 + $0x10] sm:$0xff]
      %v2108 = vld [vmem:[#allocation4 + $0x18] sm:$0xff]
      %v2109 = vld [vmem:[#allocation4 + $0x20] sm:$0xff]
      %v2110 = vld [vmem:[#allocation4 + $0x28] sm:$0xff]
      %v2111 = vld [vmem:[#allocation4 + $0x30] sm:$0xff]
      %v2112 = vld [vmem:[#allocation4 + $0x38] sm:$0xff]
      %v2113 = vld [vmem:[#allocation5] sm:$0xff]
      %v2114 = vld [vmem:[#allocation5 + $0x8] sm:$0xff]
      %v2115 = vld [vmem:[#allocation5 + $0x10] sm:$0xff]
      %v2116 = vld [vmem:[#allocation5 + $0x18] sm:$0xff]
      %v2117 = vld [vmem:[#allocation5 + $0x20] sm:$0xff]
      %v2118 = vld [vmem:[#allocation5 + $0x28] sm:$0xff]
      %v2119 = vld [vmem:[#allocation5 + $0x30] sm:$0xff]
      %v2120 = vld [vmem:[#allocation5 + $0x38] sm:$0xff]
      %v2121 = vld [vmem:[#allocation7] sm:$0x1]
      %v2122 = vpack.c.bf16 %v2090, %v2089
      %v2124 = vlaneseq
      %v2125 = vshrl.u32 %v2124, 7
      %v2126 = vsub.s32 0, %v2125
      %v2127 = vrot.slane %v2091, %v2126
      %v2137 = vunpack.c.l.b16 %v2097
      %v2138 = vunpack.c.l.b16 %v2098
      %v2139 = vunpack.c.l.b16 %v2099
      %v2140 = vunpack.c.l.b16 %v2100
      %v2141 = vunpack.c.l.b16 %v2101
      %v2142 = vunpack.c.l.b16 %v2102
      %v2143 = vunpack.c.l.b16 %v2103
      %v2144 = vunpack.c.l.b16 %v2104
      %v2145 = vpack.c.b16 %v2138, %v2137
      %v2146 = vpack.c.b16 %v2140, %v2139
      %v2147 = vpack.c.b16 %v2142, %v2141
      %v2148 = vpack.c.b16 %v2144, %v2143
      %v2150 = vsel %vm1175, %v2145, 0
      %v2153 = vsel %vm1175, %v2146, 0
      %v2156 = vsel %vm1175, %v2147, 0
      %v2159 = vsel %vm1175, %v2148, 0
      %2161 = vmatprep.subr.bf16.mxu0 0
      %2162 = vmatpush1.bf16.msra.mxu0 0
      %2163 = vmatprep.subr.bf16.mxu0 0
      %2164 = vmatpush1.bf16.msra.mxu0 0
      %2165 = vmatprep.subr.bf16.mxu0 0
      %2166 = vmatpush1.bf16.msra.mxu0 0
      %2167 = vmatprep.subr.bf16.mxu0 0
      %2168 = vmatpush1.bf16.msra.mxu0 0
      %2169 = vmatprep.subr.bf16.mxu0 0
      %2170 = vmatpush1.bf16.msra.mxu0 0
      %2171 = vmatprep.subr.bf16.mxu0 0
      %2172 = vmatpush1.bf16.msra.mxu0 0
      %2173 = vmatprep.subr.bf16.mxu0 0
      %2174 = vmatpush1.bf16.msra.mxu0 0
      %2175 = vmatprep.subr.bf16.mxu0 0
      %2176 = vmatpush1.bf16.msra.mxu0 %v2122
      %2177 = vmatprep.subr.bf16.mxu0 0
      %2178 = vmatpush2.bf16.msra.mxu0 0
      %2179 = vmatprep.subr.bf16.mxu0 0
      %2180 = vmatpush2.bf16.msra.mxu0 0
      %2181 = vmatprep.subr.bf16.mxu0 0
      %2182 = vmatpush2.bf16.msra.mxu0 0
      %2183 = vmatprep.subr.bf16.mxu0 0
      %2184 = vmatpush2.bf16.msra.mxu0 0
      %2185 = vmatprep.subr.bf16.mxu0 0
      %2186 = vmatpush2.bf16.msra.mxu0 0
      %2187 = vmatprep.subr.bf16.mxu0 0
      %2188 = vmatpush2.bf16.msra.mxu0 0
      %2189 = vmatprep.subr.bf16.mxu0 0
      %2190 = vmatpush2.bf16.msra.mxu0 0
      %2191 = vmatprep.subr.bf16.mxu0 0
      %2192 = vmatpush2.bf16.msra.mxu0 0
      %2193 = vmatprep.mubr.bf16.mxu0 0
      %2194 = vmatmul.mubr.bf16.gmra.mxu0 %v2150
      %v2195 = vpop.f32.mrf.mxu0
      %v2196 = vadd.f32 %v2127, %v2195
      %v2197 = vpop.f32.mrf.mxu0
      %v2198 = vpop.f32.mrf.mxu0
      %v2199 = vadd.f32 %v2127, %v2198
      %v2200 = vpop.f32.mrf.mxu0
      %2201 = vmatprep.mubr.bf16.mxu0 0
      %2202 = vmatmul.mubr.bf16.gmra.mxu0 %v2153
      %v2203 = vpop.f32.mrf.mxu0
      %v2204 = vadd.f32 %v2127, %v2203
      %v2205 = vpop.f32.mrf.mxu0
      %v2206 = vpop.f32.mrf.mxu0
      %v2207 = vadd.f32 %v2127, %v2206
      %v2208 = vpop.f32.mrf.mxu0
      %2209 = vmatprep.mubr.bf16.mxu0 0
      %2210 = vmatmul.mubr.bf16.gmra.mxu0 %v2156
      %v2211 = vpop.f32.mrf.mxu0
      %v2212 = vadd.f32 %v2127, %v2211
      %v2213 = vpop.f32.mrf.mxu0
      %v2214 = vpop.f32.mrf.mxu0
      %v2215 = vadd.f32 %v2127, %v2214
      %v2216 = vpop.f32.mrf.mxu0
      %2217 = vmatprep.mubr.bf16.mxu0 0
      %2218 = vmatmul.mubr.bf16.gmra.mxu0 %v2159
      %v2219 = vpop.f32.mrf.mxu0
      %v2220 = vadd.f32 %v2127, %v2219
      %v2221 = vpop.f32.mrf.mxu0
      %v2222 = vpop.f32.mrf.mxu0
      %v2223 = vadd.f32 %v2127, %v2222
      %v2224 = vpop.f32.mrf.mxu0
      %2225 = vdwg.mxu0
      %v2226 = vmul.f32 %v2196, 0.5
      %v2227 = vmul.f32 %v2199, 0.5
      %v2228 = vmul.f32 %v2204, 0.5
      %v2229 = vmul.f32 %v2207, 0.5
      %v2230 = vmul.f32 %v2212, 0.5
      %v2231 = vmul.f32 %v2215, 0.5
      %v2232 = vmul.f32 %v2220, 0.5
      %v2233 = vmul.f32 %v2223, 0.5
      %v2234 = vmul.f32 %v2196, 0.70710677
      %v2235 = vmul.f32 %v2199, 0.70710677
      %v2236 = vmul.f32 %v2204, 0.70710677
      %v2237 = vmul.f32 %v2207, 0.70710677
      %v2238 = vmul.f32 %v2212, 0.70710677
      %v2239 = vmul.f32 %v2215, 0.70710677
      %v2240 = vmul.f32 %v2220, 0.70710677
      %v2241 = vmul.f32 %v2223, 0.70710677
      %v2242 = verf.f32.pop %v2234
      %v2243 = verf.f32.pop %v2235
      %v2244 = verf.f32.pop %v2236
      %v2245 = verf.f32.pop %v2237
      %v2246 = verf.f32.pop %v2238
      %v2247 = verf.f32.pop %v2239
      %v2248 = verf.f32.pop %v2240
      %v2249 = verf.f32.pop %v2241
      %v2250 = vadd.f32 %v2242, 1.0
      %v2251 = vadd.f32 %v2243, 1.0
      %v2252 = vadd.f32 %v2244, 1.0
      %v2253 = vadd.f32 %v2245, 1.0
      %v2254 = vadd.f32 %v2246, 1.0
      %v2255 = vadd.f32 %v2247, 1.0
      %v2256 = vadd.f32 %v2248, 1.0
      %v2257 = vadd.f32 %v2249, 1.0
      %v2258 = vmul.f32 %v2226, %v2250
      %v2259 = vmul.f32 %v2227, %v2251
      %v2260 = vmul.f32 %v2228, %v2252
      %v2261 = vmul.f32 %v2229, %v2253
      %v2262 = vmul.f32 %v2230, %v2254
      %v2263 = vmul.f32 %v2231, %v2255
      %v2264 = vmul.f32 %v2232, %v2256
      %v2265 = vmul.f32 %v2233, %v2257
      %v2266 = vpack.c.bf16 %v2259, %v2258
      %v2267 = vpack.c.bf16 %v2261, %v2260
      %v2268 = vpack.c.bf16 %v2263, %v2262
      %v2269 = vpack.c.bf16 %v2265, %v2264
      %v2270 = vpack.c.bf16 %v2093, %v2092
      %v2271 = vpack.c.bf16 %v2095, %v2094
      %v2273 = vlaneseq
      %v2274 = vshrl.u32 %v2273, 7
      %v2275 = vsub.s32 0, %v2274
      %v2276 = vrot.slane %v2096, %v2275
      %v2279 = vsel %vm451, %v2266, 0
      %v2282 = vsel %vm451, %v2267, 0
      %v2285 = vsel %vm451, %v2268, 0
      %v2288 = vsel %vm451, %v2269, 0
      %2290 = vmatprep.subr.bf16.mxu0 0
      %2291 = vmatpush1.bf16.msra.mxu0 0
      %2292 = vmatprep.subr.bf16.mxu0 0
      %2293 = vmatpush1.bf16.msra.mxu0 0
      %2294 = vmatprep.subr.bf16.mxu0 0
      %2295 = vmatpush1.bf16.msra.mxu0 0
      %2296 = vmatprep.subr.bf16.mxu0 0
      %2297 = vmatpush1.bf16.msra.mxu0 0
      %2298 = vmatprep.subr.bf16.mxu0 0
      %2299 = vmatpush1.bf16.msra.mxu0 0
      %2300 = vmatprep.subr.bf16.mxu0 0
      %2301 = vmatpush1.bf16.msra.mxu0 0
      %2302 = vmatprep.subr.bf16.mxu0 0
      %2303 = vmatpush1.bf16.msra.mxu0 %v2271
      %2304 = vmatprep.subr.bf16.mxu0 0
      %2305 = vmatpush1.bf16.msra.mxu0 %v2270
      %2306 = vmatprep.subr.bf16.mxu0 0
      %2307 = vmatpush2.bf16.msra.mxu0 0
      %2308 = vmatprep.subr.bf16.mxu0 0
      %2309 = vmatpush2.bf16.msra.mxu0 0
      %2310 = vmatprep.subr.bf16.mxu0 0
      %2311 = vmatpush2.bf16.msra.mxu0 0
      %2312 = vmatprep.subr.bf16.mxu0 0
      %2313 = vmatpush2.bf16.msra.mxu0 0
      %2314 = vmatprep.subr.bf16.mxu0 0
      %2315 = vmatpush2.bf16.msra.mxu0 0
      %2316 = vmatprep.subr.bf16.mxu0 0
      %2317 = vmatpush2.bf16.msra.mxu0 0
      %2318 = vmatprep.subr.bf16.mxu0 0
      %2319 = vmatpush2.bf16.msra.mxu0 0
      %2320 = vmatprep.subr.bf16.mxu0 0
      %2321 = vmatpush2.bf16.msra.mxu0 0
      %2322 = vmatprep.mubr.bf16.mxu0 0
      %2323 = vmatmul.mubr.bf16.gmra.mxu0 %v2279
      %v2324 = vpop.f32.mrf.mxu0
      %v2325 = vadd.f32 %v2276, %v2324
      %v2326 = vpop.f32.mrf.mxu0
      %v2327 = vpop.f32.mrf.mxu0
      %v2328 = vadd.f32 %v2276, %v2327
      %v2329 = vpop.f32.mrf.mxu0
      %2330 = vmatprep.mubr.bf16.mxu0 0
      %2331 = vmatmul.mubr.bf16.gmra.mxu0 %v2282
      %v2332 = vpop.f32.mrf.mxu0
      %v2333 = vadd.f32 %v2276, %v2332
      %v2334 = vpop.f32.mrf.mxu0
      %v2335 = vpop.f32.mrf.mxu0
      %v2336 = vadd.f32 %v2276, %v2335
      %v2337 = vpop.f32.mrf.mxu0
      %2338 = vmatprep.mubr.bf16.mxu0 0
      %2339 = vmatmul.mubr.bf16.gmra.mxu0 %v2285
      %v2340 = vpop.f32.mrf.mxu0
      %v2341 = vadd.f32 %v2276, %v2340
      %v2342 = vpop.f32.mrf.mxu0
      %v2343 = vpop.f32.mrf.mxu0
      %v2344 = vadd.f32 %v2276, %v2343
      %v2345 = vpop.f32.mrf.mxu0
      %2346 = vmatprep.mubr.bf16.mxu0 0
      %2347 = vmatmul.mubr.bf16.gmra.mxu0 %v2288
      %v2348 = vpop.f32.mrf.mxu0
      %v2349 = vadd.f32 %v2276, %v2348
      %v2350 = vpop.f32.mrf.mxu0
      %v2351 = vpop.f32.mrf.mxu0
      %v2352 = vadd.f32 %v2276, %v2351
      %v2353 = vpop.f32.mrf.mxu0
      %2354 = vdwg.mxu0
      %v2355 = vsub.f32 %v2325, %v2105
      %v2356 = vsub.f32 %v2328, %v2106
      %v2357 = vsub.f32 %v2333, %v2107
      %v2358 = vsub.f32 %v2336, %v2108
      %v2359 = vsub.f32 %v2341, %v2109
      %v2360 = vsub.f32 %v2344, %v2110
      %v2361 = vsub.f32 %v2349, %v2111
      %v2362 = vsub.f32 %v2352, %v2112
      %v2363 = vmul.f32 %v2355, %v2355
      %v2364 = vmul.f32 %v2356, %v2356
      %v2365 = vmul.f32 %v2357, %v2357
      %v2366 = vmul.f32 %v2358, %v2358
      %v2367 = vmul.f32 %v2359, %v2359
      %v2368 = vmul.f32 %v2360, %v2360
      %v2369 = vmul.f32 %v2361, %v2361
      %v2370 = vmul.f32 %v2362, %v2362
      %v2371 = vsel %vm1175, %v2363, 0.0
      %2372 = vadd.xlane.f32.xlu0 %v2371
      %v2373 = vpop.xlane.xlu0 %2372
      %v2374 = vsel %vm1175, %v2364, 0.0
      %2375 = vadd.xlane.f32.xlu0 %v2374
      %v2376 = vpop.xlane.xlu0 %2375
      %v2377 = vsel %vm1175, %v2365, 0.0
      %2378 = vadd.xlane.f32.xlu0 %v2377
      %v2379 = vpop.xlane.xlu0 %2378
      %v2380 = vsel %vm1175, %v2366, 0.0
      %2381 = vadd.xlane.f32.xlu0 %v2380
      %v2382 = vpop.xlane.xlu0 %2381
      %v2383 = vsel %vm1175, %v2367, 0.0
      %2384 = vadd.xlane.f32.xlu0 %v2383
      %v2385 = vpop.xlane.xlu0 %2384
      %v2386 = vsel %vm1175, %v2368, 0.0
      %2387 = vadd.xlane.f32.xlu0 %v2386
      %v2388 = vpop.xlane.xlu0 %2387
      %v2389 = vsel %vm1175, %v2369, 0.0
      %2390 = vadd.xlane.f32.xlu0 %v2389
      %v2391 = vpop.xlane.xlu0 %2390
      %v2392 = vsel %vm1175, %v2370, 0.0
      %2393 = vadd.xlane.f32.xlu0 %v2392
      %v2394 = vpop.xlane.xlu0 %2393
      %v2395 = vrsqrt.pop %v2373
      %v2396 = vmul.f32 %v2373, %v2395
      %vm2397 = vcmp.eq.f32.partialorder %v2373, inf
      %v2398 = vsel %vm2397, %v2373, %v2396
      %vm2399 = vcmp.eq.f32.partialorder %v2373, 0.0
      %v2400 = vand.u32 %v2373, 2147483648
      %v2401 = vsel %vm2399, %v2400, %v2398
      %v2402 = vrsqrt.pop %v2376
      %v2403 = vmul.f32 %v2376, %v2402
      %vm2404 = vcmp.eq.f32.partialorder %v2376, inf
      %v2405 = vsel %vm2404, %v2376, %v2403
      %vm2406 = vcmp.eq.f32.partialorder %v2376, 0.0
      %v2407 = vand.u32 %v2376, 2147483648
      %v2408 = vsel %vm2406, %v2407, %v2405
      %v2409 = vrsqrt.pop %v2379
      %v2410 = vmul.f32 %v2379, %v2409
      %vm2411 = vcmp.eq.f32.partialorder %v2379, inf
      %v2412 = vsel %vm2411, %v2379, %v2410
      %vm2413 = vcmp.eq.f32.partialorder %v2379, 0.0
      %v2414 = vand.u32 %v2379, 2147483648
      %v2415 = vsel %vm2413, %v2414, %v2412
      %v2416 = vrsqrt.pop %v2382
      %v2417 = vmul.f32 %v2382, %v2416
      %vm2418 = vcmp.eq.f32.partialorder %v2382, inf
      %v2419 = vsel %vm2418, %v2382, %v2417
      %vm2420 = vcmp.eq.f32.partialorder %v2382, 0.0
      %v2421 = vand.u32 %v2382, 2147483648
      %v2422 = vsel %vm2420, %v2421, %v2419
      %v2423 = vrsqrt.pop %v2385
      %v2424 = vmul.f32 %v2385, %v2423
      %vm2425 = vcmp.eq.f32.partialorder %v2385, inf
      %v2426 = vsel %vm2425, %v2385, %v2424
      %vm2427 = vcmp.eq.f32.partialorder %v2385, 0.0
      %v2428 = vand.u32 %v2385, 2147483648
      %v2429 = vsel %vm2427, %v2428, %v2426
      %v2430 = vrsqrt.pop %v2388
      %v2431 = vmul.f32 %v2388, %v2430
      %vm2432 = vcmp.eq.f32.partialorder %v2388, inf
      %v2433 = vsel %vm2432, %v2388, %v2431
      %vm2434 = vcmp.eq.f32.partialorder %v2388, 0.0
      %v2435 = vand.u32 %v2388, 2147483648
      %v2436 = vsel %vm2434, %v2435, %v2433
      %v2437 = vrsqrt.pop %v2391
      %v2438 = vmul.f32 %v2391, %v2437
      %vm2439 = vcmp.eq.f32.partialorder %v2391, inf
      %v2440 = vsel %vm2439, %v2391, %v2438
      %vm2441 = vcmp.eq.f32.partialorder %v2391, 0.0
      %v2442 = vand.u32 %v2391, 2147483648
      %v2443 = vsel %vm2441, %v2442, %v2440
      %v2444 = vrsqrt.pop %v2394
      %v2445 = vmul.f32 %v2394, %v2444
      %vm2446 = vcmp.eq.f32.partialorder %v2394, inf
      %v2447 = vsel %vm2446, %v2394, %v2445
      %vm2448 = vcmp.eq.f32.partialorder %v2394, 0.0
      %v2449 = vand.u32 %v2394, 2147483648
      %v2450 = vsel %vm2448, %v2449, %v2447
      %v2451 = vadd.f32 %v2401, 1e-09
      %v2452 = vadd.f32 %v2408, 1e-09
      %v2453 = vadd.f32 %v2415, 1e-09
      %v2454 = vadd.f32 %v2422, 1e-09
      %v2455 = vadd.f32 %v2429, 1e-09
      %v2456 = vadd.f32 %v2436, 1e-09
      %v2457 = vadd.f32 %v2443, 1e-09
      %v2458 = vadd.f32 %v2450, 1e-09
      %v2459 = vrcp.pop %v2451
      %v2460 = vmul.f32 %v2355, %v2459
      %v2461 = vrcp.pop %v2452
      %v2462 = vmul.f32 %v2356, %v2461
      %v2463 = vrcp.pop %v2453
      %v2464 = vmul.f32 %v2357, %v2463
      %v2465 = vrcp.pop %v2454
      %v2466 = vmul.f32 %v2358, %v2465
      %v2467 = vrcp.pop %v2455
      %v2468 = vmul.f32 %v2359, %v2467
      %v2469 = vrcp.pop %v2456
      %v2470 = vmul.f32 %v2360, %v2469
      %v2471 = vrcp.pop %v2457
      %v2472 = vmul.f32 %v2361, %v2471
      %v2473 = vrcp.pop %v2458
      %v2474 = vmul.f32 %v2362, %v2473
      %v2475 = vmul.f32 %v2113, %v2460
      %v2476 = vmul.f32 %v2114, %v2462
      %v2477 = vmul.f32 %v2115, %v2464
      %v2478 = vmul.f32 %v2116, %v2466
      %v2479 = vmul.f32 %v2117, %v2468
      %v2480 = vmul.f32 %v2118, %v2470
      %v2481 = vmul.f32 %v2119, %v2472
      %v2482 = vmul.f32 %v2120, %v2474
      %vm2483 = vcmp.gt.f32.partialorder %v2401, %v2113
      %vm2484 = vcmp.gt.f32.partialorder %v2408, %v2114
      %vm2485 = vcmp.gt.f32.partialorder %v2415, %v2115
      %vm2486 = vcmp.gt.f32.partialorder %v2422, %v2116
      %vm2487 = vcmp.gt.f32.partialorder %v2429, %v2117
      %vm2488 = vcmp.gt.f32.partialorder %v2436, %v2118
      %vm2489 = vcmp.gt.f32.partialorder %v2443, %v2119
      %vm2490 = vcmp.gt.f32.partialorder %v2450, %v2120
      %v2491 = vsel %vm2483, %v2475, %v2355
      %v2492 = vsel %vm2484, %v2476, %v2356
      %v2493 = vsel %vm2485, %v2477, %v2357
      %v2494 = vsel %vm2486, %v2478, %v2358
      %v2495 = vsel %vm2487, %v2479, %v2359
      %v2496 = vsel %vm2488, %v2480, %v2360
      %v2497 = vsel %vm2489, %v2481, %v2361
      %v2498 = vsel %vm2490, %v2482, %v2362
      %2500 = vrot.lane.b32.xlu0 %v2121, 112
      %v2501 = vpop.permute.xlu0 %2500
      %vm2503 = vcmask 122880
      %v2504 = vsel %vm2503, %v2501, 0.0
      %2505 = vadd.xlane.f32.xlu0 %v2504
      %v2506 = vpop.xlane.xlu0 %2505
      %v2507 = vmul.f32 %v2506, %v1543
      %v2508 = vsel %vm2503, %v2121, 0.0
      %2509 = vadd.xlane.f32.xlu0 %v2508
      %v2510 = vpop.xlane.xlu0 %2509
      %v2511 = vmul.f32 %v2510, %v1543
      %v2512 = vsel %vm1175, %v2491, 0.0
      %v2513 = vsel %vm1175, %v2492, 0.0
      %v2514 = vadd.f32 %v2512, %v2513
      %v2515 = vsel %vm1175, %v2493, 0.0
      %v2516 = vadd.f32 %v2514, %v2515
      %v2517 = vsel %vm1175, %v2494, 0.0
      %v2518 = vadd.f32 %v2516, %v2517
      %v2519 = vsel %vm1175, %v2495, 0.0
      %v2520 = vadd.f32 %v2518, %v2519
      %v2521 = vsel %vm1175, %v2496, 0.0
      %v2522 = vadd.f32 %v2520, %v2521
      %v2523 = vsel %vm1175, %v2497, 0.0
      %v2524 = vadd.f32 %v2522, %v2523
      %v2525 = vsel %vm1175, %v2498, 0.0
      %v2526 = vadd.f32 %v2524, %v2525
      %v2527 = vrot.slane %v2526, 4
      %v2528 = vadd.f32 %v2526, %v2527
      %v2529 = vrot.slane %v2528, 2
      %v2530 = vadd.f32 %v2528, %v2529
      %v2531 = vrot.slane %v2530, 1
      %v2532 = vadd.f32 %v2530, %v2531
      %v2533 = vrcp.pop 64.0
      %v2534 = vmul.f32 %v2532, %v2533
      %v2535 = vsel %vm451, %v2258, 0.0
      %v2536 = vsel %vm451, %v2259, 0.0
      %v2537 = vadd.f32 %v2535, %v2536
      %v2538 = vsel %vm451, %v2260, 0.0
      %v2539 = vadd.f32 %v2537, %v2538
      %v2540 = vsel %vm451, %v2261, 0.0
      %v2541 = vadd.f32 %v2539, %v2540
      %v2542 = vsel %vm451, %v2262, 0.0
      %v2543 = vadd.f32 %v2541, %v2542
      %v2544 = vsel %vm451, %v2263, 0.0
      %v2545 = vadd.f32 %v2543, %v2544
      %v2546 = vsel %vm451, %v2264, 0.0
      %v2547 = vadd.f32 %v2545, %v2546
      %v2548 = vsel %vm451, %v2265, 0.0
      %v2549 = vadd.f32 %v2547, %v2548
      %v2550 = vrot.slane %v2549, 4
      %v2551 = vadd.f32 %v2549, %v2550
      %v2552 = vrot.slane %v2551, 2
      %v2553 = vadd.f32 %v2551, %v2552
      %v2554 = vrot.slane %v2553, 1
      %v2555 = vadd.f32 %v2553, %v2554
      %v2556 = vmul.f32 %v2555, %v2533
      %v2557 = vlaneseq
      %v2558 = vshrl.u32 %v2557, 7
      %v2559 = vsub.s32 0, %v2558
      %v2560 = vrot.slane %v2507, %v2559
      %v2561 = vmul.f32 %v2560, %v2089
      %v2562 = vmul.f32 %v2560, %v2090
      %2563 = vxpose.xlu0.b32.start [1/16] %v2534, 128
      %2564 = vxpose.xlu0.b32.cont [2/16] 0.0, 128
      %2565 = vxpose.xlu0.b32.cont [3/16] 0.0, 128
      %2566 = vxpose.xlu0.b32.cont [4/16] 0.0, 128
      %2567 = vxpose.xlu0.b32.cont [5/16] 0.0, 128
      %2568 = vxpose.xlu0.b32.cont [6/16] 0.0, 128
      %2569 = vxpose.xlu0.b32.cont [7/16] 0.0, 128
      %2570 = vxpose.xlu0.b32.cont [8/16] 0.0, 128
      %2571 = vxpose.xlu0.b32.cont [9/16] 0.0, 128
      %2572 = vxpose.xlu0.b32.cont [10/16] 0.0, 128
      %2573 = vxpose.xlu0.b32.cont [11/16] 0.0, 128
      %2574 = vxpose.xlu0.b32.cont [12/16] 0.0, 128
      %2575 = vxpose.xlu0.b32.cont [13/16] 0.0, 128
      %2576 = vxpose.xlu0.b32.cont [14/16] 0.0, 128
      %2577 = vxpose.xlu0.b32.cont [15/16] 0.0, 128
      %2578 = vxpose.xlu0.b32.end [16/16] 0.0, 128
      %v2579 = vpop.trf.xlu0
      %v2580 = vpop.trf.xlu0
      %v2581 = vpop.trf.xlu0
      %v2582 = vpop.trf.xlu0
      %v2583 = vpop.trf.xlu0
      %v2584 = vpop.trf.xlu0
      %v2585 = vpop.trf.xlu0
      %v2586 = vpop.trf.xlu0
      %v2587 = vpop.trf.xlu0
      %v2588 = vpop.trf.xlu0
      %v2589 = vpop.trf.xlu0
      %v2590 = vpop.trf.xlu0
      %v2591 = vpop.trf.xlu0
      %v2592 = vpop.trf.xlu0
      %v2593 = vpop.trf.xlu0
      %v2594 = vpop.trf.xlu0
      %2596 = vset.pattern.permute.xlu0 0
      %2597 = vperm.xlu0 %2596, %v2579
      %v2598 = vpop.permute.xlu0 %2597
      %2601 = vset.pattern.permute.xlu0 0
      %2602 = vperm.xlu0 %2601, %v2580
      %v2603 = vpop.permute.xlu0 %2602
      %v2605 = vmul.f32 %v2598, %v2556
      %v2606 = vmul.f32 %v2603, %v2556
      %v2607 = vlaneseq
      %v2608 = vshrl.u32 %v2607, 7
      %v2609 = vsub.s32 0, %v2608
      %v2610 = vrot.slane %v2511, %v2609
      %v2611 = vmul.f32 %v2610, %v2605
      %v2612 = vmul.f32 %v2610, %v2606
      %v2613 = vsub.f32 %v2561, %v2611
      %v2614 = vsub.f32 %v2562, %v2612
      %v2615 = vmul.f32 %v2560, %v2092
      %v2616 = vmul.f32 %v2560, %v2093
      %v2617 = vmul.f32 %v2560, %v2094
      %v2618 = vmul.f32 %v2560, %v2095
      %2619 = vxpose.xlu0.b32.start [1/16] %v2556, 128
      %2620 = vxpose.xlu0.b32.cont [2/16] 0.0, 128
      %2621 = vxpose.xlu0.b32.cont [3/16] 0.0, 128
      %2622 = vxpose.xlu0.b32.cont [4/16] 0.0, 128
      %2623 = vxpose.xlu0.b32.cont [5/16] 0.0, 128
      %2624 = vxpose.xlu0.b32.cont [6/16] 0.0, 128
      %2625 = vxpose.xlu0.b32.cont [7/16] 0.0, 128
      %2626 = vxpose.xlu0.b32.cont [8/16] 0.0, 128
      %2627 = vxpose.xlu0.b32.cont [9/16] 0.0, 128
      %2628 = vxpose.xlu0.b32.cont [10/16] 0.0, 128
      %2629 = vxpose.xlu0.b32.cont [11/16] 0.0, 128
      %2630 = vxpose.xlu0.b32.cont [12/16] 0.0, 128
      %2631 = vxpose.xlu0.b32.cont [13/16] 0.0, 128
      %2632 = vxpose.xlu0.b32.cont [14/16] 0.0, 128
      %2633 = vxpose.xlu0.b32.cont [15/16] 0.0, 128
      %2634 = vxpose.xlu0.b32.end [16/16] 0.0, 128
      %v2635 = vpop.trf.xlu0
      %v2636 = vpop.trf.xlu0
      %v2637 = vpop.trf.xlu0
      %v2638 = vpop.trf.xlu0
      %v2639 = vpop.trf.xlu0
      %v2640 = vpop.trf.xlu0
      %v2641 = vpop.trf.xlu0
      %v2642 = vpop.trf.xlu0
      %v2643 = vpop.trf.xlu0
      %v2644 = vpop.trf.xlu0
      %v2645 = vpop.trf.xlu0
      %v2646 = vpop.trf.xlu0
      %v2647 = vpop.trf.xlu0
      %v2648 = vpop.trf.xlu0
      %v2649 = vpop.trf.xlu0
      %v2650 = vpop.trf.xlu0
      %2652 = vset.pattern.permute.xlu0 0
      %2653 = vperm.xlu0 %2652, %v2635
      %v2654 = vpop.permute.xlu0 %2653
      %2657 = vset.pattern.permute.xlu0 0
      %2658 = vperm.xlu0 %2657, %v2636
      %v2659 = vpop.permute.xlu0 %2658
      %2662 = vset.pattern.permute.xlu0 0
      %2663 = vperm.xlu0 %2662, %v2637
      %v2664 = vpop.permute.xlu0 %2663
      %2667 = vset.pattern.permute.xlu0 0
      %2668 = vperm.xlu0 %2667, %v2638
      %v2669 = vpop.permute.xlu0 %2668
      %v2671 = vmul.f32 %v2654, %v2534
      %v2672 = vmul.f32 %v2659, %v2534
      %v2673 = vmul.f32 %v2664, %v2534
      %v2674 = vmul.f32 %v2669, %v2534
      %v2675 = vmul.f32 %v2610, %v2671
      %v2676 = vmul.f32 %v2610, %v2672
      %v2677 = vmul.f32 %v2610, %v2673
      %v2678 = vmul.f32 %v2610, %v2674
      %v2679 = vsub.f32 %v2615, %v2675
      %v2680 = vsub.f32 %v2616, %v2676
      %v2681 = vsub.f32 %v2617, %v2677
      %v2682 = vsub.f32 %v2618, %v2678
      %2683 = vrot.lane.b32.xlu0 %v2276, 16
      %v2684 = vpop.permute.xlu0 %2683
      %v2686 = vmul.f32 %v2121, %v2684
      %v2687 = vmul.f32 %v2121, %v2534
      %2689 = vrot.lane.b32.xlu0 %v2687, 16
      %v2690 = vpop.permute.xlu0 %2689
      %v2692 = vsub.f32 %v2686, %v2690
      %v2693 = vmul.f32 %v2092, %v2534
      %v2694 = vmul.f32 %v2093, %v2534
      %v2695 = vmul.f32 %v2094, %v2534
      %v2696 = vmul.f32 %v2095, %v2534
      %v2697 = vsel %vm1175, %v2693, 0.0
      %2698 = vadd.xlane.f32.xlu0 %v2697
      %v2699 = vpop.xlane.xlu0 %2698
      %v2700 = vsel %vm1175, %v2694, 0.0
      %2701 = vadd.xlane.f32.xlu0 %v2700
      %v2702 = vpop.xlane.xlu0 %2701
      %v2703 = vsel %vm1175, %v2695, 0.0
      %2704 = vadd.xlane.f32.xlu0 %v2703
      %v2705 = vpop.xlane.xlu0 %2704
      %v2706 = vsel %vm1175, %v2696, 0.0
      %2707 = vadd.xlane.f32.xlu0 %v2706
      %v2708 = vpop.xlane.xlu0 %2707
      %2709 = vxpose.xlu0.b32.start [1/16] %v2699, 128
      %2710 = vxpose.xlu0.b32.cont [2/16] %v2702, 128
      %2711 = vxpose.xlu0.b32.cont [3/16] %v2705, 128
      %2712 = vxpose.xlu0.b32.cont [4/16] %v2708, 128
      %2713 = vxpose.xlu0.b32.cont [5/16] 0.0, 128
      %2714 = vxpose.xlu0.b32.cont [6/16] 0.0, 128
      %2715 = vxpose.xlu0.b32.cont [7/16] 0.0, 128
      %2716 = vxpose.xlu0.b32.cont [8/16] 0.0, 128
      %2717 = vxpose.xlu0.b32.cont [9/16] 0.0, 128
      %2718 = vxpose.xlu0.b32.cont [10/16] 0.0, 128
      %2719 = vxpose.xlu0.b32.cont [11/16] 0.0, 128
      %2720 = vxpose.xlu0.b32.cont [12/16] 0.0, 128
      %2721 = vxpose.xlu0.b32.cont [13/16] 0.0, 128
      %2722 = vxpose.xlu0.b32.cont [14/16] 0.0, 128
      %2723 = vxpose.xlu0.b32.cont [15/16] 0.0, 128
      %2724 = vxpose.xlu0.b32.end [16/16] 0.0, 128
      %v2725 = vpop.trf.xlu0
      %v2726 = vpop.trf.xlu0
      %v2727 = vpop.trf.xlu0
      %v2728 = vpop.trf.xlu0
      %v2729 = vpop.trf.xlu0
      %v2730 = vpop.trf.xlu0
      %v2731 = vpop.trf.xlu0
      %v2732 = vpop.trf.xlu0
      %v2733 = vpop.trf.xlu0
      %v2734 = vpop.trf.xlu0
      %v2735 = vpop.trf.xlu0
      %v2736 = vpop.trf.xlu0
      %v2737 = vpop.trf.xlu0
      %v2738 = vpop.trf.xlu0
      %v2739 = vpop.trf.xlu0
      %v2740 = vpop.trf.xlu0
      %v2741 = vmul.f32 %v2534, %v2534
      %v2742 = vsel %vm1175, %v2741, 0.0
      %2743 = vadd.xlane.f32.xlu0 %v2742
      %v2744 = vpop.xlane.xlu0 %2743
      %v2745 = vmul.f32 %v2507, %v2725
      %v2746 = vmul.f32 %v2511, %v2744
      %v2747 = vmul.f32 %v2746, %v2556
      %v2748 = vsub.f32 %v2745, %v2747
      %v2749 = vmul.f32 %v2507, %v2091
      %v2750 = vmul.f32 %v2511, %v2748
      %v2751 = vsub.f32 %v2749, %v2750
      %v2752 = vpack.c.bf16 %v2328, %v2325
      %v2753 = vpack.c.bf16 %v2336, %v2333
      %v2754 = vpack.c.bf16 %v2344, %v2341
      %v2755 = vpack.c.bf16 %v2352, %v2349
      %v2757 = vsel %vm1175, %v2752, 0
      %v2760 = vsel %vm1175, %v2753, 0
      %v2763 = vsel %vm1175, %v2754, 0
      %v2766 = vsel %vm1175, %v2755, 0
      %2768 = vmatprep.subr.bf16.mxu0 0
      %2769 = vmatpush1.bf16.msra.mxu0 0
      %2770 = vmatprep.subr.bf16.mxu0 0
      %2771 = vmatpush1.bf16.msra.mxu0 0
      %2772 = vmatprep.subr.bf16.mxu0 0
      %2773 = vmatpush1.bf16.msra.mxu0 0
      %2774 = vmatprep.subr.bf16.mxu0 0
      %2775 = vmatpush1.bf16.msra.mxu0 0
      %2776 = vmatprep.subr.bf16.mxu0 0
      %2777 = vmatpush1.bf16.msra.mxu0 0
      %2778 = vmatprep.subr.bf16.mxu0 0
      %2779 = vmatpush1.bf16.msra.mxu0 0
      %2780 = vmatprep.subr.bf16.mxu0 0
      %2781 = vmatpush1.bf16.msra.mxu0 0
      %2782 = vmatprep.subr.bf16.mxu0 0
      %2783 = vmatpush1.bf16.msra.mxu0 %v2088
      %2784 = vmatprep.subr.bf16.mxu0 0
      %2785 = vmatpush2.bf16.msra.mxu0 0
      %2786 = vmatprep.subr.bf16.mxu0 0
      %2787 = vmatpush2.bf16.msra.mxu0 0
      %2788 = vmatprep.subr.bf16.mxu0 0
      %2789 = vmatpush2.bf16.msra.mxu0 0
      %2790 = vmatprep.subr.bf16.mxu0 0
      %2791 = vmatpush2.bf16.msra.mxu0 0
      %2792 = vmatprep.subr.bf16.mxu0 0
      %2793 = vmatpush2.bf16.msra.mxu0 0
      %2794 = vmatprep.subr.bf16.mxu0 0
      %2795 = vmatpush2.bf16.msra.mxu0 0
      %2796 = vmatprep.subr.bf16.mxu0 0
      %2797 = vmatpush2.bf16.msra.mxu0 0
      %2798 = vmatprep.subr.bf16.mxu0 0
      %2799 = vmatpush2.bf16.msra.mxu0 0
      %2800 = vmatprep.mubr.bf16.mxu0 0
      %2801 = vmatmul.mubr.bf16.gmra.mxu0 %v2757
      %v2802 = vpop.f32.mrf.mxu0
      %v2803 = vadd.f32 0.0, %v2802
      %v2804 = vpop.f32.mrf.mxu0
      %v2805 = vpop.f32.mrf.mxu0
      %v2806 = vadd.f32 0.0, %v2805
      %v2807 = vpop.f32.mrf.mxu0
      %2808 = vmatprep.mubr.bf16.mxu0 0
      %2809 = vmatmul.mubr.bf16.gmra.mxu0 %v2760
      %v2810 = vpop.f32.mrf.mxu0
      %v2811 = vadd.f32 0.0, %v2810
      %v2812 = vpop.f32.mrf.mxu0
      %v2813 = vpop.f32.mrf.mxu0
      %v2814 = vadd.f32 0.0, %v2813
      %v2815 = vpop.f32.mrf.mxu0
      %2816 = vmatprep.mubr.bf16.mxu0 0
      %2817 = vmatmul.mubr.bf16.gmra.mxu0 %v2763
      %v2818 = vpop.f32.mrf.mxu0
      %v2819 = vadd.f32 0.0, %v2818
      %v2820 = vpop.f32.mrf.mxu0
      %v2821 = vpop.f32.mrf.mxu0
      %v2822 = vadd.f32 0.0, %v2821
      %v2823 = vpop.f32.mrf.mxu0
      %2824 = vmatprep.mubr.bf16.mxu0 0
      %2825 = vmatmul.mubr.bf16.gmra.mxu0 %v2766
      %v2826 = vpop.f32.mrf.mxu0
      %v2827 = vadd.f32 0.0, %v2826
      %v2828 = vpop.f32.mrf.mxu0
      %v2829 = vpop.f32.mrf.mxu0
      %v2830 = vadd.f32 0.0, %v2829
      %v2831 = vpop.f32.mrf.mxu0
      %2832 = vdwg.mxu0
      %v2833 = vld [vmem:[#allocation6] sm:$0xff]
      %v2834 = vld [vmem:[#allocation6 + $0x8] sm:$0xff]
      %v2835 = vld [vmem:[#allocation6 + $0x10] sm:$0xff]
      %v2836 = vld [vmem:[#allocation6 + $0x18] sm:$0xff]
      %v2837 = vld [vmem:[#allocation6 + $0x20] sm:$0xff]
      %v2838 = vld [vmem:[#allocation6 + $0x28] sm:$0xff]
      %v2839 = vld [vmem:[#allocation6 + $0x30] sm:$0xff]
      %v2840 = vld [vmem:[#allocation6 + $0x38] sm:$0xff]
      %v2841 = vmul.f32 %v2803, %v2833
      %v2842 = vmul.f32 %v2806, %v2834
      %v2843 = vmul.f32 %v2811, %v2835
      %v2844 = vmul.f32 %v2814, %v2836
      %v2845 = vmul.f32 %v2819, %v2837
      %v2846 = vmul.f32 %v2822, %v2838
      %v2847 = vmul.f32 %v2827, %v2839
      %v2848 = vmul.f32 %v2830, %v2840
      %2849 = vst.msk [vmem:[%s413] sm:$0xff] %vm451, %v2841
      %2850 = vst.msk [vmem:[%s413 + $0x8] sm:$0xff] %vm451, %v2842
      %2851 = vst.msk [vmem:[%s413 + $0x10] sm:$0xff] %vm451, %v2843
      %2852 = vst.msk [vmem:[%s413 + $0x18] sm:$0xff] %vm451, %v2844
      %2853 = vst.msk [vmem:[%s413 + $0x20] sm:$0xff] %vm451, %v2845
      %2854 = vst.msk [vmem:[%s413 + $0x28] sm:$0xff] %vm451, %v2846
      %2855 = vst.msk [vmem:[%s413 + $0x30] sm:$0xff] %vm451, %v2847
      %2856 = vst.msk [vmem:[%s413 + $0x38] sm:$0xff] %vm451, %v2848
      %v2857 = vld [vmem:[#allocation3 + $0x20] sm:$0xf]
      %v2858 = vld [vmem:[#allocation3 + $0x24] sm:$0xf]
      %v2859 = vld [vmem:[#allocation3 + $0x28] sm:$0xf]
      %v2860 = vld [vmem:[#allocation3 + $0x2c] sm:$0xf]
      %v2861 = vld [vmem:[#allocation3 + $0x30] sm:$0xf]
      %v2862 = vld [vmem:[#allocation3 + $0x34] sm:$0xf]
      %v2863 = vld [vmem:[#allocation3 + $0x38] sm:$0xf]
      %v2864 = vld [vmem:[#allocation3 + $0x3c] sm:$0xf]
      %v2865 = vld [vmem:[#allocation4 + $0x40] sm:$0xff]
      %v2866 = vld [vmem:[#allocation4 + $0x48] sm:$0xff]
      %v2867 = vld [vmem:[#allocation4 + $0x50] sm:$0xff]
      %v2868 = vld [vmem:[#allocation4 + $0x58] sm:$0xff]
      %v2869 = vld [vmem:[#allocation4 + $0x60] sm:$0xff]
      %v2870 = vld [vmem:[#allocation4 + $0x68] sm:$0xff]
      %v2871 = vld [vmem:[#allocation4 + $0x70] sm:$0xff]
      %v2872 = vld [vmem:[#allocation4 + $0x78] sm:$0xff]
      %v2873 = vld [vmem:[#allocation5 + $0x40] sm:$0xff]
      %v2874 = vld [vmem:[#allocation5 + $0x48] sm:$0xff]
      %v2875 = vld [vmem:[#allocation5 + $0x50] sm:$0xff]
      %v2876 = vld [vmem:[#allocation5 + $0x58] sm:$0xff]
      %v2877 = vld [vmem:[#allocation5 + $0x60] sm:$0xff]
      %v2878 = vld [vmem:[#allocation5 + $0x68] sm:$0xff]
      %v2879 = vld [vmem:[#allocation5 + $0x70] sm:$0xff]
      %v2880 = vld [vmem:[#allocation5 + $0x78] sm:$0xff]
      %v2881 = vld [vmem:[#allocation7 + $0x1] sm:$0x1]
      %v2882 = vpack.c.bf16 %v2614, %v2613
      %v2883 = vlaneseq
      %v2884 = vshrl.u32 %v2883, 7
      %v2885 = vsub.s32 0, %v2884
      %v2886 = vrot.slane %v2751, %v2885
      %v2895 = vunpack.c.l.b16 %v2857
      %v2896 = vunpack.c.l.b16 %v2858
      %v2897 = vunpack.c.l.b16 %v2859
      %v2898 = vunpack.c.l.b16 %v2860
      %v2899 = vunpack.c.l.b16 %v2861
      %v2900 = vunpack.c.l.b16 %v2862
      %v2901 = vunpack.c.l.b16 %v2863
      %v2902 = vunpack.c.l.b16 %v2864
      %v2903 = vpack.c.b16 %v2896, %v2895
      %v2904 = vpack.c.b16 %v2898, %v2897
      %v2905 = vpack.c.b16 %v2900, %v2899
      %v2906 = vpack.c.b16 %v2902, %v2901
      %v2908 = vsel %vm1175, %v2903, 0
      %v2911 = vsel %vm1175, %v2904, 0
      %v2914 = vsel %vm1175, %v2905, 0
      %v2917 = vsel %vm1175, %v2906, 0
      %2919 = vmatprep.subr.bf16.mxu0 0
      %2920 = vmatpush1.bf16.msra.mxu0 0
      %2921 = vmatprep.subr.bf16.mxu0 0
      %2922 = vmatpush1.bf16.msra.mxu0 0
      %2923 = vmatprep.subr.bf16.mxu0 0
      %2924 = vmatpush1.bf16.msra.mxu0 0
      %2925 = vmatprep.subr.bf16.mxu0 0
      %2926 = vmatpush1.bf16.msra.mxu0 0
      %2927 = vmatprep.subr.bf16.mxu0 0
      %2928 = vmatpush1.bf16.msra.mxu0 0
      %2929 = vmatprep.subr.bf16.mxu0 0
      %2930 = vmatpush1.bf16.msra.mxu0 0
      %2931 = vmatprep.subr.bf16.mxu0 0
      %2932 = vmatpush1.bf16.msra.mxu0 0
      %2933 = vmatprep.subr.bf16.mxu0 0
      %2934 = vmatpush1.bf16.msra.mxu0 %v2882
      %2935 = vmatprep.subr.bf16.mxu0 0
      %2936 = vmatpush2.bf16.msra.mxu0 0
      %2937 = vmatprep.subr.bf16.mxu0 0
      %2938 = vmatpush2.bf16.msra.mxu0 0
      %2939 = vmatprep.subr.bf16.mxu0 0
      %2940 = vmatpush2.bf16.msra.mxu0 0
      %2941 = vmatprep.subr.bf16.mxu0 0
      %2942 = vmatpush2.bf16.msra.mxu0 0
      %2943 = vmatprep.subr.bf16.mxu0 0
      %2944 = vmatpush2.bf16.msra.mxu0 0
      %2945 = vmatprep.subr.bf16.mxu0 0
      %2946 = vmatpush2.bf16.msra.mxu0 0
      %2947 = vmatprep.subr.bf16.mxu0 0
      %2948 = vmatpush2.bf16.msra.mxu0 0
      %2949 = vmatprep.subr.bf16.mxu0 0
      %2950 = vmatpush2.bf16.msra.mxu0 0
      %2951 = vmatprep.mubr.bf16.mxu0 0
      %2952 = vmatmul.mubr.bf16.gmra.mxu0 %v2908
      %v2953 = vpop.f32.mrf.mxu0
      %v2954 = vadd.f32 %v2886, %v2953
      %v2955 = vpop.f32.mrf.mxu0
      %v2956 = vpop.f32.mrf.mxu0
      %v2957 = vadd.f32 %v2886, %v2956
      %v2958 = vpop.f32.mrf.mxu0
      %2959 = vmatprep.mubr.bf16.mxu0 0
      %2960 = vmatmul.mubr.bf16.gmra.mxu0 %v2911
      %v2961 = vpop.f32.mrf.mxu0
      %v2962 = vadd.f32 %v2886, %v2961
      %v2963 = vpop.f32.mrf.mxu0
      %v2964 = vpop.f32.mrf.mxu0
      %v2965 = vadd.f32 %v2886, %v2964
      %v2966 = vpop.f32.mrf.mxu0
      %2967 = vmatprep.mubr.bf16.mxu0 0
      %2968 = vmatmul.mubr.bf16.gmra.mxu0 %v2914
      %v2969 = vpop.f32.mrf.mxu0
      %v2970 = vadd.f32 %v2886, %v2969
      %v2971 = vpop.f32.mrf.mxu0
      %v2972 = vpop.f32.mrf.mxu0
      %v2973 = vadd.f32 %v2886, %v2972
      %v2974 = vpop.f32.mrf.mxu0
      %2975 = vmatprep.mubr.bf16.mxu0 0
      %2976 = vmatmul.mubr.bf16.gmra.mxu0 %v2917
      %v2977 = vpop.f32.mrf.mxu0
      %v2978 = vadd.f32 %v2886, %v2977
      %v2979 = vpop.f32.mrf.mxu0
      %v2980 = vpop.f32.mrf.mxu0
      %v2981 = vadd.f32 %v2886, %v2980
      %v2982 = vpop.f32.mrf.mxu0
      %2983 = vdwg.mxu0
      %v2984 = vmul.f32 %v2954, 0.5
      %v2985 = vmul.f32 %v2957, 0.5
      %v2986 = vmul.f32 %v2962, 0.5
      %v2987 = vmul.f32 %v2965, 0.5
      %v2988 = vmul.f32 %v2970, 0.5
      %v2989 = vmul.f32 %v2973, 0.5
      %v2990 = vmul.f32 %v2978, 0.5
      %v2991 = vmul.f32 %v2981, 0.5
      %v2992 = vmul.f32 %v2954, 0.70710677
      %v2993 = vmul.f32 %v2957, 0.70710677
      %v2994 = vmul.f32 %v2962, 0.70710677
      %v2995 = vmul.f32 %v2965, 0.70710677
      %v2996 = vmul.f32 %v2970, 0.70710677
      %v2997 = vmul.f32 %v2973, 0.70710677
      %v2998 = vmul.f32 %v2978, 0.70710677
      %v2999 = vmul.f32 %v2981, 0.70710677
      %v3000 = verf.f32.pop %v2992
      %v3001 = verf.f32.pop %v2993
      %v3002 = verf.f32.pop %v2994
      %v3003 = verf.f32.pop %v2995
      %v3004 = verf.f32.pop %v2996
      %v3005 = verf.f32.pop %v2997
      %v3006 = verf.f32.pop %v2998
      %v3007 = verf.f32.pop %v2999
      %v3008 = vadd.f32 %v3000, 1.0
      %v3009 = vadd.f32 %v3001, 1.0
      %v3010 = vadd.f32 %v3002, 1.0
      %v3011 = vadd.f32 %v3003, 1.0
      %v3012 = vadd.f32 %v3004, 1.0
      %v3013 = vadd.f32 %v3005, 1.0
      %v3014 = vadd.f32 %v3006, 1.0
      %v3015 = vadd.f32 %v3007, 1.0
      %v3016 = vmul.f32 %v2984, %v3008
      %v3017 = vmul.f32 %v2985, %v3009
      %v3018 = vmul.f32 %v2986, %v3010
      %v3019 = vmul.f32 %v2987, %v3011
      %v3020 = vmul.f32 %v2988, %v3012
      %v3021 = vmul.f32 %v2989, %v3013
      %v3022 = vmul.f32 %v2990, %v3014
      %v3023 = vmul.f32 %v2991, %v3015
      %v3024 = vpack.c.bf16 %v3017, %v3016
      %v3025 = vpack.c.bf16 %v3019, %v3018
      %v3026 = vpack.c.bf16 %v3021, %v3020
      %v3027 = vpack.c.bf16 %v3023, %v3022
      %v3028 = vpack.c.bf16 %v2680, %v2679
      %v3029 = vpack.c.bf16 %v2682, %v2681
      %v3030 = vlaneseq
      %v3031 = vshrl.u32 %v3030, 7
      %v3032 = vsub.s32 0, %v3031
      %v3033 = vrot.slane %v2692, %v3032
      %3035 = vrot.lane.b32.xlu0 %v3033, 112
      %v3036 = vpop.permute.xlu0 %3035
      %v3039 = vsel %vm451, %v3024, 0
      %v3042 = vsel %vm451, %v3025, 0
      %v3045 = vsel %vm451, %v3026, 0
      %v3048 = vsel %vm451, %v3027, 0
      %3050 = vmatprep.subr.bf16.mxu0 0
      %3051 = vmatpush1.bf16.msra.mxu0 0
      %3052 = vmatprep.subr.bf16.mxu0 0
      %3053 = vmatpush1.bf16.msra.mxu0 0
      %3054 = vmatprep.subr.bf16.mxu0 0
      %3055 = vmatpush1.bf16.msra.mxu0 0
      %3056 = vmatprep.subr.bf16.mxu0 0
      %3057 = vmatpush1.bf16.msra.mxu0 0
      %3058 = vmatprep.subr.bf16.mxu0 0
      %3059 = vmatpush1.bf16.msra.mxu0 0
      %3060 = vmatprep.subr.bf16.mxu0 0
      %3061 = vmatpush1.bf16.msra.mxu0 0
      %3062 = vmatprep.subr.bf16.mxu0 0
      %3063 = vmatpush1.bf16.msra.mxu0 %v3029
      %3064 = vmatprep.subr.bf16.mxu0 0
      %3065 = vmatpush1.bf16.msra.mxu0 %v3028
      %3066 = vmatprep.subr.bf16.mxu0 0
      %3067 = vmatpush2.bf16.msra.mxu0 0
      %3068 = vmatprep.subr.bf16.mxu0 0
      %3069 = vmatpush2.bf16.msra.mxu0 0
      %3070 = vmatprep.subr.bf16.mxu0 0
      %3071 = vmatpush2.bf16.msra.mxu0 0
      %3072 = vmatprep.subr.bf16.mxu0 0
      %3073 = vmatpush2.bf16.msra.mxu0 0
      %3074 = vmatprep.subr.bf16.mxu0 0
      %3075 = vmatpush2.bf16.msra.mxu0 0
      %3076 = vmatprep.subr.bf16.mxu0 0
      %3077 = vmatpush2.bf16.msra.mxu0 0
      %3078 = vmatprep.subr.bf16.mxu0 0
      %3079 = vmatpush2.bf16.msra.mxu0 0
      %3080 = vmatprep.subr.bf16.mxu0 0
      %3081 = vmatpush2.bf16.msra.mxu0 0
      %3082 = vmatprep.mubr.bf16.mxu0 0
      %3083 = vmatmul.mubr.bf16.gmra.mxu0 %v3039
      %v3084 = vpop.f32.mrf.mxu0
      %v3085 = vadd.f32 %v3036, %v3084
      %v3086 = vpop.f32.mrf.mxu0
      %v3087 = vpop.f32.mrf.mxu0
      %v3088 = vadd.f32 %v3036, %v3087
      %v3089 = vpop.f32.mrf.mxu0
      %3090 = vmatprep.mubr.bf16.mxu0 0
      %3091 = vmatmul.mubr.bf16.gmra.mxu0 %v3042
      %v3092 = vpop.f32.mrf.mxu0
      %v3093 = vadd.f32 %v3036, %v3092
      %v3094 = vpop.f32.mrf.mxu0
      %v3095 = vpop.f32.mrf.mxu0
      %v3096 = vadd.f32 %v3036, %v3095
      %v3097 = vpop.f32.mrf.mxu0
      %3098 = vmatprep.mubr.bf16.mxu0 0
      %3099 = vmatmul.mubr.bf16.gmra.mxu0 %v3045
      %v3100 = vpop.f32.mrf.mxu0
      %v3101 = vadd.f32 %v3036, %v3100
      %v3102 = vpop.f32.mrf.mxu0
      %v3103 = vpop.f32.mrf.mxu0
      %v3104 = vadd.f32 %v3036, %v3103
      %v3105 = vpop.f32.mrf.mxu0
      %3106 = vmatprep.mubr.bf16.mxu0 0
      %3107 = vmatmul.mubr.bf16.gmra.mxu0 %v3048
      %v3108 = vpop.f32.mrf.mxu0
      %v3109 = vadd.f32 %v3036, %v3108
      %v3110 = vpop.f32.mrf.mxu0
      %v3111 = vpop.f32.mrf.mxu0
      %v3112 = vadd.f32 %v3036, %v3111
      %v3113 = vpop.f32.mrf.mxu0
      %3114 = vdwg.mxu0
      %v3115 = vsub.f32 %v3085, %v2865
      %v3116 = vsub.f32 %v3088, %v2866
      %v3117 = vsub.f32 %v3093, %v2867
      %v3118 = vsub.f32 %v3096, %v2868
      %v3119 = vsub.f32 %v3101, %v2869
      %v3120 = vsub.f32 %v3104, %v2870
      %v3121 = vsub.f32 %v3109, %v2871
      %v3122 = vsub.f32 %v3112, %v2872
      %v3123 = vmul.f32 %v3115, %v3115
      %v3124 = vmul.f32 %v3116, %v3116
      %v3125 = vmul.f32 %v3117, %v3117
      %v3126 = vmul.f32 %v3118, %v3118
      %v3127 = vmul.f32 %v3119, %v3119
      %v3128 = vmul.f32 %v3120, %v3120
      %v3129 = vmul.f32 %v3121, %v3121
      %v3130 = vmul.f32 %v3122, %v3122
      %v3131 = vsel %vm1175, %v3123, 0.0
      %3132 = vadd.xlane.f32.xlu0 %v3131
      %v3133 = vpop.xlane.xlu0 %3132
      %v3134 = vsel %vm1175, %v3124, 0.0
      %3135 = vadd.xlane.f32.xlu0 %v3134
      %v3136 = vpop.xlane.xlu0 %3135
      %v3137 = vsel %vm1175, %v3125, 0.0
      %3138 = vadd.xlane.f32.xlu0 %v3137
      %v3139 = vpop.xlane.xlu0 %3138
      %v3140 = vsel %vm1175, %v3126, 0.0
      %3141 = vadd.xlane.f32.xlu0 %v3140
      %v3142 = vpop.xlane.xlu0 %3141
      %v3143 = vsel %vm1175, %v3127, 0.0
      %3144 = vadd.xlane.f32.xlu0 %v3143
      %v3145 = vpop.xlane.xlu0 %3144
      %v3146 = vsel %vm1175, %v3128, 0.0
      %3147 = vadd.xlane.f32.xlu0 %v3146
      %v3148 = vpop.xlane.xlu0 %3147
      %v3149 = vsel %vm1175, %v3129, 0.0
      %3150 = vadd.xlane.f32.xlu0 %v3149
      %v3151 = vpop.xlane.xlu0 %3150
      %v3152 = vsel %vm1175, %v3130, 0.0
      %3153 = vadd.xlane.f32.xlu0 %v3152
      %v3154 = vpop.xlane.xlu0 %3153
      %v3155 = vrsqrt.pop %v3133
      %v3156 = vmul.f32 %v3133, %v3155
      %vm3157 = vcmp.eq.f32.partialorder %v3133, inf
      %v3158 = vsel %vm3157, %v3133, %v3156
      %vm3159 = vcmp.eq.f32.partialorder %v3133, 0.0
      %v3160 = vand.u32 %v3133, 2147483648
      %v3161 = vsel %vm3159, %v3160, %v3158
      %v3162 = vrsqrt.pop %v3136
      %v3163 = vmul.f32 %v3136, %v3162
      %vm3164 = vcmp.eq.f32.partialorder %v3136, inf
      %v3165 = vsel %vm3164, %v3136, %v3163
      %vm3166 = vcmp.eq.f32.partialorder %v3136, 0.0
      %v3167 = vand.u32 %v3136, 2147483648
      %v3168 = vsel %vm3166, %v3167, %v3165
      %v3169 = vrsqrt.pop %v3139
      %v3170 = vmul.f32 %v3139, %v3169
      %vm3171 = vcmp.eq.f32.partialorder %v3139, inf
      %v3172 = vsel %vm3171, %v3139, %v3170
      %vm3173 = vcmp.eq.f32.partialorder %v3139, 0.0
      %v3174 = vand.u32 %v3139, 2147483648
      %v3175 = vsel %vm3173, %v3174, %v3172
      %v3176 = vrsqrt.pop %v3142
      %v3177 = vmul.f32 %v3142, %v3176
      %vm3178 = vcmp.eq.f32.partialorder %v3142, inf
      %v3179 = vsel %vm3178, %v3142, %v3177
      %vm3180 = vcmp.eq.f32.partialorder %v3142, 0.0
      %v3181 = vand.u32 %v3142, 2147483648
      %v3182 = vsel %vm3180, %v3181, %v3179
      %v3183 = vrsqrt.pop %v3145
      %v3184 = vmul.f32 %v3145, %v3183
      %vm3185 = vcmp.eq.f32.partialorder %v3145, inf
      %v3186 = vsel %vm3185, %v3145, %v3184
      %vm3187 = vcmp.eq.f32.partialorder %v3145, 0.0
      %v3188 = vand.u32 %v3145, 2147483648
      %v3189 = vsel %vm3187, %v3188, %v3186
      %v3190 = vrsqrt.pop %v3148
      %v3191 = vmul.f32 %v3148, %v3190
      %vm3192 = vcmp.eq.f32.partialorder %v3148, inf
      %v3193 = vsel %vm3192, %v3148, %v3191
      %vm3194 = vcmp.eq.f32.partialorder %v3148, 0.0
      %v3195 = vand.u32 %v3148, 2147483648
      %v3196 = vsel %vm3194, %v3195, %v3193
      %v3197 = vrsqrt.pop %v3151
      %v3198 = vmul.f32 %v3151, %v3197
      %vm3199 = vcmp.eq.f32.partialorder %v3151, inf
      %v3200 = vsel %vm3199, %v3151, %v3198
      %vm3201 = vcmp.eq.f32.partialorder %v3151, 0.0
      %v3202 = vand.u32 %v3151, 2147483648
      %v3203 = vsel %vm3201, %v3202, %v3200
      %v3204 = vrsqrt.pop %v3154
      %v3205 = vmul.f32 %v3154, %v3204
      %vm3206 = vcmp.eq.f32.partialorder %v3154, inf
      %v3207 = vsel %vm3206, %v3154, %v3205
      %vm3208 = vcmp.eq.f32.partialorder %v3154, 0.0
      %v3209 = vand.u32 %v3154, 2147483648
      %v3210 = vsel %vm3208, %v3209, %v3207
      %v3211 = vadd.f32 %v3161, 1e-09
      %v3212 = vadd.f32 %v3168, 1e-09
      %v3213 = vadd.f32 %v3175, 1e-09
      %v3214 = vadd.f32 %v3182, 1e-09
      %v3215 = vadd.f32 %v3189, 1e-09
      %v3216 = vadd.f32 %v3196, 1e-09
      %v3217 = vadd.f32 %v3203, 1e-09
      %v3218 = vadd.f32 %v3210, 1e-09
      %v3219 = vrcp.pop %v3211
      %v3220 = vmul.f32 %v3115, %v3219
      %v3221 = vrcp.pop %v3212
      %v3222 = vmul.f32 %v3116, %v3221
      %v3223 = vrcp.pop %v3213
      %v3224 = vmul.f32 %v3117, %v3223
      %v3225 = vrcp.pop %v3214
      %v3226 = vmul.f32 %v3118, %v3225
      %v3227 = vrcp.pop %v3215
      %v3228 = vmul.f32 %v3119, %v3227
      %v3229 = vrcp.pop %v3216
      %v3230 = vmul.f32 %v3120, %v3229
      %v3231 = vrcp.pop %v3217
      %v3232 = vmul.f32 %v3121, %v3231
      %v3233 = vrcp.pop %v3218
      %v3234 = vmul.f32 %v3122, %v3233
      %v3235 = vmul.f32 %v2873, %v3220
      %v3236 = vmul.f32 %v2874, %v3222
      %v3237 = vmul.f32 %v2875, %v3224
      %v3238 = vmul.f32 %v2876, %v3226
      %v3239 = vmul.f32 %v2877, %v3228
      %v3240 = vmul.f32 %v2878, %v3230
      %v3241 = vmul.f32 %v2879, %v3232
      %v3242 = vmul.f32 %v2880, %v3234
      %vm3243 = vcmp.gt.f32.partialorder %v3161, %v2873
      %vm3244 = vcmp.gt.f32.partialorder %v3168, %v2874
      %vm3245 = vcmp.gt.f32.partialorder %v3175, %v2875
      %vm3246 = vcmp.gt.f32.partialorder %v3182, %v2876
      %vm3247 = vcmp.gt.f32.partialorder %v3189, %v2877
      %vm3248 = vcmp.gt.f32.partialorder %v3196, %v2878
      %vm3249 = vcmp.gt.f32.partialorder %v3203, %v2879
      %vm3250 = vcmp.gt.f32.partialorder %v3210, %v2880
      %v3251 = vsel %vm3243, %v3235, %v3115
      %v3252 = vsel %vm3244, %v3236, %v3116
      %v3253 = vsel %vm3245, %v3237, %v3117
      %v3254 = vsel %vm3246, %v3238, %v3118
      %v3255 = vsel %vm3247, %v3239, %v3119
      %v3256 = vsel %vm3248, %v3240, %v3120
      %v3257 = vsel %vm3249, %v3241, %v3121
      %v3258 = vsel %vm3250, %v3242, %v3122
      %3260 = vrot.lane.b32.xlu0 %v2881, 112
      %v3261 = vpop.permute.xlu0 %3260
      %v3263 = vsel %vm2503, %v3261, 0.0
      %3264 = vadd.xlane.f32.xlu0 %v3263
      %v3265 = vpop.xlane.xlu0 %3264
      %v3266 = vmul.f32 %v3265, %v1543
      %v3267 = vsel %vm2503, %v2881, 0.0
      %3268 = vadd.xlane.f32.xlu0 %v3267
      %v3269 = vpop.xlane.xlu0 %3268
      %v3270 = vmul.f32 %v3269, %v1543
      %v3271 = vsel %vm1175, %v3251, 0.0
      %v3272 = vsel %vm1175, %v3252, 0.0
      %v3273 = vadd.f32 %v3271, %v3272
      %v3274 = vsel %vm1175, %v3253, 0.0
      %v3275 = vadd.f32 %v3273, %v3274
      %v3276 = vsel %vm1175, %v3254, 0.0
      %v3277 = vadd.f32 %v3275, %v3276
      %v3278 = vsel %vm1175, %v3255, 0.0
      %v3279 = vadd.f32 %v3277, %v3278
      %v3280 = vsel %vm1175, %v3256, 0.0
      %v3281 = vadd.f32 %v3279, %v3280
      %v3282 = vsel %vm1175, %v3257, 0.0
      %v3283 = vadd.f32 %v3281, %v3282
      %v3284 = vsel %vm1175, %v3258, 0.0
      %v3285 = vadd.f32 %v3283, %v3284
      %v3286 = vrot.slane %v3285, 4
      %v3287 = vadd.f32 %v3285, %v3286
      %v3288 = vrot.slane %v3287, 2
      %v3289 = vadd.f32 %v3287, %v3288
      %v3290 = vrot.slane %v3289, 1
      %v3291 = vadd.f32 %v3289, %v3290
      %v3292 = vmul.f32 %v3291, %v2533
      %v3293 = vsel %vm451, %v3016, 0.0
      %v3294 = vsel %vm451, %v3017, 0.0
      %v3295 = vadd.f32 %v3293, %v3294
      %v3296 = vsel %vm451, %v3018, 0.0
      %v3297 = vadd.f32 %v3295, %v3296
      %v3298 = vsel %vm451, %v3019, 0.0
      %v3299 = vadd.f32 %v3297, %v3298
      %v3300 = vsel %vm451, %v3020, 0.0
      %v3301 = vadd.f32 %v3299, %v3300
      %v3302 = vsel %vm451, %v3021, 0.0
      %v3303 = vadd.f32 %v3301, %v3302
      %v3304 = vsel %vm451, %v3022, 0.0
      %v3305 = vadd.f32 %v3303, %v3304
      %v3306 = vsel %vm451, %v3023, 0.0
      %v3307 = vadd.f32 %v3305, %v3306
      %v3308 = vrot.slane %v3307, 4
      %v3309 = vadd.f32 %v3307, %v3308
      %v3310 = vrot.slane %v3309, 2
      %v3311 = vadd.f32 %v3309, %v3310
      %v3312 = vrot.slane %v3311, 1
      %v3313 = vadd.f32 %v3311, %v3312
      %v3314 = vmul.f32 %v3313, %v2533
      %v3315 = vlaneseq
      %v3316 = vshrl.u32 %v3315, 7
      %v3317 = vsub.s32 0, %v3316
      %v3318 = vrot.slane %v3266, %v3317
      %v3319 = vmul.f32 %v3318, %v2613
      %v3320 = vmul.f32 %v3318, %v2614
      %3321 = vxpose.xlu0.b32.start [1/16] %v3292, 128
      %3322 = vxpose.xlu0.b32.cont [2/16] 0.0, 128
      %3323 = vxpose.xlu0.b32.cont [3/16] 0.0, 128
      %3324 = vxpose.xlu0.b32.cont [4/16] 0.0, 128
      %3325 = vxpose.xlu0.b32.cont [5/16] 0.0, 128
      %3326 = vxpose.xlu0.b32.cont [6/16] 0.0, 128
      %3327 = vxpose.xlu0.b32.cont [7/16] 0.0, 128
      %3328 = vxpose.xlu0.b32.cont [8/16] 0.0, 128
      %3329 = vxpose.xlu0.b32.cont [9/16] 0.0, 128
      %3330 = vxpose.xlu0.b32.cont [10/16] 0.0, 128
      %3331 = vxpose.xlu0.b32.cont [11/16] 0.0, 128
      %3332 = vxpose.xlu0.b32.cont [12/16] 0.0, 128
      %3333 = vxpose.xlu0.b32.cont [13/16] 0.0, 128
      %3334 = vxpose.xlu0.b32.cont [14/16] 0.0, 128
      %3335 = vxpose.xlu0.b32.cont [15/16] 0.0, 128
      %3336 = vxpose.xlu0.b32.end [16/16] 0.0, 128
      %v3337 = vpop.trf.xlu0
      %v3338 = vpop.trf.xlu0
      %v3339 = vpop.trf.xlu0
      %v3340 = vpop.trf.xlu0
      %v3341 = vpop.trf.xlu0
      %v3342 = vpop.trf.xlu0
      %v3343 = vpop.trf.xlu0
      %v3344 = vpop.trf.xlu0
      %v3345 = vpop.trf.xlu0
      %v3346 = vpop.trf.xlu0
      %v3347 = vpop.trf.xlu0
      %v3348 = vpop.trf.xlu0
      %v3349 = vpop.trf.xlu0
      %v3350 = vpop.trf.xlu0
      %v3351 = vpop.trf.xlu0
      %v3352 = vpop.trf.xlu0
      %3354 = vset.pattern.permute.xlu0 0
      %3355 = vperm.xlu0 %3354, %v3337
      %v3356 = vpop.permute.xlu0 %3355
      %3359 = vset.pattern.permute.xlu0 0
      %3360 = vperm.xlu0 %3359, %v3338
      %v3361 = vpop.permute.xlu0 %3360
      %v3363 = vmul.f32 %v3356, %v3314
      %v3364 = vmul.f32 %v3361, %v3314
      %v3365 = vlaneseq
      %v3366 = vshrl.u32 %v3365, 7
      %v3367 = vsub.s32 0, %v3366
      %v3368 = vrot.slane %v3270, %v3367
      %v3369 = vmul.f32 %v3368, %v3363
      %v3370 = vmul.f32 %v3368, %v3364
      %v3371 = vsub.f32 %v3319, %v3369
      %v3372 = vsub.f32 %v3320, %v3370
      %v3373 = vmul.f32 %v3318, %v2679
      %v3374 = vmul.f32 %v3318, %v2680
      %v3375 = vmul.f32 %v3318, %v2681
      %v3376 = vmul.f32 %v3318, %v2682
      %3377 = vxpose.xlu0.b32.start [1/16] %v3314, 128
      %3378 = vxpose.xlu0.b32.cont [2/16] 0.0, 128
      %3379 = vxpose.xlu0.b32.cont [3/16] 0.0, 128
      %3380 = vxpose.xlu0.b32.cont [4/16] 0.0, 128
      %3381 = vxpose.xlu0.b32.cont [5/16] 0.0, 128
      %3382 = vxpose.xlu0.b32.cont [6/16] 0.0, 128
      %3383 = vxpose.xlu0.b32.cont [7/16] 0.0, 128
      %3384 = vxpose.xlu0.b32.cont [8/16] 0.0, 128
      %3385 = vxpose.xlu0.b32.cont [9/16] 0.0, 128
      %3386 = vxpose.xlu0.b32.cont [10/16] 0.0, 128
      %3387 = vxpose.xlu0.b32.cont [11/16] 0.0, 128
      %3388 = vxpose.xlu0.b32.cont [12/16] 0.0, 128
      %3389 = vxpose.xlu0.b32.cont [13/16] 0.0, 128
      %3390 = vxpose.xlu0.b32.cont [14/16] 0.0, 128
      %3391 = vxpose.xlu0.b32.cont [15/16] 0.0, 128
      %3392 = vxpose.xlu0.b32.end [16/16] 0.0, 128
      %v3393 = vpop.trf.xlu0
      %v3394 = vpop.trf.xlu0
      %v3395 = vpop.trf.xlu0
      %v3396 = vpop.trf.xlu0
      %v3397 = vpop.trf.xlu0
      %v3398 = vpop.trf.xlu0
      %v3399 = vpop.trf.xlu0
      %v3400 = vpop.trf.xlu0
      %v3401 = vpop.trf.xlu0
      %v3402 = vpop.trf.xlu0
      %v3403 = vpop.trf.xlu0
      %v3404 = vpop.trf.xlu0
      %v3405 = vpop.trf.xlu0
      %v3406 = vpop.trf.xlu0
      %v3407 = vpop.trf.xlu0
      %v3408 = vpop.trf.xlu0
      %3410 = vset.pattern.permute.xlu0 0
      %3411 = vperm.xlu0 %3410, %v3393
      %v3412 = vpop.permute.xlu0 %3411
      %3415 = vset.pattern.permute.xlu0 0
      %3416 = vperm.xlu0 %3415, %v3394
      %v3417 = vpop.permute.xlu0 %3416
      %3420 = vset.pattern.permute.xlu0 0
      %3421 = vperm.xlu0 %3420, %v3395
      %v3422 = vpop.permute.xlu0 %3421
      %3425 = vset.pattern.permute.xlu0 0
      %3426 = vperm.xlu0 %3425, %v3396
      %v3427 = vpop.permute.xlu0 %3426
      %v3429 = vmul.f32 %v3412, %v3292
      %v3430 = vmul.f32 %v3417, %v3292
      %v3431 = vmul.f32 %v3422, %v3292
      %v3432 = vmul.f32 %v3427, %v3292
      %v3433 = vmul.f32 %v3368, %v3429
      %v3434 = vmul.f32 %v3368, %v3430
      %v3435 = vmul.f32 %v3368, %v3431
      %v3436 = vmul.f32 %v3368, %v3432
      %v3437 = vsub.f32 %v3373, %v3433
      %v3438 = vsub.f32 %v3374, %v3434
      %v3439 = vsub.f32 %v3375, %v3435
      %v3440 = vsub.f32 %v3376, %v3436
      %v3441 = vmul.f32 %v2881, %v2692
      %v3442 = vmul.f32 %v2881, %v3292
      %3444 = vrot.lane.b32.xlu0 %v3442, 16
      %v3445 = vpop.permute.xlu0 %3444
      %v3447 = vsub.f32 %v3441, %v3445
      %v3448 = vmul.f32 %v2679, %v3292
      %v3449 = vmul.f32 %v2680, %v3292
      %v3450 = vmul.f32 %v2681, %v3292
      %v3451 = vmul.f32 %v2682, %v3292
      %v3452 = vsel %vm1175, %v3448, 0.0
      %3453 = vadd.xlane.f32.xlu0 %v3452
      %v3454 = vpop.xlane.xlu0 %3453
      %v3455 = vsel %vm1175, %v3449, 0.0
      %3456 = vadd.xlane.f32.xlu0 %v3455
      %v3457 = vpop.xlane.xlu0 %3456
      %v3458 = vsel %vm1175, %v3450, 0.0
      %3459 = vadd.xlane.f32.xlu0 %v3458
      %v3460 = vpop.xlane.xlu0 %3459
      %v3461 = vsel %vm1175, %v3451, 0.0
      %3462 = vadd.xlane.f32.xlu0 %v3461
      %v3463 = vpop.xlane.xlu0 %3462
      %3464 = vxpose.xlu0.b32.start [1/16] %v3454, 128
      %3465 = vxpose.xlu0.b32.cont [2/16] %v3457, 128
      %3466 = vxpose.xlu0.b32.cont [3/16] %v3460, 128
      %3467 = vxpose.xlu0.b32.cont [4/16] %v3463, 128
      %3468 = vxpose.xlu0.b32.cont [5/16] 0.0, 128
      %3469 = vxpose.xlu0.b32.cont [6/16] 0.0, 128
      %3470 = vxpose.xlu0.b32.cont [7/16] 0.0, 128
      %3471 = vxpose.xlu0.b32.cont [8/16] 0.0, 128
      %3472 = vxpose.xlu0.b32.cont [9/16] 0.0, 128
      %3473 = vxpose.xlu0.b32.cont [10/16] 0.0, 128
      %3474 = vxpose.xlu0.b32.cont [11/16] 0.0, 128
      %3475 = vxpose.xlu0.b32.cont [12/16] 0.0, 128
      %3476 = vxpose.xlu0.b32.cont [13/16] 0.0, 128
      %3477 = vxpose.xlu0.b32.cont [14/16] 0.0, 128
      %3478 = vxpose.xlu0.b32.cont [15/16] 0.0, 128
      %3479 = vxpose.xlu0.b32.end [16/16] 0.0, 128
      %v3480 = vpop.trf.xlu0
      %v3481 = vpop.trf.xlu0
      %v3482 = vpop.trf.xlu0
      %v3483 = vpop.trf.xlu0
      %v3484 = vpop.trf.xlu0
      %v3485 = vpop.trf.xlu0
      %v3486 = vpop.trf.xlu0
      %v3487 = vpop.trf.xlu0
      %v3488 = vpop.trf.xlu0
      %v3489 = vpop.trf.xlu0
      %v3490 = vpop.trf.xlu0
      %v3491 = vpop.trf.xlu0
      %v3492 = vpop.trf.xlu0
      %v3493 = vpop.trf.xlu0
      %v3494 = vpop.trf.xlu0
      %v3495 = vpop.trf.xlu0
      %v3496 = vmul.f32 %v3292, %v3292
      %v3497 = vsel %vm1175, %v3496, 0.0
      %3498 = vadd.xlane.f32.xlu0 %v3497
      %v3499 = vpop.xlane.xlu0 %3498
      %v3500 = vmul.f32 %v3266, %v3480
      %v3501 = vmul.f32 %v3270, %v3499
      %v3502 = vmul.f32 %v3501, %v3314
      %v3503 = vsub.f32 %v3500, %v3502
      %v3504 = vmul.f32 %v3266, %v2751
      %v3505 = vmul.f32 %v3270, %v3503
      %v3506 = vsub.f32 %v3504, %v3505
      %v3507 = vpack.c.bf16 %v3088, %v3085
      %v3508 = vpack.c.bf16 %v3096, %v3093
      %v3509 = vpack.c.bf16 %v3104, %v3101
      %v3510 = vpack.c.bf16 %v3112, %v3109
      %v3512 = vsel %vm1175, %v3507, 0
      %v3515 = vsel %vm1175, %v3508, 0
      %v3518 = vsel %vm1175, %v3509, 0
      %v3521 = vsel %vm1175, %v3510, 0
      %3523 = vmatprep.subr.bf16.mxu0 0
      %3524 = vmatpush1.bf16.msra.mxu0 0
      %3525 = vmatprep.subr.bf16.mxu0 0
      %3526 = vmatpush1.bf16.msra.mxu0 0
      %3527 = vmatprep.subr.bf16.mxu0 0
      %3528 = vmatpush1.bf16.msra.mxu0 0
      %3529 = vmatprep.subr.bf16.mxu0 0
      %3530 = vmatpush1.bf16.msra.mxu0 0
      %3531 = vmatprep.subr.bf16.mxu0 0
      %3532 = vmatpush1.bf16.msra.mxu0 0
      %3533 = vmatprep.subr.bf16.mxu0 0
      %3534 = vmatpush1.bf16.msra.mxu0 0
      %3535 = vmatprep.subr.bf16.mxu0 0
      %3536 = vmatpush1.bf16.msra.mxu0 0
      %3537 = vmatprep.subr.bf16.mxu0 0
      %3538 = vmatpush1.bf16.msra.mxu0 %v2088
      %3539 = vmatprep.subr.bf16.mxu0 0
      %3540 = vmatpush2.bf16.msra.mxu0 0
      %3541 = vmatprep.subr.bf16.mxu0 0
      %3542 = vmatpush2.bf16.msra.mxu0 0
      %3543 = vmatprep.subr.bf16.mxu0 0
      %3544 = vmatpush2.bf16.msra.mxu0 0
      %3545 = vmatprep.subr.bf16.mxu0 0
      %3546 = vmatpush2.bf16.msra.mxu0 0
      %3547 = vmatprep.subr.bf16.mxu0 0
      %3548 = vmatpush2.bf16.msra.mxu0 0
      %3549 = vmatprep.subr.bf16.mxu0 0
      %3550 = vmatpush2.bf16.msra.mxu0 0
      %3551 = vmatprep.subr.bf16.mxu0 0
      %3552 = vmatpush2.bf16.msra.mxu0 0
      %3553 = vmatprep.subr.bf16.mxu0 0
      %3554 = vmatpush2.bf16.msra.mxu0 0
      %3555 = vmatprep.mubr.bf16.mxu0 0
      %3556 = vmatmul.mubr.bf16.gmra.mxu0 %v3512
      %v3557 = vpop.f32.mrf.mxu0
      %v3558 = vadd.f32 0.0, %v3557
      %v3559 = vpop.f32.mrf.mxu0
      %v3560 = vpop.f32.mrf.mxu0
      %v3561 = vadd.f32 0.0, %v3560
      %v3562 = vpop.f32.mrf.mxu0
      %3563 = vmatprep.mubr.bf16.mxu0 0
      %3564 = vmatmul.mubr.bf16.gmra.mxu0 %v3515
      %v3565 = vpop.f32.mrf.mxu0
      %v3566 = vadd.f32 0.0, %v3565
      %v3567 = vpop.f32.mrf.mxu0
      %v3568 = vpop.f32.mrf.mxu0
      %v3569 = vadd.f32 0.0, %v3568
      %v3570 = vpop.f32.mrf.mxu0
      %3571 = vmatprep.mubr.bf16.mxu0 0
      %3572 = vmatmul.mubr.bf16.gmra.mxu0 %v3518
      %v3573 = vpop.f32.mrf.mxu0
      %v3574 = vadd.f32 0.0, %v3573
      %v3575 = vpop.f32.mrf.mxu0
      %v3576 = vpop.f32.mrf.mxu0
      %v3577 = vadd.f32 0.0, %v3576
      %v3578 = vpop.f32.mrf.mxu0
      %3579 = vmatprep.mubr.bf16.mxu0 0
      %3580 = vmatmul.mubr.bf16.gmra.mxu0 %v3521
      %v3581 = vpop.f32.mrf.mxu0
      %v3582 = vadd.f32 0.0, %v3581
      %v3583 = vpop.f32.mrf.mxu0
      %v3584 = vpop.f32.mrf.mxu0
      %v3585 = vadd.f32 0.0, %v3584
      %v3586 = vpop.f32.mrf.mxu0
      %3587 = vdwg.mxu0
      %v3588 = vld [vmem:[#allocation6 + $0x40] sm:$0xff]
      %v3589 = vld [vmem:[#allocation6 + $0x48] sm:$0xff]
      %v3590 = vld [vmem:[#allocation6 + $0x50] sm:$0xff]
      %v3591 = vld [vmem:[#allocation6 + $0x58] sm:$0xff]
      %v3592 = vld [vmem:[#allocation6 + $0x60] sm:$0xff]
      %v3593 = vld [vmem:[#allocation6 + $0x68] sm:$0xff]
      %v3594 = vld [vmem:[#allocation6 + $0x70] sm:$0xff]
      %v3595 = vld [vmem:[#allocation6 + $0x78] sm:$0xff]
      %v3596 = vmul.f32 %v3558, %v3588
      %v3597 = vmul.f32 %v3561, %v3589
      %v3598 = vmul.f32 %v3566, %v3590
      %v3599 = vmul.f32 %v3569, %v3591
      %v3600 = vmul.f32 %v3574, %v3592
      %v3601 = vmul.f32 %v3577, %v3593
      %v3602 = vmul.f32 %v3582, %v3594
      %v3603 = vmul.f32 %v3585, %v3595
      %3604 = vst.msk [vmem:[%s413 + $0x40] sm:$0xff] %vm451, %v3596
      %3605 = vst.msk [vmem:[%s413 + $0x48] sm:$0xff] %vm451, %v3597
      %3606 = vst.msk [vmem:[%s413 + $0x50] sm:$0xff] %vm451, %v3598
      %3607 = vst.msk [vmem:[%s413 + $0x58] sm:$0xff] %vm451, %v3599
      %3608 = vst.msk [vmem:[%s413 + $0x60] sm:$0xff] %vm451, %v3600
      %3609 = vst.msk [vmem:[%s413 + $0x68] sm:$0xff] %vm451, %v3601
      %3610 = vst.msk [vmem:[%s413 + $0x70] sm:$0xff] %vm451, %v3602
      %3611 = vst.msk [vmem:[%s413 + $0x78] sm:$0xff] %vm451, %v3603
      %v3612 = vld [vmem:[#allocation3 + $0x40] sm:$0xf]
      %v3613 = vld [vmem:[#allocation3 + $0x44] sm:$0xf]
      %v3614 = vld [vmem:[#allocation3 + $0x48] sm:$0xf]
      %v3615 = vld [vmem:[#allocation3 + $0x4c] sm:$0xf]
      %v3616 = vpack.c.bf16 %v3372, %v3371
      %v3617 = vlaneseq
      %v3618 = vshrl.u32 %v3617, 7
      %v3619 = vsub.s32 0, %v3618
      %v3620 = vrot.slane %v3506, %v3619
      %v3625 = vunpack.c.l.b16 %v3612
      %v3626 = vunpack.c.l.b16 %v3613
      %v3627 = vunpack.c.l.b16 %v3614
      %v3628 = vunpack.c.l.b16 %v3615
      %v3629 = vpack.c.b16 %v3626, %v3625
      %v3630 = vpack.c.b16 %v3628, %v3627
      %v3632 = vsel %vm1175, %v3629, 0
      %v3635 = vsel %vm1175, %v3630, 0
      %3637 = vmatprep.subr.bf16.mxu0 0
      %3638 = vmatpush1.bf16.msra.mxu0 0
      %3639 = vmatprep.subr.bf16.mxu0 0
      %3640 = vmatpush1.bf16.msra.mxu0 0
      %3641 = vmatprep.subr.bf16.mxu0 0
      %3642 = vmatpush1.bf16.msra.mxu0 0
      %3643 = vmatprep.subr.bf16.mxu0 0
      %3644 = vmatpush1.bf16.msra.mxu0 0
      %3645 = vmatprep.subr.bf16.mxu0 0
      %3646 = vmatpush1.bf16.msra.mxu0 0
      %3647 = vmatprep.subr.bf16.mxu0 0
      %3648 = vmatpush1.bf16.msra.mxu0 0
      %3649 = vmatprep.subr.bf16.mxu0 0
      %3650 = vmatpush1.bf16.msra.mxu0 0
      %3651 = vmatprep.subr.bf16.mxu0 0
      %3652 = vmatpush1.bf16.msra.mxu0 %v3616
      %3653 = vmatprep.subr.bf16.mxu0 0
      %3654 = vmatpush2.bf16.msra.mxu0 0
      %3655 = vmatprep.subr.bf16.mxu0 0
      %3656 = vmatpush2.bf16.msra.mxu0 0
      %3657 = vmatprep.subr.bf16.mxu0 0
      %3658 = vmatpush2.bf16.msra.mxu0 0
      %3659 = vmatprep.subr.bf16.mxu0 0
      %3660 = vmatpush2.bf16.msra.mxu0 0
      %3661 = vmatprep.subr.bf16.mxu0 0
      %3662 = vmatpush2.bf16.msra.mxu0 0
      %3663 = vmatprep.subr.bf16.mxu0 0
      %3664 = vmatpush2.bf16.msra.mxu0 0
      %3665 = vmatprep.subr.bf16.mxu0 0
      %3666 = vmatpush2.bf16.msra.mxu0 0
      %3667 = vmatprep.subr.bf16.mxu0 0
      %3668 = vmatpush2.bf16.msra.mxu0 0
      %3669 = vmatprep.mubr.bf16.mxu0 0
      %3670 = vmatmul.mubr.bf16.gmra.mxu0 %v3632
      %v3671 = vpop.f32.mrf.mxu0
      %v3672 = vadd.f32 %v3620, %v3671
      %v3673 = vpop.f32.mrf.mxu0
      %v3674 = vpop.f32.mrf.mxu0
      %v3675 = vadd.f32 %v3620, %v3674
      %v3676 = vpop.f32.mrf.mxu0
      %3677 = vmatprep.mubr.bf16.mxu0 0
      %3678 = vmatmul.mubr.bf16.gmra.mxu0 %v3635
      %v3679 = vpop.f32.mrf.mxu0
      %v3680 = vadd.f32 %v3620, %v3679
      %v3681 = vpop.f32.mrf.mxu0
      %v3682 = vpop.f32.mrf.mxu0
      %v3683 = vadd.f32 %v3620, %v3682
      %v3684 = vpop.f32.mrf.mxu0
      %3685 = vdwg.mxu0
      %v3686 = vmul.f32 %v3672, 0.5
      %v3687 = vmul.f32 %v3675, 0.5
      %v3688 = vmul.f32 %v3680, 0.5
      %v3689 = vmul.f32 %v3683, 0.5
      %v3690 = vmul.f32 %v3672, 0.70710677
      %v3691 = vmul.f32 %v3675, 0.70710677
      %v3692 = vmul.f32 %v3680, 0.70710677
      %v3693 = vmul.f32 %v3683, 0.70710677
      %v3694 = verf.f32.pop %v3690
      %v3695 = verf.f32.pop %v3691
      %v3696 = verf.f32.pop %v3692
      %v3697 = verf.f32.pop %v3693
      %v3698 = vadd.f32 %v3694, 1.0
      %v3699 = vadd.f32 %v3695, 1.0
      %v3700 = vadd.f32 %v3696, 1.0
      %v3701 = vadd.f32 %v3697, 1.0
      %v3702 = vmul.f32 %v3686, %v3698
      %v3703 = vmul.f32 %v3687, %v3699
      %v3704 = vmul.f32 %v3688, %v3700
      %v3705 = vmul.f32 %v3689, %v3701
      %v3706 = vpack.c.bf16 %v3703, %v3702
      %v3707 = vpack.c.bf16 %v3705, %v3704
      %v3708 = vpack.c.bf16 %v3438, %v3437
      %v3709 = vpack.c.bf16 %v3440, %v3439
      %v3710 = vlaneseq
      %v3711 = vshrl.u32 %v3710, 7
      %v3712 = vsub.s32 0, %v3711
      %v3713 = vrot.slane %v3447, %v3712
      %3715 = vrot.lane.b32.xlu0 %v3713, 112
      %v3716 = vpop.permute.xlu0 %3715
      %v3719 = vsel %vm451, %v3706, 0
      %v3722 = vsel %vm451, %v3707, 0
      %3724 = vmatprep.subr.bf16.mxu0 0
      %3725 = vmatpush1.bf16.msra.mxu0 0
      %3726 = vmatprep.subr.bf16.mxu0 0
      %3727 = vmatpush1.bf16.msra.mxu0 0
      %3728 = vmatprep.subr.bf16.mxu0 0
      %3729 = vmatpush1.bf16.msra.mxu0 0
      %3730 = vmatprep.subr.bf16.mxu0 0
      %3731 = vmatpush1.bf16.msra.mxu0 0
      %3732 = vmatprep.subr.bf16.mxu0 0
      %3733 = vmatpush1.bf16.msra.mxu0 0
      %3734 = vmatprep.subr.bf16.mxu0 0
      %3735 = vmatpush1.bf16.msra.mxu0 0
      %3736 = vmatprep.subr.bf16.mxu0 0
      %3737 = vmatpush1.bf16.msra.mxu0 %v3709
      %3738 = vmatprep.subr.bf16.mxu0 0
      %3739 = vmatpush1.bf16.msra.mxu0 %v3708
      %3740 = vmatprep.subr.bf16.mxu0 0
      %3741 = vmatpush2.bf16.msra.mxu0 0
      %3742 = vmatprep.subr.bf16.mxu0 0
      %3743 = vmatpush2.bf16.msra.mxu0 0
      %3744 = vmatprep.subr.bf16.mxu0 0
      %3745 = vmatpush2.bf16.msra.mxu0 0
      %3746 = vmatprep.subr.bf16.mxu0 0
      %3747 = vmatpush2.bf16.msra.mxu0 0
      %3748 = vmatprep.subr.bf16.mxu0 0
      %3749 = vmatpush2.bf16.msra.mxu0 0
      %3750 = vmatprep.subr.bf16.mxu0 0
      %3751 = vmatpush2.bf16.msra.mxu0 0
      %3752 = vmatprep.subr.bf16.mxu0 0
      %3753 = vmatpush2.bf16.msra.mxu0 0
      %3754 = vmatprep.subr.bf16.mxu0 0
      %3755 = vmatpush2.bf16.msra.mxu0 0
      %3756 = vmatprep.mubr.bf16.mxu0 0
      %3757 = vmatmul.mubr.bf16.gmra.mxu0 %v3719
      %v3758 = vpop.f32.mrf.mxu0
      %v3759 = vadd.f32 %v3716, %v3758
      %v3760 = vpop.f32.mrf.mxu0
      %v3761 = vpop.f32.mrf.mxu0
      %v3762 = vadd.f32 %v3716, %v3761
      %v3763 = vpop.f32.mrf.mxu0
      %3764 = vmatprep.mubr.bf16.mxu0 0
      %3765 = vmatmul.mubr.bf16.gmra.mxu0 %v3722
      %v3766 = vpop.f32.mrf.mxu0
      %v3767 = vadd.f32 %v3716, %v3766
      %v3768 = vpop.f32.mrf.mxu0
      %v3769 = vpop.f32.mrf.mxu0
      %v3770 = vadd.f32 %v3716, %v3769
      %v3771 = vpop.f32.mrf.mxu0
      %3772 = vdwg.mxu0
      %v3773 = vpack.c.bf16 %v3762, %v3759
      %v3774 = vpack.c.bf16 %v3770, %v3767
      %v3776 = vsel %vm1175, %v3773, 0
      %v3779 = vsel %vm1175, %v3774, 0
      %3781 = vmatprep.subr.bf16.mxu0 0
      %3782 = vmatpush1.bf16.msra.mxu0 0
      %3783 = vmatprep.subr.bf16.mxu0 0
      %3784 = vmatpush1.bf16.msra.mxu0 0
      %3785 = vmatprep.subr.bf16.mxu0 0
      %3786 = vmatpush1.bf16.msra.mxu0 0
      %3787 = vmatprep.subr.bf16.mxu0 0
      %3788 = vmatpush1.bf16.msra.mxu0 0
      %3789 = vmatprep.subr.bf16.mxu0 0
      %3790 = vmatpush1.bf16.msra.mxu0 0
      %3791 = vmatprep.subr.bf16.mxu0 0
      %3792 = vmatpush1.bf16.msra.mxu0 0
      %3793 = vmatprep.subr.bf16.mxu0 0
      %3794 = vmatpush1.bf16.msra.mxu0 0
      %3795 = vmatprep.subr.bf16.mxu0 0
      %3796 = vmatpush1.bf16.msra.mxu0 %v2088
      %3797 = vmatprep.subr.bf16.mxu0 0
      %3798 = vmatpush2.bf16.msra.mxu0 0
      %3799 = vmatprep.subr.bf16.mxu0 0
      %3800 = vmatpush2.bf16.msra.mxu0 0
      %3801 = vmatprep.subr.bf16.mxu0 0
      %3802 = vmatpush2.bf16.msra.mxu0 0
      %3803 = vmatprep.subr.bf16.mxu0 0
      %3804 = vmatpush2.bf16.msra.mxu0 0
      %3805 = vmatprep.subr.bf16.mxu0 0
      %3806 = vmatpush2.bf16.msra.mxu0 0
      %3807 = vmatprep.subr.bf16.mxu0 0
      %3808 = vmatpush2.bf16.msra.mxu0 0
      %3809 = vmatprep.subr.bf16.mxu0 0
      %3810 = vmatpush2.bf16.msra.mxu0 0
      %3811 = vmatprep.subr.bf16.mxu0 0
      %3812 = vmatpush2.bf16.msra.mxu0 0
      %3813 = vmatprep.mubr.bf16.mxu0 0
      %3814 = vmatmul.mubr.bf16.gmra.mxu0 %v3776
      %v3815 = vpop.f32.mrf.mxu0
      %v3816 = vadd.f32 0.0, %v3815
      %v3817 = vpop.f32.mrf.mxu0
      %v3818 = vpop.f32.mrf.mxu0
      %v3819 = vadd.f32 0.0, %v3818
      %v3820 = vpop.f32.mrf.mxu0
      %3821 = vmatprep.mubr.bf16.mxu0 0
      %3822 = vmatmul.mubr.bf16.gmra.mxu0 %v3779
      %v3823 = vpop.f32.mrf.mxu0
      %v3824 = vadd.f32 0.0, %v3823
      %v3825 = vpop.f32.mrf.mxu0
      %v3826 = vpop.f32.mrf.mxu0
      %v3827 = vadd.f32 0.0, %v3826
      %v3828 = vpop.f32.mrf.mxu0
      %3829 = vdwg.mxu0
      %v3830 = vld [vmem:[#allocation6 + $0x80] sm:$0xff]
      %v3831 = vld [vmem:[#allocation6 + $0x88] sm:$0xff]
      %v3832 = vld [vmem:[#allocation6 + $0x90] sm:$0xff]
      %v3833 = vld [vmem:[#allocation6 + $0x98] sm:$0xff]
      %v3834 = vmul.f32 %v3816, %v3830
      %v3835 = vmul.f32 %v3819, %v3831
      %v3836 = vmul.f32 %v3824, %v3832
      %v3837 = vmul.f32 %v3827, %v3833
      %3838 = vst.msk [vmem:[%s413 + $0x80] sm:$0xff] %vm451, %v3834
      %3839 = vst.msk [vmem:[%s413 + $0x88] sm:$0xff] %vm451, %v3835
      %3840 = vst.msk [vmem:[%s413 + $0x90] sm:$0xff] %vm451, %v3836
      %3841 = vst.msk [vmem:[%s413 + $0x98] sm:$0xff] %vm451, %v3837
      %p3842 = scmp.lt.s32.totalorder %s23, 1
      %s3843 = scalar_select %p3842, %s23, 1
      %s3844 = smul.addr %s3843, 20
      %s3845 = smul.addr %s3844, 8
      %s3846 = scalar_lea.vmem %s12, %s3845
      // Predicated region
      $region69: #{tpu_custom_call.1} parent=67 // pred_check
        %p3847 = pneg %p298
      $region70: #{tpu_custom_call.1} parent=67 // pred_check_branch
        %3849 = sbr.rel (%p3847) target = $region72
      $region71: #{tpu_custom_call.1} parent=67 // pred_region
        _
      $region72: #{tpu_custom_call.1} parent=67 // pred_fallthru
        _
    $region68: #{tpu_custom_call.1} parent=5 // pred_fallthru
      _
    %p3850 = scmp.le.s32.totalorder 2, %s18
    // Predicated region
    $region73: #{tpu_custom_call.1} parent=5 // pred_check
      %p3851 = pneg %p3850
    $region74: #{tpu_custom_call.1} parent=5 // pred_check_branch
      %3853 = sbr.rel (%p3851) target = $region76
    $region75: #{tpu_custom_call.1} parent=5 // pred_region
      %s3854 = ssub.s32 %s18, 2
      // Predicated region
      $region77: #{tpu_custom_call.1} parent=75 // pred_check
        %p3855 = pneg %p304
      $region78: #{tpu_custom_call.1} parent=75 // pred_check_branch
        %3857 = sbr.rel (%p3855) target = $region80
      $region79: #{tpu_custom_call.1} parent=75 // pred_region
        %p3858 = scmp.lt.s32.totalorder %s24, 1
        %s3859 = scalar_select %p3858, %s24, 1
        %s3860 = smul.addr %s3859, 20
        %s3861 = smul.addr %s3860, 8
        %s3862 = scalar_lea.vmem %s12, %s3861
      $region80: #{tpu_custom_call.1} parent=75 // pred_fallthru
        _
    $region76: #{tpu_custom_call.1} parent=5 // pred_fallthru
      _
  $region6: #{tpu_custom_call.1} parent=0 // loop_footer
    %s22 = sadd.s32 1, %s18
  $region7: #{tpu_custom_call.1} parent=0 // loop_footer_branch
    %17 = sbr.rel target = $region3
  $region8: #{tpu_custom_call.1} parent=0 // loop_exit
    _

</llo_original>
